<compile_context>
chip_gen: v5e
topology: v5e:2x2
jax: 0.10.0
libtpu: 0.0.40
codegen_flags: <defaults>
</compile_context>

<pallas_src>
import math

import jax
import jax.numpy as jnp
from jax.experimental import pallas as pl
from jax.experimental.pallas import tpu as pltpu


# ---------------------------------------------------------------------------
# Fused kernel: (block-diagonal) 2-layer LSTM over both streams + dense head.
#
#   x_ref     : (T*Bp, D)   time-major, batch-padded, [smi feats | seq feats]
#   lens_ref  : (Bp, H)     int32; col c < H_smi -> smi_len[b], else seq_len[b]
#   wl_ref    : (D+3H, 4H)  [Wih1_bd ; Whh1_bd ; Wih2_bd ; Whh2_bd], gate order
#                           (i, f, g, o) along the 4H axis
#   b12_ref   : (2, 4H)     row 0 = b1 (b_ih+b_hh layer1), row 1 = b2 (layer2)
#   wd_hbm    : (H+512,512) packed dense weights [w1 ; w2], left in HBM
#   dvec_ref  : (4, 512)    rows: dense b1, dense b2, w3 (as a row), [b3,0,...]
#   out_ref   : (Bp, 1)
#   xp_ref    : VMEM scratch (T*Bp, 4H) for the hoisted layer-1 projection
#   wd_vmem   : VMEM scratch (H+512, 512) landing buffer for dense weights
#   dma_sem   : DMA semaphore
# ---------------------------------------------------------------------------
def _dti_fused_kernel(x_ref, lens_ref, wl_ref, b12_ref, wd_hbm, dvec_ref,
                      out_ref, xp_ref, wd_vmem, dma_sem):
    # Kick off the dense-head weight DMA immediately; it overlaps with the
    # whole LSTM recurrence and is only waited on right before the dense dots.
    dense_cp = pltpu.make_async_copy(wd_hbm, wd_vmem, dma_sem)
    dense_cp.start()

    Bp, H = lens_ref.shape
    TBp, D = x_ref.shape
    T = TBp // Bp

    wih1 = wl_ref[0:D, :]                    # (D, 4H)
    whh1 = wl_ref[D:D + H, :]                # (H, 4H)
    w_l2 = wl_ref[D + H:D + 3 * H, :]        # (2H, 4H) == [Wih2_bd ; Whh2_bd]
    b1 = b12_ref[0:1, :]
    b2 = b12_ref[1:2, :]
    lens = lens_ref[...]                     # (Bp, H)

    # Hoisted layer-1 input projection over ALL timesteps: one big MXU op off
    # the serial chain.  Stored to VMEM scratch so it doesn't occupy ~20 vregs
    # across the recurrence; 2 vregs are re-loaded per step.
    xp_ref[...] = jnp.dot(x_ref[...], wih1,
                          preferred_element_type=jnp.float32) + b1

    def gates(z):
        # z: (Bp, 4H) fused pre-activation, gate order (i, f, g, o).
        s = jax.nn.sigmoid(z)                # one EUP pass over the full vregs
        i = s[:, 0:H]
        f = s[:, H:2 * H]
        o = s[:, 3 * H:4 * H]
        g = jnp.tanh(z[:, 2 * H:3 * H])
        return i, f, g, o

    zeros = jnp.zeros((Bp, H), jnp.float32)
    h1, c1, h2, c2 = zeros, zeros, zeros, zeros

    # Fully unrolled fused recurrence (T small & static): one set of steps
    # drives BOTH LSTMs via the block-diagonal weights, 2 MXU dots per step.
    for t in range(T):
        # ---- layer 1 cell ----
        z1 = xp_ref[t * Bp:(t + 1) * Bp, :] + jnp.dot(
            h1, whh1, preferred_element_type=jnp.float32)
        i1, f1, g1, o1 = gates(z1)
        c1 = f1 * c1 + i1 * g1
        h1 = o1 * jnp.tanh(c1)
        # ---- layer 2 cell: single fused dot for (Wih2, Whh2) ----
        z2 = jnp.dot(jnp.concatenate([h1, h2], axis=1), w_l2,
                     preferred_element_type=jnp.float32) + b2
        i2, f2, g2, o2 = gates(z2)
        nc2 = f2 * c2 + i2 * g2
        nh2 = o2 * jnp.tanh(nc2)
        # ---- packed-sequence emulation: freeze returned layer-2 state only.
        # (layer-1 state past a length only feeds values discarded here.)
        valid = lens > t
        h2 = jnp.where(valid, nh2, h2)
        c2 = jnp.where(valid, nc2, c2)

    # -------- dense head: x = relu(cat(smi_re, seq_re)) = relu(h2) ----------
    x = jnp.maximum(h2, 0.0)
    dense_cp.wait()                          # dense weights are now in VMEM
    rows = wd_vmem.shape[0]
    w1 = wd_vmem[0:H, :]
    w2 = wd_vmem[H:rows, :]
    h = jnp.dot(x, w1, preferred_element_type=jnp.float32) + dvec_ref[0:1, :]
    h = jnp.maximum(h, 0.0)
    h = jnp.dot(h, w2, preferred_element_type=jnp.float32) + dvec_ref[1:2, :]
    # final Linear(·, 1): elementwise multiply + lane reduction.
    y = jnp.sum(h * dvec_ref[2:3, :], axis=-1, keepdims=True) + dvec_ref[3:4, 0:1]
    out_ref[...] = jax.nn.sigmoid(y)


# ---------------------------------------------------------------------------
# Wrapper-side weight fusion / packing helpers (all tiny, traced under jit).
# ---------------------------------------------------------------------------
def _block_diag_gates(w_a, w_b, h_a, h_b):
    """Per-gate block-diagonal fusion of two LSTM weight matrices.

    w_a: (R_a, 4*h_a), w_b: (R_b, 4*h_b), gate order (i,f,g,o) preserved.
    Returns (R_a+R_b, 4*(h_a+h_b)).
    """
    ra, rb = w_a.shape[0], w_b.shape[0]
    cols = []
    for g in range(4):
        wa = w_a[:, g * h_a:(g + 1) * h_a]
        wb = w_b[:, g * h_b:(g + 1) * h_b]
        top = jnp.concatenate([wa, jnp.zeros((ra, h_b), w_a.dtype)], axis=1)
        bot = jnp.concatenate([jnp.zeros((rb, h_a), w_b.dtype), wb], axis=1)
        cols.append(jnp.concatenate([top, bot], axis=0))
    return jnp.concatenate(cols, axis=1)


def _concat_gate_bias(b_a, b_b, h_a, h_b):
    """(1,4h_a),(1,4h_b) -> (1,4*(h_a+h_b)) with per-gate [smi|seq] layout."""
    parts = []
    for g in range(4):
        parts.append(b_a[:, g * h_a:(g + 1) * h_a])
        parts.append(b_b[:, g * h_b:(g + 1) * h_b])
    return jnp.concatenate(parts, axis=1)


def _pack_dense(p, pad_to=512):
    """Zero-pad 488-wide hidden layers to 512 and pack into two arrays."""
    n1 = p["w1"].shape[1]
    n2 = p["w2"].shape[1]
    w1 = jnp.pad(p["w1"], ((0, 0), (0, pad_to - n1)))           # (H, 512)
    w2 = jnp.pad(p["w2"], ((0, pad_to - n1), (0, pad_to - n2)))  # (512, 512)
    w_dense = jnp.concatenate([w1, w2], axis=0)                  # (H+512, 512)
    b1 = jnp.pad(p["b1"], ((0, 0), (0, pad_to - n1)))
    b2 = jnp.pad(p["b2"], ((0, 0), (0, pad_to - n2)))
    w3 = jnp.pad(p["w3"].T, ((0, 0), (0, pad_to - n2)))          # (1, 512)
    b3 = jnp.pad(p["b3"], ((0, 0), (0, pad_to - 1)))             # (1, 512)
    dvec = jnp.concatenate([b1, b2, w3, b3], axis=0)             # (4, 512)
    return w_dense, dvec


@jax.jit
def dti_forward(params, seq, seq_lens, smi, smi_lens):
    """Matches torch forward(seq, seq_len, smi, smi_len) -> (B, 1)."""
    B, T_s, D_s = smi.shape
    _, T_q, D_q = seq.shape
    sp, qp = params["smi_lstm"], params["seq_lstm"]
    H_s = sp["whh1"].shape[0]
    H_q = qp["whh1"].shape[0]
    H = H_s + H_q
    D = D_s + D_q
    T = max(T_s, T_q)
    Bp = ((B + 7) // 8) * 8                      # sublane-tile aligned batch

    # --- combined, time-major, batch/time padded input (T*Bp, D) ---
    smi_p = jnp.pad(smi.astype(jnp.float32), ((0, Bp - B), (0, T - T_s), (0, 0)))
    seq_p = jnp.pad(seq.astype(jnp.float32), ((0, Bp - B), (0, T - T_q), (0, 0)))
    x = jnp.concatenate([smi_p, seq_p], axis=-1)          # (Bp, T, D)
    x = jnp.transpose(x, (1, 0, 2)).reshape(T * Bp, D)

    # --- per-column length matrix (smi cols use smi_lens, seq cols seq_lens) ---
    # NOTE: assumes all lens >= 1 (PyTorch pack_padded_sequence rejects 0).
    sl = jnp.pad(smi_lens.astype(jnp.int32), (0, Bp - B)).reshape(Bp, 1)
    ql = jnp.pad(seq_lens.astype(jnp.int32), (0, Bp - B)).reshape(Bp, 1)
    lens_cols = jnp.concatenate([jnp.broadcast_to(sl, (Bp, H_s)),
                                 jnp.broadcast_to(ql, (Bp, H_q))], axis=1)

    # --- block-diagonal fused LSTM weights / biases ---
    wih1 = _block_diag_gates(sp["wih1"], qp["wih1"], H_s, H_q)   # (D, 4H)
    whh1 = _block_diag_gates(sp["whh1"], qp["whh1"], H_s, H_q)   # (H, 4H)
    wih2 = _block_diag_gates(sp["wih2"], qp["wih2"], H_s, H_q)   # (H, 4H)
    whh2 = _block_diag_gates(sp["whh2"], qp["whh2"], H_s, H_q)   # (H, 4H)
    w_lstm = jnp.concatenate([wih1, whh1, wih2, whh2], axis=0)   # (D+3H, 4H)
    b12 = jnp.concatenate(
        [_concat_gate_bias(sp["b1"], qp["b1"], H_s, H_q),
         _concat_gate_bias(sp["b2"], qp["b2"], H_s, H_q)], axis=0)  # (2, 4H)

    # --- packed dense-head weights (488 -> 512 lane padding) ---
    w_dense, dvec = _pack_dense(params["dense"], pad_to=512)

    vmem = pl.BlockSpec(memory_space=pltpu.MemorySpace.VMEM)
    hbm = pl.BlockSpec(memory_space=pl.ANY)      # stay in HBM; DMA'd in-kernel

    out = pl.pallas_call(
        _dti_fused_kernel,
        out_shape=jax.ShapeDtypeStruct((Bp, 1), jnp.float32),
        in_specs=[vmem, vmem, vmem, vmem, hbm, vmem],
        out_specs=vmem,
        scratch_shapes=[
            pltpu.VMEM((T * Bp, 4 * H), jnp.float32),   # hoisted layer-1 proj
            pltpu.VMEM(w_dense.shape, jnp.float32),     # dense weight landing
            pltpu.SemaphoreType.DMA,                    # its completion sem
        ],
    )(x, lens_cols, w_lstm, b12, w_dense, dvec)
    return out[:B]


# ---------------------------------------------------------------------------
# Deterministic synthetic parameter init (mirrors PyTorch defaults)
# ---------------------------------------------------------------------------
def _xavier(key, fan_in, fan_out):
    bound = math.sqrt(6.0 / (fan_in + fan_out))
    return jax.random.uniform(key, (fan_in, fan_out), jnp.float32, -bound, bound)


def make_lstm_params(key, d_in, hidden):
    # nn.LSTM default init: U(-1/sqrt(H), 1/sqrt(H)); b = b_ih + b_hh.
    # Weights stored transposed relative to PyTorch: (in, 4H), gate order (i,f,g,o).
    k = 1.0 / math.sqrt(hidden)
    ks = jax.random.split(key, 8)
    u = lambda kk, shape: jax.random.uniform(kk, shape, jnp.float32, -k, k)
    return dict(
        wih1=u(ks[0], (d_in, 4 * hidden)),
        whh1=u(ks[1], (hidden, 4 * hidden)),
        b1=u(ks[2], (1, 4 * hidden)) + u(ks[3], (1, 4 * hidden)),
        wih2=u(ks[4], (hidden, 4 * hidden)),
        whh2=u(ks[5], (hidden, 4 * hidden)),
        b2=u(ks[6], (1, 4 * hidden)) + u(ks[7], (1, 4 * hidden)),
    )


def make_dense_params(key, d_in, layers=(488, 488)):
    # xavier_uniform weights, biases filled with 0.01 (init_weights in __init__)
    l1, l2 = layers
    ks = jax.random.split(key, 3)
    return dict(
        w1=_xavier(ks[0], d_in, l1), b1=jnp.full((1, l1), 0.01, jnp.float32),
        w2=_xavier(ks[1], l1, l2),   b2=jnp.full((1, l2), 0.01, jnp.float32),
        w3=_xavier(ks[2], l2, 1),    b3=jnp.full((1, 1), 0.01, jnp.float32),
    )


if __name__ == "__main__":
    B = 2
    T_SMI, SMI_IN_DIM, SMI_HID = 8, 16, 16     # smi_len (LSTM hidden) = 16
    T_SEQ, SEQ_IN_DIM, SEQ_HID = 10, 24, 24    # seq_len (LSTM hidden) = 24

    root = jax.random.PRNGKey(0)
    k_smi_p, k_seq_p, k_dense, k_smi_x, k_seq_x = jax.random.split(root, 5)

    params = dict(
        smi_lstm=make_lstm_params(k_smi_p, SMI_IN_DIM, SMI_HID),
        seq_lstm=make_lstm_params(k_seq_p, SEQ_IN_DIM, SEQ_HID),
        dense=make_dense_params(k_dense, SMI_HID + SEQ_HID, layers=(488, 488)),
    )

    smi = jax.random.normal(k_smi_x, (B, T_SMI, SMI_IN_DIM), jnp.float32)
    seq = jax.random.normal(k_seq_x, (B, T_SEQ, SEQ_IN_DIM), jnp.float32)
    smi_lens = jnp.array([T_SMI, 5], jnp.int32)   # variable lengths (packed-seq emulation)
    seq_lens = jnp.array([T_SEQ, 7], jnp.int32)

    out = dti_forward(params, seq, seq_lens, smi, smi_lens)
    out = jax.block_until_ready(out)
    assert out.shape == (B, 1)
    assert bool(jnp.all(jnp.isfinite(out)))
    print("KERNEL_OK")
</pallas_src>

<mosaic_0001>
module attributes {stable_mosaic.version = 11 : i64} {
  func.func @_dti_fused_kernel(%arg0: memref<80x40xf32, #tpu.memory_space<vmem>>, %arg1: memref<8x40xi32, #tpu.memory_space<vmem>>, %arg2: memref<160x160xf32, #tpu.memory_space<vmem>>, %arg3: memref<2x160xf32, #tpu.memory_space<vmem>>, %arg4: memref<552x512xf32, #tpu.memory_space<any>>, %arg5: memref<4x512xf32, #tpu.memory_space<vmem>>, %arg6: memref<8x1xf32, #tpu.memory_space<vmem>>, %arg7: memref<80x160xf32, #tpu.memory_space<vmem>>, %arg8: memref<552x512xf32, #tpu.memory_space<vmem>>, %arg9: memref<!tpu.dma_semaphore, #tpu.memory_space<semaphore_mem>>) attributes {dimension_semantics = [], scalar_prefetch = 0 : i64, scratch_operands = 3 : i64, tpu.core_type = #tpu.core_type<tc>} {
    tpu.enqueue_dma source(%arg4 : memref<552x512xf32, #tpu.memory_space<any>>) target(%arg8 : memref<552x512xf32, #tpu.memory_space<vmem>>) target_semaphore(%arg9 : memref<!tpu.dma_semaphore, #tpu.memory_space<semaphore_mem>>)
    %c0 = arith.constant 0 : index
    %c0_0 = arith.constant 0 : index
    %0 = vector.load %arg2[%c0, %c0_0] : memref<160x160xf32, #tpu.memory_space<vmem>>, vector<40x160xf32>
    %c40 = arith.constant 40 : index
    %c0_1 = arith.constant 0 : index
    %1 = vector.load %arg2[%c40, %c0_1] : memref<160x160xf32, #tpu.memory_space<vmem>>, vector<40x160xf32>
    %c80 = arith.constant 80 : index
    %c0_2 = arith.constant 0 : index
    %2 = vector.load %arg2[%c80, %c0_2] : memref<160x160xf32, #tpu.memory_space<vmem>>, vector<80x160xf32>
    %c0_3 = arith.constant 0 : index
    %c0_4 = arith.constant 0 : index
    %3 = vector.load %arg3[%c0_3, %c0_4] : memref<2x160xf32, #tpu.memory_space<vmem>>, vector<1x160xf32>
    %c1 = arith.constant 1 : index
    %c0_5 = arith.constant 0 : index
    %4 = vector.load %arg3[%c1, %c0_5] : memref<2x160xf32, #tpu.memory_space<vmem>>, vector<1x160xf32>
    %c0_6 = arith.constant 0 : index
    %c0_7 = arith.constant 0 : index
    %5 = vector.load %arg1[%c0_6, %c0_7] : memref<8x40xi32, #tpu.memory_space<vmem>>, vector<8x40xi32>
    %c0_8 = arith.constant 0 : index
    %c0_9 = arith.constant 0 : index
    %6 = vector.load %arg0[%c0_8, %c0_9] : memref<80x40xf32, #tpu.memory_space<vmem>>, vector<80x40xf32>
    %cst = arith.constant dense<0.000000e+00> : vector<80x160xf32>
    %7 = tpu.matmul %6, %0, %cst {dimension_numbers = #tpu.dot_dimension_numbers<[1], [0], [0], [1], [0, 0, 1, 1], [], []>} : vector<80x40xf32>, vector<40x160xf32>, vector<80x160xf32> -> vector<80x160xf32>
    %8 = vector.broadcast %3 : vector<1x160xf32> to vector<80x160xf32>
    %9 = arith.addf %7, %8 : vector<80x160xf32>
    %c0_10 = arith.constant 0 : index
    %c0_11 = arith.constant 0 : index
    %10 = vector.load %arg7[%c0_10, %c0_11] : memref<80x160xf32, #tpu.memory_space<vmem>>, vector<80x160xf32>
    tpu.vector_store %arg7[%c0_10, %c0_11], %9 {strides = array<i32>} : memref<80x160xf32, #tpu.memory_space<vmem>>, vector<80x160xf32>,
    %cst_12 = arith.constant 0.000000e+00 : f32
    %11 = vector.broadcast %cst_12 : f32 to vector<8x40xf32>
    %c0_13 = arith.constant 0 : index
    %c0_14 = arith.constant 0 : index
    %12 = vector.load %arg7[%c0_13, %c0_14] : memref<80x160xf32, #tpu.memory_space<vmem>>, vector<8x160xf32>
    %cst_15 = arith.constant dense<0.000000e+00> : vector<8x160xf32>
    %13 = tpu.matmul %11, %1, %cst_15 {dimension_numbers = #tpu.dot_dimension_numbers<[1], [0], [0], [1], [0, 0, 1, 1], [], []>} : vector<8x40xf32>, vector<40x160xf32>, vector<8x160xf32> -> vector<8x160xf32>
    %14 = arith.addf %12, %13 : vector<8x160xf32>
    %15 = arith.negf %14 : vector<8x160xf32>
    %16 = math.exp %15 : vector<8x160xf32>
    %cst_16 = arith.constant 1.000000e+00 : f32
    %17 = vector.broadcast %cst_16 : f32 to vector<8x160xf32>
    %18 = arith.addf %17, %16 : vector<8x160xf32>
    %19 = arith.divf %17, %18 : vector<8x160xf32>
    %20 = vector.extract_strided_slice %19 {offsets = [0, 0], sizes = [8, 40], strides = [1, 1]} : vector<8x160xf32> to vector<8x40xf32>
    %21 = vector.extract_strided_slice %19 {offsets = [0, 40], sizes = [8, 40], strides = [1, 1]} : vector<8x160xf32> to vector<8x40xf32>
    %22 = vector.extract_strided_slice %19 {offsets = [0, 120], sizes = [8, 40], strides = [1, 1]} : vector<8x160xf32> to vector<8x40xf32>
    %23 = vector.extract_strided_slice %14 {offsets = [0, 80], sizes = [8, 40], strides = [1, 1]} : vector<8x160xf32> to vector<8x40xf32>
    %24 = math.tanh %23 : vector<8x40xf32>
    %25 = arith.mulf %21, %11 : vector<8x40xf32>
    %26 = arith.mulf %20, %24 : vector<8x40xf32>
    %27 = arith.addf %25, %26 : vector<8x40xf32>
    %28 = math.tanh %27 : vector<8x40xf32>
    %29 = arith.mulf %22, %28 : vector<8x40xf32>
    %30 = tpu.concatenate %29, %11 in 1 : vector<8x40xf32>, vector<8x40xf32> -> vector<8x80xf32>
    %cst_17 = arith.constant dense<0.000000e+00> : vector<8x160xf32>
    %31 = tpu.matmul %30, %2, %cst_17 {dimension_numbers = #tpu.dot_dimension_numbers<[1], [0], [0], [1], [0, 0, 1, 1], [], []>} : vector<8x80xf32>, vector<80x160xf32>, vector<8x160xf32> -> vector<8x160xf32>
    %32 = vector.broadcast %4 : vector<1x160xf32> to vector<8x160xf32>
    %33 = arith.addf %31, %32 : vector<8x160xf32>
    %34 = arith.negf %33 : vector<8x160xf32>
    %35 = math.exp %34 : vector<8x160xf32>
    %cst_18 = arith.constant 1.000000e+00 : f32
    %36 = vector.broadcast %cst_18 : f32 to vector<8x160xf32>
    %37 = arith.addf %36, %35 : vector<8x160xf32>
    %38 = arith.divf %36, %37 : vector<8x160xf32>
    %39 = vector.extract_strided_slice %38 {offsets = [0, 0], sizes = [8, 40], strides = [1, 1]} : vector<8x160xf32> to vector<8x40xf32>
    %40 = vector.extract_strided_slice %38 {offsets = [0, 40], sizes = [8, 40], strides = [1, 1]} : vector<8x160xf32> to vector<8x40xf32>
    %41 = vector.extract_strided_slice %38 {offsets = [0, 120], sizes = [8, 40], strides = [1, 1]} : vector<8x160xf32> to vector<8x40xf32>
    %42 = vector.extract_strided_slice %33 {offsets = [0, 80], sizes = [8, 40], strides = [1, 1]} : vector<8x160xf32> to vector<8x40xf32>
    %43 = math.tanh %42 : vector<8x40xf32>
    %44 = arith.mulf %40, %11 : vector<8x40xf32>
    %45 = arith.mulf %39, %43 : vector<8x40xf32>
    %46 = arith.addf %44, %45 : vector<8x40xf32>
    %47 = math.tanh %46 : vector<8x40xf32>
    %48 = arith.mulf %41, %47 : vector<8x40xf32>
    %c0_i32 = arith.constant 0 : i32
    %49 = vector.broadcast %c0_i32 : i32 to vector<8x40xi32>
    %50 = arith.cmpi sgt, %5, %49 : vector<8x40xi32>
    %51 = arith.select %50, %48, %11 : vector<8x40xi1>, vector<8x40xf32>
    %52 = arith.select %50, %46, %11 : vector<8x40xi1>, vector<8x40xf32>
    %c8 = arith.constant 8 : index
    %c0_19 = arith.constant 0 : index
    %53 = vector.load %arg7[%c8, %c0_19] : memref<80x160xf32, #tpu.memory_space<vmem>>, vector<8x160xf32>
    %cst_20 = arith.constant dense<0.000000e+00> : vector<8x160xf32>
    %54 = tpu.matmul %29, %1, %cst_20 {dimension_numbers = #tpu.dot_dimension_numbers<[1], [0], [0], [1], [0, 0, 1, 1], [], []>} : vector<8x40xf32>, vector<40x160xf32>, vector<8x160xf32> -> vector<8x160xf32>
    %55 = arith.addf %53, %54 : vector<8x160xf32>
    %56 = arith.negf %55 : vector<8x160xf32>
    %57 = math.exp %56 : vector<8x160xf32>
    %cst_21 = arith.constant 1.000000e+00 : f32
    %58 = vector.broadcast %cst_21 : f32 to vector<8x160xf32>
    %59 = arith.addf %58, %57 : vector<8x160xf32>
    %60 = arith.divf %58, %59 : vector<8x160xf32>
    %61 = vector.extract_strided_slice %60 {offsets = [0, 0], sizes = [8, 40], strides = [1, 1]} : vector<8x160xf32> to vector<8x40xf32>
    %62 = vector.extract_strided_slice %60 {offsets = [0, 40], sizes = [8, 40], strides = [1, 1]} : vector<8x160xf32> to vector<8x40xf32>
    %63 = vector.extract_strided_slice %60 {offsets = [0, 120], sizes = [8, 40], strides = [1, 1]} : vector<8x160xf32> to vector<8x40xf32>
    %64 = vector.extract_strided_slice %55 {offsets = [0, 80], sizes = [8, 40], strides = [1, 1]} : vector<8x160xf32> to vector<8x40xf32>
    %65 = math.tanh %64 : vector<8x40xf32>
    %66 = arith.mulf %62, %27 : vector<8x40xf32>
    %67 = arith.mulf %61, %65 : vector<8x40xf32>
    %68 = arith.addf %66, %67 : vector<8x40xf32>
    %69 = math.tanh %68 : vector<8x40xf32>
    %70 = arith.mulf %63, %69 : vector<8x40xf32>
    %71 = tpu.concatenate %70, %51 in 1 : vector<8x40xf32>, vector<8x40xf32> -> vector<8x80xf32>
    %cst_22 = arith.constant dense<0.000000e+00> : vector<8x160xf32>
    %72 = tpu.matmul %71, %2, %cst_22 {dimension_numbers = #tpu.dot_dimension_numbers<[1], [0], [0], [1], [0, 0, 1, 1], [], []>} : vector<8x80xf32>, vector<80x160xf32>, vector<8x160xf32> -> vector<8x160xf32>
    %73 = vector.broadcast %4 : vector<1x160xf32> to vector<8x160xf32>
    %74 = arith.addf %72, %73 : vector<8x160xf32>
    %75 = arith.negf %74 : vector<8x160xf32>
    %76 = math.exp %75 : vector<8x160xf32>
    %cst_23 = arith.constant 1.000000e+00 : f32
    %77 = vector.broadcast %cst_23 : f32 to vector<8x160xf32>
    %78 = arith.addf %77, %76 : vector<8x160xf32>
    %79 = arith.divf %77, %78 : vector<8x160xf32>
    %80 = vector.extract_strided_slice %79 {offsets = [0, 0], sizes = [8, 40], strides = [1, 1]} : vector<8x160xf32> to vector<8x40xf32>
    %81 = vector.extract_strided_slice %79 {offsets = [0, 40], sizes = [8, 40], strides = [1, 1]} : vector<8x160xf32> to vector<8x40xf32>
    %82 = vector.extract_strided_slice %79 {offsets = [0, 120], sizes = [8, 40], strides = [1, 1]} : vector<8x160xf32> to vector<8x40xf32>
    %83 = vector.extract_strided_slice %74 {offsets = [0, 80], sizes = [8, 40], strides = [1, 1]} : vector<8x160xf32> to vector<8x40xf32>
    %84 = math.tanh %83 : vector<8x40xf32>
    %85 = arith.mulf %81, %52 : vector<8x40xf32>
    %86 = arith.mulf %80, %84 : vector<8x40xf32>
    %87 = arith.addf %85, %86 : vector<8x40xf32>
    %88 = math.tanh %87 : vector<8x40xf32>
    %89 = arith.mulf %82, %88 : vector<8x40xf32>
    %c1_i32 = arith.constant 1 : i32
    %90 = vector.broadcast %c1_i32 : i32 to vector<8x40xi32>
    %91 = arith.cmpi sgt, %5, %90 : vector<8x40xi32>
    %92 = arith.select %91, %89, %51 : vector<8x40xi1>, vector<8x40xf32>
    %93 = arith.select %91, %87, %52 : vector<8x40xi1>, vector<8x40xf32>
    %c16 = arith.constant 16 : index
    %c0_24 = arith.constant 0 : index
    %94 = vector.load %arg7[%c16, %c0_24] : memref<80x160xf32, #tpu.memory_space<vmem>>, vector<8x160xf32>
    %cst_25 = arith.constant dense<0.000000e+00> : vector<8x160xf32>
    %95 = tpu.matmul %70, %1, %cst_25 {dimension_numbers = #tpu.dot_dimension_numbers<[1], [0], [0], [1], [0, 0, 1, 1], [], []>} : vector<8x40xf32>, vector<40x160xf32>, vector<8x160xf32> -> vector<8x160xf32>
    %96 = arith.addf %94, %95 : vector<8x160xf32>
    %97 = arith.negf %96 : vector<8x160xf32>
    %98 = math.exp %97 : vector<8x160xf32>
    %cst_26 = arith.constant 1.000000e+00 : f32
    %99 = vector.broadcast %cst_26 : f32 to vector<8x160xf32>
    %100 = arith.addf %99, %98 : vector<8x160xf32>
    %101 = arith.divf %99, %100 : vector<8x160xf32>
    %102 = vector.extract_strided_slice %101 {offsets = [0, 0], sizes = [8, 40], strides = [1, 1]} : vector<8x160xf32> to vector<8x40xf32>
    %103 = vector.extract_strided_slice %101 {offsets = [0, 40], sizes = [8, 40], strides = [1, 1]} : vector<8x160xf32> to vector<8x40xf32>
    %104 = vector.extract_strided_slice %101 {offsets = [0, 120], sizes = [8, 40], strides = [1, 1]} : vector<8x160xf32> to vector<8x40xf32>
    %105 = vector.extract_strided_slice %96 {offsets = [0, 80], sizes = [8, 40], strides = [1, 1]} : vector<8x160xf32> to vector<8x40xf32>
    %106 = math.tanh %105 : vector<8x40xf32>
    %107 = arith.mulf %103, %68 : vector<8x40xf32>
    %108 = arith.mulf %102, %106 : vector<8x40xf32>
    %109 = arith.addf %107, %108 : vector<8x40xf32>
    %110 = math.tanh %109 : vector<8x40xf32>
    %111 = arith.mulf %104, %110 : vector<8x40xf32>
    %112 = tpu.concatenate %111, %92 in 1 : vector<8x40xf32>, vector<8x40xf32> -> vector<8x80xf32>
    %cst_27 = arith.constant dense<0.000000e+00> : vector<8x160xf32>
    %113 = tpu.matmul %112, %2, %cst_27 {dimension_numbers = #tpu.dot_dimension_numbers<[1], [0], [0], [1], [0, 0, 1, 1], [], []>} : vector<8x80xf32>, vector<80x160xf32>, vector<8x160xf32> -> vector<8x160xf32>
    %114 = vector.broadcast %4 : vector<1x160xf32> to vector<8x160xf32>
    %115 = arith.addf %113, %114 : vector<8x160xf32>
    %116 = arith.negf %115 : vector<8x160xf32>
    %117 = math.exp %116 : vector<8x160xf32>
    %cst_28 = arith.constant 1.000000e+00 : f32
    %118 = vector.broadcast %cst_28 : f32 to vector<8x160xf32>
    %119 = arith.addf %118, %117 : vector<8x160xf32>
    %120 = arith.divf %118, %119 : vector<8x160xf32>
    %121 = vector.extract_strided_slice %120 {offsets = [0, 0], sizes = [8, 40], strides = [1, 1]} : vector<8x160xf32> to vector<8x40xf32>
    %122 = vector.extract_strided_slice %120 {offsets = [0, 40], sizes = [8, 40], strides = [1, 1]} : vector<8x160xf32> to vector<8x40xf32>
    %123 = vector.extract_strided_slice %120 {offsets = [0, 120], sizes = [8, 40], strides = [1, 1]} : vector<8x160xf32> to vector<8x40xf32>
    %124 = vector.extract_strided_slice %115 {offsets = [0, 80], sizes = [8, 40], strides = [1, 1]} : vector<8x160xf32> to vector<8x40xf32>
    %125 = math.tanh %124 : vector<8x40xf32>
    %126 = arith.mulf %122, %93 : vector<8x40xf32>
    %127 = arith.mulf %121, %125 : vector<8x40xf32>
    %128 = arith.addf %126, %127 : vector<8x40xf32>
    %129 = math.tanh %128 : vector<8x40xf32>
    %130 = arith.mulf %123, %129 : vector<8x40xf32>
    %c2_i32 = arith.constant 2 : i32
    %131 = vector.broadcast %c2_i32 : i32 to vector<8x40xi32>
    %132 = arith.cmpi sgt, %5, %131 : vector<8x40xi32>
    %133 = arith.select %132, %130, %92 : vector<8x40xi1>, vector<8x40xf32>
    %134 = arith.select %132, %128, %93 : vector<8x40xi1>, vector<8x40xf32>
    %c24 = arith.constant 24 : index
    %c0_29 = arith.constant 0 : index
    %135 = vector.load %arg7[%c24, %c0_29] : memref<80x160xf32, #tpu.memory_space<vmem>>, vector<8x160xf32>
    %cst_30 = arith.constant dense<0.000000e+00> : vector<8x160xf32>
    %136 = tpu.matmul %111, %1, %cst_30 {dimension_numbers = #tpu.dot_dimension_numbers<[1], [0], [0], [1], [0, 0, 1, 1], [], []>} : vector<8x40xf32>, vector<40x160xf32>, vector<8x160xf32> -> vector<8x160xf32>
    %137 = arith.addf %135, %136 : vector<8x160xf32>
    %138 = arith.negf %137 : vector<8x160xf32>
    %139 = math.exp %138 : vector<8x160xf32>
    %cst_31 = arith.constant 1.000000e+00 : f32
    %140 = vector.broadcast %cst_31 : f32 to vector<8x160xf32>
    %141 = arith.addf %140, %139 : vector<8x160xf32>
    %142 = arith.divf %140, %141 : vector<8x160xf32>
    %143 = vector.extract_strided_slice %142 {offsets = [0, 0], sizes = [8, 40], strides = [1, 1]} : vector<8x160xf32> to vector<8x40xf32>
    %144 = vector.extract_strided_slice %142 {offsets = [0, 40], sizes = [8, 40], strides = [1, 1]} : vector<8x160xf32> to vector<8x40xf32>
    %145 = vector.extract_strided_slice %142 {offsets = [0, 120], sizes = [8, 40], strides = [1, 1]} : vector<8x160xf32> to vector<8x40xf32>
    %146 = vector.extract_strided_slice %137 {offsets = [0, 80], sizes = [8, 40], strides = [1, 1]} : vector<8x160xf32> to vector<8x40xf32>
    %147 = math.tanh %146 : vector<8x40xf32>
    %148 = arith.mulf %144, %109 : vector<8x40xf32>
    %149 = arith.mulf %143, %147 : vector<8x40xf32>
    %150 = arith.addf %148, %149 : vector<8x40xf32>
    %151 = math.tanh %150 : vector<8x40xf32>
    %152 = arith.mulf %145, %151 : vector<8x40xf32>
    %153 = tpu.concatenate %152, %133 in 1 : vector<8x40xf32>, vector<8x40xf32> -> vector<8x80xf32>
    %cst_32 = arith.constant dense<0.000000e+00> : vector<8x160xf32>
    %154 = tpu.matmul %153, %2, %cst_32 {dimension_numbers = #tpu.dot_dimension_numbers<[1], [0], [0], [1], [0, 0, 1, 1], [], []>} : vector<8x80xf32>, vector<80x160xf32>, vector<8x160xf32> -> vector<8x160xf32>
    %155 = vector.broadcast %4 : vector<1x160xf32> to vector<8x160xf32>
    %156 = arith.addf %154, %155 : vector<8x160xf32>
    %157 = arith.negf %156 : vector<8x160xf32>
    %158 = math.exp %157 : vector<8x160xf32>
    %cst_33 = arith.constant 1.000000e+00 : f32
    %159 = vector.broadcast %cst_33 : f32 to vector<8x160xf32>
    %160 = arith.addf %159, %158 : vector<8x160xf32>
    %161 = arith.divf %159, %160 : vector<8x160xf32>
    %162 = vector.extract_strided_slice %161 {offsets = [0, 0], sizes = [8, 40], strides = [1, 1]} : vector<8x160xf32> to vector<8x40xf32>
    %163 = vector.extract_strided_slice %161 {offsets = [0, 40], sizes = [8, 40], strides = [1, 1]} : vector<8x160xf32> to vector<8x40xf32>
    %164 = vector.extract_strided_slice %161 {offsets = [0, 120], sizes = [8, 40], strides = [1, 1]} : vector<8x160xf32> to vector<8x40xf32>
    %165 = vector.extract_strided_slice %156 {offsets = [0, 80], sizes = [8, 40], strides = [1, 1]} : vector<8x160xf32> to vector<8x40xf32>
    %166 = math.tanh %165 : vector<8x40xf32>
    %167 = arith.mulf %163, %134 : vector<8x40xf32>
    %168 = arith.mulf %162, %166 : vector<8x40xf32>
    %169 = arith.addf %167, %168 : vector<8x40xf32>
    %170 = math.tanh %169 : vector<8x40xf32>
    %171 = arith.mulf %164, %170 : vector<8x40xf32>
    %c3_i32 = arith.constant 3 : i32
    %172 = vector.broadcast %c3_i32 : i32 to vector<8x40xi32>
    %173 = arith.cmpi sgt, %5, %172 : vector<8x40xi32>
    %174 = arith.select %173, %171, %133 : vector<8x40xi1>, vector<8x40xf32>
    %175 = arith.select %173, %169, %134 : vector<8x40xi1>, vector<8x40xf32>
    %c32 = arith.constant 32 : index
    %c0_34 = arith.constant 0 : index
    %176 = vector.load %arg7[%c32, %c0_34] : memref<80x160xf32, #tpu.memory_space<vmem>>, vector<8x160xf32>
    %cst_35 = arith.constant dense<0.000000e+00> : vector<8x160xf32>
    %177 = tpu.matmul %152, %1, %cst_35 {dimension_numbers = #tpu.dot_dimension_numbers<[1], [0], [0], [1], [0, 0, 1, 1], [], []>} : vector<8x40xf32>, vector<40x160xf32>, vector<8x160xf32> -> vector<8x160xf32>
    %178 = arith.addf %176, %177 : vector<8x160xf32>
    %179 = arith.negf %178 : vector<8x160xf32>
    %180 = math.exp %179 : vector<8x160xf32>
    %cst_36 = arith.constant 1.000000e+00 : f32
    %181 = vector.broadcast %cst_36 : f32 to vector<8x160xf32>
    %182 = arith.addf %181, %180 : vector<8x160xf32>
    %183 = arith.divf %181, %182 : vector<8x160xf32>
    %184 = vector.extract_strided_slice %183 {offsets = [0, 0], sizes = [8, 40], strides = [1, 1]} : vector<8x160xf32> to vector<8x40xf32>
    %185 = vector.extract_strided_slice %183 {offsets = [0, 40], sizes = [8, 40], strides = [1, 1]} : vector<8x160xf32> to vector<8x40xf32>
    %186 = vector.extract_strided_slice %183 {offsets = [0, 120], sizes = [8, 40], strides = [1, 1]} : vector<8x160xf32> to vector<8x40xf32>
    %187 = vector.extract_strided_slice %178 {offsets = [0, 80], sizes = [8, 40], strides = [1, 1]} : vector<8x160xf32> to vector<8x40xf32>
    %188 = math.tanh %187 : vector<8x40xf32>
    %189 = arith.mulf %185, %150 : vector<8x40xf32>
    %190 = arith.mulf %184, %188 : vector<8x40xf32>
    %191 = arith.addf %189, %190 : vector<8x40xf32>
    %192 = math.tanh %191 : vector<8x40xf32>
    %193 = arith.mulf %186, %192 : vector<8x40xf32>
    %194 = tpu.concatenate %193, %174 in 1 : vector<8x40xf32>, vector<8x40xf32> -> vector<8x80xf32>
    %cst_37 = arith.constant dense<0.000000e+00> : vector<8x160xf32>
    %195 = tpu.matmul %194, %2, %cst_37 {dimension_numbers = #tpu.dot_dimension_numbers<[1], [0], [0], [1], [0, 0, 1, 1], [], []>} : vector<8x80xf32>, vector<80x160xf32>, vector<8x160xf32> -> vector<8x160xf32>
    %196 = vector.broadcast %4 : vector<1x160xf32> to vector<8x160xf32>
    %197 = arith.addf %195, %196 : vector<8x160xf32>
    %198 = arith.negf %197 : vector<8x160xf32>
    %199 = math.exp %198 : vector<8x160xf32>
    %cst_38 = arith.constant 1.000000e+00 : f32
    %200 = vector.broadcast %cst_38 : f32 to vector<8x160xf32>
    %201 = arith.addf %200, %199 : vector<8x160xf32>
    %202 = arith.divf %200, %201 : vector<8x160xf32>
    %203 = vector.extract_strided_slice %202 {offsets = [0, 0], sizes = [8, 40], strides = [1, 1]} : vector<8x160xf32> to vector<8x40xf32>
    %204 = vector.extract_strided_slice %202 {offsets = [0, 40], sizes = [8, 40], strides = [1, 1]} : vector<8x160xf32> to vector<8x40xf32>
    %205 = vector.extract_strided_slice %202 {offsets = [0, 120], sizes = [8, 40], strides = [1, 1]} : vector<8x160xf32> to vector<8x40xf32>
    %206 = vector.extract_strided_slice %197 {offsets = [0, 80], sizes = [8, 40], strides = [1, 1]} : vector<8x160xf32> to vector<8x40xf32>
    %207 = math.tanh %206 : vector<8x40xf32>
    %208 = arith.mulf %204, %175 : vector<8x40xf32>
    %209 = arith.mulf %203, %207 : vector<8x40xf32>
    %210 = arith.addf %208, %209 : vector<8x40xf32>
    %211 = math.tanh %210 : vector<8x40xf32>
    %212 = arith.mulf %205, %211 : vector<8x40xf32>
    %c4_i32 = arith.constant 4 : i32
    %213 = vector.broadcast %c4_i32 : i32 to vector<8x40xi32>
    %214 = arith.cmpi sgt, %5, %213 : vector<8x40xi32>
    %215 = arith.select %214, %212, %174 : vector<8x40xi1>, vector<8x40xf32>
    %216 = arith.select %214, %210, %175 : vector<8x40xi1>, vector<8x40xf32>
    %c40_39 = arith.constant 40 : index
    %c0_40 = arith.constant 0 : index
    %217 = vector.load %arg7[%c40_39, %c0_40] : memref<80x160xf32, #tpu.memory_space<vmem>>, vector<8x160xf32>
    %cst_41 = arith.constant dense<0.000000e+00> : vector<8x160xf32>
    %218 = tpu.matmul %193, %1, %cst_41 {dimension_numbers = #tpu.dot_dimension_numbers<[1], [0], [0], [1], [0, 0, 1, 1], [], []>} : vector<8x40xf32>, vector<40x160xf32>, vector<8x160xf32> -> vector<8x160xf32>
    %219 = arith.addf %217, %218 : vector<8x160xf32>
    %220 = arith.negf %219 : vector<8x160xf32>
    %221 = math.exp %220 : vector<8x160xf32>
    %cst_42 = arith.constant 1.000000e+00 : f32
    %222 = vector.broadcast %cst_42 : f32 to vector<8x160xf32>
    %223 = arith.addf %222, %221 : vector<8x160xf32>
    %224 = arith.divf %222, %223 : vector<8x160xf32>
    %225 = vector.extract_strided_slice %224 {offsets = [0, 0], sizes = [8, 40], strides = [1, 1]} : vector<8x160xf32> to vector<8x40xf32>
    %226 = vector.extract_strided_slice %224 {offsets = [0, 40], sizes = [8, 40], strides = [1, 1]} : vector<8x160xf32> to vector<8x40xf32>
    %227 = vector.extract_strided_slice %224 {offsets = [0, 120], sizes = [8, 40], strides = [1, 1]} : vector<8x160xf32> to vector<8x40xf32>
    %228 = vector.extract_strided_slice %219 {offsets = [0, 80], sizes = [8, 40], strides = [1, 1]} : vector<8x160xf32> to vector<8x40xf32>
    %229 = math.tanh %228 : vector<8x40xf32>
    %230 = arith.mulf %226, %191 : vector<8x40xf32>
    %231 = arith.mulf %225, %229 : vector<8x40xf32>
    %232 = arith.addf %230, %231 : vector<8x40xf32>
    %233 = math.tanh %232 : vector<8x40xf32>
    %234 = arith.mulf %227, %233 : vector<8x40xf32>
    %235 = tpu.concatenate %234, %215 in 1 : vector<8x40xf32>, vector<8x40xf32> -> vector<8x80xf32>
    %cst_43 = arith.constant dense<0.000000e+00> : vector<8x160xf32>
    %236 = tpu.matmul %235, %2, %cst_43 {dimension_numbers = #tpu.dot_dimension_numbers<[1], [0], [0], [1], [0, 0, 1, 1], [], []>} : vector<8x80xf32>, vector<80x160xf32>, vector<8x160xf32> -> vector<8x160xf32>
    %237 = vector.broadcast %4 : vector<1x160xf32> to vector<8x160xf32>
    %238 = arith.addf %236, %237 : vector<8x160xf32>
    %239 = arith.negf %238 : vector<8x160xf32>
    %240 = math.exp %239 : vector<8x160xf32>
    %cst_44 = arith.constant 1.000000e+00 : f32
    %241 = vector.broadcast %cst_44 : f32 to vector<8x160xf32>
    %242 = arith.addf %241, %240 : vector<8x160xf32>
    %243 = arith.divf %241, %242 : vector<8x160xf32>
    %244 = vector.extract_strided_slice %243 {offsets = [0, 0], sizes = [8, 40], strides = [1, 1]} : vector<8x160xf32> to vector<8x40xf32>
    %245 = vector.extract_strided_slice %243 {offsets = [0, 40], sizes = [8, 40], strides = [1, 1]} : vector<8x160xf32> to vector<8x40xf32>
    %246 = vector.extract_strided_slice %243 {offsets = [0, 120], sizes = [8, 40], strides = [1, 1]} : vector<8x160xf32> to vector<8x40xf32>
    %247 = vector.extract_strided_slice %238 {offsets = [0, 80], sizes = [8, 40], strides = [1, 1]} : vector<8x160xf32> to vector<8x40xf32>
    %248 = math.tanh %247 : vector<8x40xf32>
    %249 = arith.mulf %245, %216 : vector<8x40xf32>
    %250 = arith.mulf %244, %248 : vector<8x40xf32>
    %251 = arith.addf %249, %250 : vector<8x40xf32>
    %252 = math.tanh %251 : vector<8x40xf32>
    %253 = arith.mulf %246, %252 : vector<8x40xf32>
    %c5_i32 = arith.constant 5 : i32
    %254 = vector.broadcast %c5_i32 : i32 to vector<8x40xi32>
    %255 = arith.cmpi sgt, %5, %254 : vector<8x40xi32>
    %256 = arith.select %255, %253, %215 : vector<8x40xi1>, vector<8x40xf32>
    %257 = arith.select %255, %251, %216 : vector<8x40xi1>, vector<8x40xf32>
    %c48 = arith.constant 48 : index
    %c0_45 = arith.constant 0 : index
    %258 = vector.load %arg7[%c48, %c0_45] : memref<80x160xf32, #tpu.memory_space<vmem>>, vector<8x160xf32>
    %cst_46 = arith.constant dense<0.000000e+00> : vector<8x160xf32>
    %259 = tpu.matmul %234, %1, %cst_46 {dimension_numbers = #tpu.dot_dimension_numbers<[1], [0], [0], [1], [0, 0, 1, 1], [], []>} : vector<8x40xf32>, vector<40x160xf32>, vector<8x160xf32> -> vector<8x160xf32>
    %260 = arith.addf %258, %259 : vector<8x160xf32>
    %261 = arith.negf %260 : vector<8x160xf32>
    %262 = math.exp %261 : vector<8x160xf32>
    %cst_47 = arith.constant 1.000000e+00 : f32
    %263 = vector.broadcast %cst_47 : f32 to vector<8x160xf32>
    %264 = arith.addf %263, %262 : vector<8x160xf32>
    %265 = arith.divf %263, %264 : vector<8x160xf32>
    %266 = vector.extract_strided_slice %265 {offsets = [0, 0], sizes = [8, 40], strides = [1, 1]} : vector<8x160xf32> to vector<8x40xf32>
    %267 = vector.extract_strided_slice %265 {offsets = [0, 40], sizes = [8, 40], strides = [1, 1]} : vector<8x160xf32> to vector<8x40xf32>
    %268 = vector.extract_strided_slice %265 {offsets = [0, 120], sizes = [8, 40], strides = [1, 1]} : vector<8x160xf32> to vector<8x40xf32>
    %269 = vector.extract_strided_slice %260 {offsets = [0, 80], sizes = [8, 40], strides = [1, 1]} : vector<8x160xf32> to vector<8x40xf32>
    %270 = math.tanh %269 : vector<8x40xf32>
    %271 = arith.mulf %267, %232 : vector<8x40xf32>
    %272 = arith.mulf %266, %270 : vector<8x40xf32>
    %273 = arith.addf %271, %272 : vector<8x40xf32>
    %274 = math.tanh %273 : vector<8x40xf32>
    %275 = arith.mulf %268, %274 : vector<8x40xf32>
    %276 = tpu.concatenate %275, %256 in 1 : vector<8x40xf32>, vector<8x40xf32> -> vector<8x80xf32>
    %cst_48 = arith.constant dense<0.000000e+00> : vector<8x160xf32>
    %277 = tpu.matmul %276, %2, %cst_48 {dimension_numbers = #tpu.dot_dimension_numbers<[1], [0], [0], [1], [0, 0, 1, 1], [], []>} : vector<8x80xf32>, vector<80x160xf32>, vector<8x160xf32> -> vector<8x160xf32>
    %278 = vector.broadcast %4 : vector<1x160xf32> to vector<8x160xf32>
    %279 = arith.addf %277, %278 : vector<8x160xf32>
    %280 = arith.negf %279 : vector<8x160xf32>
    %281 = math.exp %280 : vector<8x160xf32>
    %cst_49 = arith.constant 1.000000e+00 : f32
    %282 = vector.broadcast %cst_49 : f32 to vector<8x160xf32>
    %283 = arith.addf %282, %281 : vector<8x160xf32>
    %284 = arith.divf %282, %283 : vector<8x160xf32>
    %285 = vector.extract_strided_slice %284 {offsets = [0, 0], sizes = [8, 40], strides = [1, 1]} : vector<8x160xf32> to vector<8x40xf32>
    %286 = vector.extract_strided_slice %284 {offsets = [0, 40], sizes = [8, 40], strides = [1, 1]} : vector<8x160xf32> to vector<8x40xf32>
    %287 = vector.extract_strided_slice %284 {offsets = [0, 120], sizes = [8, 40], strides = [1, 1]} : vector<8x160xf32> to vector<8x40xf32>
    %288 = vector.extract_strided_slice %279 {offsets = [0, 80], sizes = [8, 40], strides = [1, 1]} : vector<8x160xf32> to vector<8x40xf32>
    %289 = math.tanh %288 : vector<8x40xf32>
    %290 = arith.mulf %286, %257 : vector<8x40xf32>
    %291 = arith.mulf %285, %289 : vector<8x40xf32>
    %292 = arith.addf %290, %291 : vector<8x40xf32>
    %293 = math.tanh %292 : vector<8x40xf32>
    %294 = arith.mulf %287, %293 : vector<8x40xf32>
    %c6_i32 = arith.constant 6 : i32
    %295 = vector.broadcast %c6_i32 : i32 to vector<8x40xi32>
    %296 = arith.cmpi sgt, %5, %295 : vector<8x40xi32>
    %297 = arith.select %296, %294, %256 : vector<8x40xi1>, vector<8x40xf32>
    %298 = arith.select %296, %292, %257 : vector<8x40xi1>, vector<8x40xf32>
    %c56 = arith.constant 56 : index
    %c0_50 = arith.constant 0 : index
    %299 = vector.load %arg7[%c56, %c0_50] : memref<80x160xf32, #tpu.memory_space<vmem>>, vector<8x160xf32>
    %cst_51 = arith.constant dense<0.000000e+00> : vector<8x160xf32>
    %300 = tpu.matmul %275, %1, %cst_51 {dimension_numbers = #tpu.dot_dimension_numbers<[1], [0], [0], [1], [0, 0, 1, 1], [], []>} : vector<8x40xf32>, vector<40x160xf32>, vector<8x160xf32> -> vector<8x160xf32>
    %301 = arith.addf %299, %300 : vector<8x160xf32>
    %302 = arith.negf %301 : vector<8x160xf32>
    %303 = math.exp %302 : vector<8x160xf32>
    %cst_52 = arith.constant 1.000000e+00 : f32
    %304 = vector.broadcast %cst_52 : f32 to vector<8x160xf32>
    %305 = arith.addf %304, %303 : vector<8x160xf32>
    %306 = arith.divf %304, %305 : vector<8x160xf32>
    %307 = vector.extract_strided_slice %306 {offsets = [0, 0], sizes = [8, 40], strides = [1, 1]} : vector<8x160xf32> to vector<8x40xf32>
    %308 = vector.extract_strided_slice %306 {offsets = [0, 40], sizes = [8, 40], strides = [1, 1]} : vector<8x160xf32> to vector<8x40xf32>
    %309 = vector.extract_strided_slice %306 {offsets = [0, 120], sizes = [8, 40], strides = [1, 1]} : vector<8x160xf32> to vector<8x40xf32>
    %310 = vector.extract_strided_slice %301 {offsets = [0, 80], sizes = [8, 40], strides = [1, 1]} : vector<8x160xf32> to vector<8x40xf32>
    %311 = math.tanh %310 : vector<8x40xf32>
    %312 = arith.mulf %308, %273 : vector<8x40xf32>
    %313 = arith.mulf %307, %311 : vector<8x40xf32>
    %314 = arith.addf %312, %313 : vector<8x40xf32>
    %315 = math.tanh %314 : vector<8x40xf32>
    %316 = arith.mulf %309, %315 : vector<8x40xf32>
    %317 = tpu.concatenate %316, %297 in 1 : vector<8x40xf32>, vector<8x40xf32> -> vector<8x80xf32>
    %cst_53 = arith.constant dense<0.000000e+00> : vector<8x160xf32>
    %318 = tpu.matmul %317, %2, %cst_53 {dimension_numbers = #tpu.dot_dimension_numbers<[1], [0], [0], [1], [0, 0, 1, 1], [], []>} : vector<8x80xf32>, vector<80x160xf32>, vector<8x160xf32> -> vector<8x160xf32>
    %319 = vector.broadcast %4 : vector<1x160xf32> to vector<8x160xf32>
    %320 = arith.addf %318, %319 : vector<8x160xf32>
    %321 = arith.negf %320 : vector<8x160xf32>
    %322 = math.exp %321 : vector<8x160xf32>
    %cst_54 = arith.constant 1.000000e+00 : f32
    %323 = vector.broadcast %cst_54 : f32 to vector<8x160xf32>
    %324 = arith.addf %323, %322 : vector<8x160xf32>
    %325 = arith.divf %323, %324 : vector<8x160xf32>
    %326 = vector.extract_strided_slice %325 {offsets = [0, 0], sizes = [8, 40], strides = [1, 1]} : vector<8x160xf32> to vector<8x40xf32>
    %327 = vector.extract_strided_slice %325 {offsets = [0, 40], sizes = [8, 40], strides = [1, 1]} : vector<8x160xf32> to vector<8x40xf32>
    %328 = vector.extract_strided_slice %325 {offsets = [0, 120], sizes = [8, 40], strides = [1, 1]} : vector<8x160xf32> to vector<8x40xf32>
    %329 = vector.extract_strided_slice %320 {offsets = [0, 80], sizes = [8, 40], strides = [1, 1]} : vector<8x160xf32> to vector<8x40xf32>
    %330 = math.tanh %329 : vector<8x40xf32>
    %331 = arith.mulf %327, %298 : vector<8x40xf32>
    %332 = arith.mulf %326, %330 : vector<8x40xf32>
    %333 = arith.addf %331, %332 : vector<8x40xf32>
    %334 = math.tanh %333 : vector<8x40xf32>
    %335 = arith.mulf %328, %334 : vector<8x40xf32>
    %c7_i32 = arith.constant 7 : i32
    %336 = vector.broadcast %c7_i32 : i32 to vector<8x40xi32>
    %337 = arith.cmpi sgt, %5, %336 : vector<8x40xi32>
    %338 = arith.select %337, %335, %297 : vector<8x40xi1>, vector<8x40xf32>
    %339 = arith.select %337, %333, %298 : vector<8x40xi1>, vector<8x40xf32>
    %c64 = arith.constant 64 : index
    %c0_55 = arith.constant 0 : index
    %340 = vector.load %arg7[%c64, %c0_55] : memref<80x160xf32, #tpu.memory_space<vmem>>, vector<8x160xf32>
    %cst_56 = arith.constant dense<0.000000e+00> : vector<8x160xf32>
    %341 = tpu.matmul %316, %1, %cst_56 {dimension_numbers = #tpu.dot_dimension_numbers<[1], [0], [0], [1], [0, 0, 1, 1], [], []>} : vector<8x40xf32>, vector<40x160xf32>, vector<8x160xf32> -> vector<8x160xf32>
    %342 = arith.addf %340, %341 : vector<8x160xf32>
    %343 = arith.negf %342 : vector<8x160xf32>
    %344 = math.exp %343 : vector<8x160xf32>
    %cst_57 = arith.constant 1.000000e+00 : f32
    %345 = vector.broadcast %cst_57 : f32 to vector<8x160xf32>
    %346 = arith.addf %345, %344 : vector<8x160xf32>
    %347 = arith.divf %345, %346 : vector<8x160xf32>
    %348 = vector.extract_strided_slice %347 {offsets = [0, 0], sizes = [8, 40], strides = [1, 1]} : vector<8x160xf32> to vector<8x40xf32>
    %349 = vector.extract_strided_slice %347 {offsets = [0, 40], sizes = [8, 40], strides = [1, 1]} : vector<8x160xf32> to vector<8x40xf32>
    %350 = vector.extract_strided_slice %347 {offsets = [0, 120], sizes = [8, 40], strides = [1, 1]} : vector<8x160xf32> to vector<8x40xf32>
    %351 = vector.extract_strided_slice %342 {offsets = [0, 80], sizes = [8, 40], strides = [1, 1]} : vector<8x160xf32> to vector<8x40xf32>
    %352 = math.tanh %351 : vector<8x40xf32>
    %353 = arith.mulf %349, %314 : vector<8x40xf32>
    %354 = arith.mulf %348, %352 : vector<8x40xf32>
    %355 = arith.addf %353, %354 : vector<8x40xf32>
    %356 = math.tanh %355 : vector<8x40xf32>
    %357 = arith.mulf %350, %356 : vector<8x40xf32>
    %358 = tpu.concatenate %357, %338 in 1 : vector<8x40xf32>, vector<8x40xf32> -> vector<8x80xf32>
    %cst_58 = arith.constant dense<0.000000e+00> : vector<8x160xf32>
    %359 = tpu.matmul %358, %2, %cst_58 {dimension_numbers = #tpu.dot_dimension_numbers<[1], [0], [0], [1], [0, 0, 1, 1], [], []>} : vector<8x80xf32>, vector<80x160xf32>, vector<8x160xf32> -> vector<8x160xf32>
    %360 = vector.broadcast %4 : vector<1x160xf32> to vector<8x160xf32>
    %361 = arith.addf %359, %360 : vector<8x160xf32>
    %362 = arith.negf %361 : vector<8x160xf32>
    %363 = math.exp %362 : vector<8x160xf32>
    %cst_59 = arith.constant 1.000000e+00 : f32
    %364 = vector.broadcast %cst_59 : f32 to vector<8x160xf32>
    %365 = arith.addf %364, %363 : vector<8x160xf32>
    %366 = arith.divf %364, %365 : vector<8x160xf32>
    %367 = vector.extract_strided_slice %366 {offsets = [0, 0], sizes = [8, 40], strides = [1, 1]} : vector<8x160xf32> to vector<8x40xf32>
    %368 = vector.extract_strided_slice %366 {offsets = [0, 40], sizes = [8, 40], strides = [1, 1]} : vector<8x160xf32> to vector<8x40xf32>
    %369 = vector.extract_strided_slice %366 {offsets = [0, 120], sizes = [8, 40], strides = [1, 1]} : vector<8x160xf32> to vector<8x40xf32>
    %370 = vector.extract_strided_slice %361 {offsets = [0, 80], sizes = [8, 40], strides = [1, 1]} : vector<8x160xf32> to vector<8x40xf32>
    %371 = math.tanh %370 : vector<8x40xf32>
    %372 = arith.mulf %368, %339 : vector<8x40xf32>
    %373 = arith.mulf %367, %371 : vector<8x40xf32>
    %374 = arith.addf %372, %373 : vector<8x40xf32>
    %375 = math.tanh %374 : vector<8x40xf32>
    %376 = arith.mulf %369, %375 : vector<8x40xf32>
    %c8_i32 = arith.constant 8 : i32
    %377 = vector.broadcast %c8_i32 : i32 to vector<8x40xi32>
    %378 = arith.cmpi sgt, %5, %377 : vector<8x40xi32>
    %379 = arith.select %378, %376, %338 : vector<8x40xi1>, vector<8x40xf32>
    %380 = arith.select %378, %374, %339 : vector<8x40xi1>, vector<8x40xf32>
    %c72 = arith.constant 72 : index
    %c0_60 = arith.constant 0 : index
    %381 = vector.load %arg7[%c72, %c0_60] : memref<80x160xf32, #tpu.memory_space<vmem>>, vector<8x160xf32>
    %cst_61 = arith.constant dense<0.000000e+00> : vector<8x160xf32>
    %382 = tpu.matmul %357, %1, %cst_61 {dimension_numbers = #tpu.dot_dimension_numbers<[1], [0], [0], [1], [0, 0, 1, 1], [], []>} : vector<8x40xf32>, vector<40x160xf32>, vector<8x160xf32> -> vector<8x160xf32>
    %383 = arith.addf %381, %382 : vector<8x160xf32>
    %384 = arith.negf %383 : vector<8x160xf32>
    %385 = math.exp %384 : vector<8x160xf32>
    %cst_62 = arith.constant 1.000000e+00 : f32
    %386 = vector.broadcast %cst_62 : f32 to vector<8x160xf32>
    %387 = arith.addf %386, %385 : vector<8x160xf32>
    %388 = arith.divf %386, %387 : vector<8x160xf32>
    %389 = vector.extract_strided_slice %388 {offsets = [0, 0], sizes = [8, 40], strides = [1, 1]} : vector<8x160xf32> to vector<8x40xf32>
    %390 = vector.extract_strided_slice %388 {offsets = [0, 40], sizes = [8, 40], strides = [1, 1]} : vector<8x160xf32> to vector<8x40xf32>
    %391 = vector.extract_strided_slice %388 {offsets = [0, 120], sizes = [8, 40], strides = [1, 1]} : vector<8x160xf32> to vector<8x40xf32>
    %392 = vector.extract_strided_slice %383 {offsets = [0, 80], sizes = [8, 40], strides = [1, 1]} : vector<8x160xf32> to vector<8x40xf32>
    %393 = math.tanh %392 : vector<8x40xf32>
    %394 = arith.mulf %390, %355 : vector<8x40xf32>
    %395 = arith.mulf %389, %393 : vector<8x40xf32>
    %396 = arith.addf %394, %395 : vector<8x40xf32>
    %397 = math.tanh %396 : vector<8x40xf32>
    %398 = arith.mulf %391, %397 : vector<8x40xf32>
    %399 = tpu.concatenate %398, %379 in 1 : vector<8x40xf32>, vector<8x40xf32> -> vector<8x80xf32>
    %cst_63 = arith.constant dense<0.000000e+00> : vector<8x160xf32>
    %400 = tpu.matmul %399, %2, %cst_63 {dimension_numbers = #tpu.dot_dimension_numbers<[1], [0], [0], [1], [0, 0, 1, 1], [], []>} : vector<8x80xf32>, vector<80x160xf32>, vector<8x160xf32> -> vector<8x160xf32>
    %401 = vector.broadcast %4 : vector<1x160xf32> to vector<8x160xf32>
    %402 = arith.addf %400, %401 : vector<8x160xf32>
    %403 = arith.negf %402 : vector<8x160xf32>
    %404 = math.exp %403 : vector<8x160xf32>
    %cst_64 = arith.constant 1.000000e+00 : f32
    %405 = vector.broadcast %cst_64 : f32 to vector<8x160xf32>
    %406 = arith.addf %405, %404 : vector<8x160xf32>
    %407 = arith.divf %405, %406 : vector<8x160xf32>
    %408 = vector.extract_strided_slice %407 {offsets = [0, 0], sizes = [8, 40], strides = [1, 1]} : vector<8x160xf32> to vector<8x40xf32>
    %409 = vector.extract_strided_slice %407 {offsets = [0, 40], sizes = [8, 40], strides = [1, 1]} : vector<8x160xf32> to vector<8x40xf32>
    %410 = vector.extract_strided_slice %407 {offsets = [0, 120], sizes = [8, 40], strides = [1, 1]} : vector<8x160xf32> to vector<8x40xf32>
    %411 = vector.extract_strided_slice %402 {offsets = [0, 80], sizes = [8, 40], strides = [1, 1]} : vector<8x160xf32> to vector<8x40xf32>
    %412 = math.tanh %411 : vector<8x40xf32>
    %413 = arith.mulf %409, %380 : vector<8x40xf32>
    %414 = arith.mulf %408, %412 : vector<8x40xf32>
    %415 = arith.addf %413, %414 : vector<8x40xf32>
    %416 = math.tanh %415 : vector<8x40xf32>
    %417 = arith.mulf %410, %416 : vector<8x40xf32>
    %c9_i32 = arith.constant 9 : i32
    %418 = vector.broadcast %c9_i32 : i32 to vector<8x40xi32>
    %419 = arith.cmpi sgt, %5, %418 : vector<8x40xi32>
    %420 = arith.select %419, %417, %379 : vector<8x40xi1>, vector<8x40xf32>
    %cst_65 = arith.constant 0.000000e+00 : f32
    %421 = vector.broadcast %cst_65 : f32 to vector<8x40xf32>
    %422 = arith.maximumf %420, %421 : vector<8x40xf32>
    tpu.wait_dma2 semaphore(%arg9 : memref<!tpu.dma_semaphore, #tpu.memory_space<semaphore_mem>>) src(%arg4 : memref<552x512xf32, #tpu.memory_space<any>>) dst(%arg8 : memref<552x512xf32, #tpu.memory_space<vmem>>)
    %c0_66 = arith.constant 0 : index
    %c0_67 = arith.constant 0 : index
    %423 = vector.load %arg8[%c0_66, %c0_67] : memref<552x512xf32, #tpu.memory_space<vmem>>, vector<40x512xf32>
    %c40_68 = arith.constant 40 : index
    %c0_69 = arith.constant 0 : index
    %424 = vector.load %arg8[%c40_68, %c0_69] : memref<552x512xf32, #tpu.memory_space<vmem>>, vector<512x512xf32>
    %cst_70 = arith.constant dense<0.000000e+00> : vector<8x512xf32>
    %425 = tpu.matmul %422, %423, %cst_70 {dimension_numbers = #tpu.dot_dimension_numbers<[1], [0], [0], [1], [0, 0, 1, 1], [], []>} : vector<8x40xf32>, vector<40x512xf32>, vector<8x512xf32> -> vector<8x512xf32>
    %c0_71 = arith.constant 0 : index
    %c0_72 = arith.constant 0 : index
    %426 = vector.load %arg5[%c0_71, %c0_72] : memref<4x512xf32, #tpu.memory_space<vmem>>, vector<1x512xf32>
    %427 = vector.broadcast %426 : vector<1x512xf32> to vector<8x512xf32>
    %428 = arith.addf %425, %427 : vector<8x512xf32>
    %cst_73 = arith.constant 0.000000e+00 : f32
    %429 = vector.broadcast %cst_73 : f32 to vector<8x512xf32>
    %430 = arith.maximumf %428, %429 : vector<8x512xf32>
    %cst_74 = arith.constant dense<0.000000e+00> : vector<8x512xf32>
    %431 = tpu.matmul %430, %424, %cst_74 {dimension_numbers = #tpu.dot_dimension_numbers<[1], [0], [0], [1], [0, 0, 1, 1], [], []>} : vector<8x512xf32>, vector<512x512xf32>, vector<8x512xf32> -> vector<8x512xf32>
    %c1_75 = arith.constant 1 : index
    %c0_76 = arith.constant 0 : index
    %432 = vector.load %arg5[%c1_75, %c0_76] : memref<4x512xf32, #tpu.memory_space<vmem>>, vector<1x512xf32>
    %433 = vector.broadcast %432 : vector<1x512xf32> to vector<8x512xf32>
    %434 = arith.addf %431, %433 : vector<8x512xf32>
    %c2 = arith.constant 2 : index
    %c0_77 = arith.constant 0 : index
    %435 = vector.load %arg5[%c2, %c0_77] : memref<4x512xf32, #tpu.memory_space<vmem>>, vector<1x512xf32>
    %436 = vector.broadcast %435 : vector<1x512xf32> to vector<8x512xf32>
    %437 = arith.mulf %434, %436 : vector<8x512xf32>
    %cst_78 = arith.constant dense<0.000000e+00> : vector<8xf32>
    %438 = vector.multi_reduction <add>, %437, %cst_78 [1] : vector<8x512xf32> to vector<8xf32>
    %439 = vector.shape_cast %438 : vector<8xf32> to vector<8x1xf32>
    %c3 = arith.constant 3 : index
    %c0_79 = arith.constant 0 : index
    %440 = vector.load %arg5[%c3, %c0_79] : memref<4x512xf32, #tpu.memory_space<vmem>>, vector<1x1xf32>
    %441 = vector.broadcast %440 : vector<1x1xf32> to vector<8x1xf32>
    %442 = arith.addf %439, %441 : vector<8x1xf32>
    %443 = arith.negf %442 : vector<8x1xf32>
    %444 = math.exp %443 : vector<8x1xf32>
    %cst_80 = arith.constant 1.000000e+00 : f32
    %445 = vector.broadcast %cst_80 : f32 to vector<8x1xf32>
    %446 = arith.addf %445, %444 : vector<8x1xf32>
    %447 = arith.divf %445, %446 : vector<8x1xf32>
    %c0_81 = arith.constant 0 : index
    %c0_82 = arith.constant 0 : index
    %448 = vector.load %arg6[%c0_81, %c0_82] : memref<8x1xf32, #tpu.memory_space<vmem>>, vector<8x1xf32>
    tpu.vector_store %arg6[%c0_81, %c0_82], %447 {strides = array<i32>} : memref<8x1xf32, #tpu.memory_space<vmem>>, vector<8x1xf32>,
    return
  }
}

</mosaic_0001>

<llo_original>
// kernel: dti_forward.1
$region0: #{dti_forward.1}
  #allocation0 [shape = 'u32[]', space=smem, size = 0x4, offset = 0x4, fixed_abs, tag = 'smem constant byte address 0x4 - core index']
  #allocation1 [shape = 'u32[72,128]{1,0:T(1,128)}', space=vmem, size = 0x9000, scoped, tag = 'internal scratch']
  #allocation2 [shape = 'f32[80,160]{1,0:T(8,128)}', space=vmem, size = 0x14000, scoped, tag = 'scratch operand']
  #allocation3 [shape = 'f32[552,512]{1,0:T(8,128)}', space=vmem, size = 0x114000, scoped, tag = 'scratch operand']
  #allocation4 [shape = 's32[1]{0}', space=sflag, size = 0x4, scoped, tag = 'scratch operand']
  #allocation5 [shape = 's32[]', space=sflag, size = 0x4, offset = 0, fixed_abs, tag = 'sflag constant byte address 0x0 - dummy sync flag']
  %s0 = inlined_call_operand.vmem [shape: f32[80,40], index: 0, kind: input, shape index: {}]
  %s1 = inlined_call_operand.vmem [shape: s32[8,40], index: 1, kind: input, shape index: {}]
  %s2 = inlined_call_operand.vmem [shape: f32[160,160], index: 2, kind: input, shape index: {}]
  %s3 = inlined_call_operand.vmem [shape: f32[2,160], index: 3, kind: input, shape index: {}]
  %s4 = inlined_call_operand.vmem [shape: f32[552,512], index: 4, kind: input, shape index: {}]
  %s5 = inlined_call_operand.vmem [shape: f32[4,512], index: 5, kind: input, shape index: {}]
  %s6 = inlined_call_operand.vmem [shape: f32[8,1], index: 6, kind: output, shape index: {}]
  %s7 = sld [smem:[#allocation0]]
  $region49: #{dti_forward.1} parent=0
    _
  %s9 = ssub.s32 1, %s7
  %s10 = scalar_select 0, %s9, %s7
  // Predicated region
  $region2: #{dti_forward.1} parent=0 // pred_check
    _
  $region3: #{dti_forward.1} parent=0 // pred_check_branch
    %12 = sbr.rel (0) target = $region5
  $region4: #{dti_forward.1} parent=0 // pred_region
    _
  $region5: #{dti_forward.1} parent=0 // pred_fallthru
    _
  // Predicated region
  $region6: #{dti_forward.1} parent=0 // pred_check
    _
  $region7: #{dti_forward.1} parent=0 // pred_check_branch
    %14 = sbr.rel (0) target = $region9
  $region8: #{dti_forward.1} parent=0 // pred_region
    _
  $region9: #{dti_forward.1} parent=0 // pred_fallthru
    _
  // Predicated region
  $region10: #{dti_forward.1} parent=0 // pred_check
    _
  $region11: #{dti_forward.1} parent=0 // pred_check_branch
    %16 = sbr.rel (0) target = $region13
  $region12: #{dti_forward.1} parent=0 // pred_region
    _
  $region13: #{dti_forward.1} parent=0 // pred_fallthru
    _
  // Predicated region
  $region14: #{dti_forward.1} parent=0 // pred_check
    _
  $region15: #{dti_forward.1} parent=0 // pred_check_branch
    %18 = sbr.rel (0) target = $region17
  $region16: #{dti_forward.1} parent=0 // pred_region
    _
  $region17: #{dti_forward.1} parent=0 // pred_fallthru
    _
  // Predicated region
  $region18: #{dti_forward.1} parent=0 // pred_check
    _
  $region19: #{dti_forward.1} parent=0 // pred_check_branch
    %20 = sbr.rel (0) target = $region21
  $region20: #{dti_forward.1} parent=0 // pred_region
    _
  $region21: #{dti_forward.1} parent=0 // pred_fallthru
    _
  // Predicated region
  $region22: #{dti_forward.1} parent=0 // pred_check
    _
  $region23: #{dti_forward.1} parent=0 // pred_check_branch
    %22 = sbr.rel (0) target = $region25
  $region24: #{dti_forward.1} parent=0 // pred_region
    loop: start=0, step=1, limit=1
    $region26: #{dti_forward.1} parent=24 // loop_pre_header
      _
    $region27: #{dti_forward.1} parent=24 // loop_header
      %s24 = sphi 0, %s28
      %p25 = scmp.ge.s32.totalorder %s24, 1
      %s29 = sphi %s4, %s4
      %s30 = sphi [#allocation3], [#allocation3]
    $region28: #{dti_forward.1} parent=24 // loop_header_branch
      %27 = sbr.rel (%p25) target = $region32
    $region29: #{dti_forward.1} parent=24 // loop_body
      %v31 = vld [vmem:[%s29] sm:$0xff]
      %32 = vst [vmem:[%s30] sm:$0xff] %v31
      %v33 = vld [vmem:[%s29 + $0x8] sm:$0xff]
      %34 = vst [vmem:[%s30 + $0x8] sm:$0xff] %v33
      %v35 = vld [vmem:[%s29 + $0x10] sm:$0xff]
      %36 = vst [vmem:[%s30 + $0x10] sm:$0xff] %v35
      %v37 = vld [vmem:[%s29 + $0x18] sm:$0xff]
      %38 = vst [vmem:[%s30 + $0x18] sm:$0xff] %v37
      %v39 = vld [vmem:[%s29 + $0x20] sm:$0xff]
      %40 = vst [vmem:[%s30 + $0x20] sm:$0xff] %v39
      %v41 = vld [vmem:[%s29 + $0x28] sm:$0xff]
      %42 = vst [vmem:[%s30 + $0x28] sm:$0xff] %v41
      %v43 = vld [vmem:[%s29 + $0x30] sm:$0xff]
      %44 = vst [vmem:[%s30 + $0x30] sm:$0xff] %v43
      %v45 = vld [vmem:[%s29 + $0x38] sm:$0xff]
      %46 = vst [vmem:[%s30 + $0x38] sm:$0xff] %v45
      %v47 = vld [vmem:[%s29 + $0x40] sm:$0xff]
      %48 = vst [vmem:[%s30 + $0x40] sm:$0xff] %v47
      %v49 = vld [vmem:[%s29 + $0x48] sm:$0xff]
      %50 = vst [vmem:[%s30 + $0x48] sm:$0xff] %v49
      %v51 = vld [vmem:[%s29 + $0x50] sm:$0xff]
      %52 = vst [vmem:[%s30 + $0x50] sm:$0xff] %v51
      %v53 = vld [vmem:[%s29 + $0x58] sm:$0xff]
      %54 = vst [vmem:[%s30 + $0x58] sm:$0xff] %v53
      %v55 = vld [vmem:[%s29 + $0x60] sm:$0xff]
      %56 = vst [vmem:[%s30 + $0x60] sm:$0xff] %v55
      %v57 = vld [vmem:[%s29 + $0x68] sm:$0xff]
      %58 = vst [vmem:[%s30 + $0x68] sm:$0xff] %v57
      %v59 = vld [vmem:[%s29 + $0x70] sm:$0xff]
      %60 = vst [vmem:[%s30 + $0x70] sm:$0xff] %v59
      %v61 = vld [vmem:[%s29 + $0x78] sm:$0xff]
      %62 = vst [vmem:[%s30 + $0x78] sm:$0xff] %v61
      %v63 = vld [vmem:[%s29 + $0x80] sm:$0xff]
      %64 = vst [vmem:[%s30 + $0x80] sm:$0xff] %v63
      %v65 = vld [vmem:[%s29 + $0x88] sm:$0xff]
      %66 = vst [vmem:[%s30 + $0x88] sm:$0xff] %v65
      %v67 = vld [vmem:[%s29 + $0x90] sm:$0xff]
      %68 = vst [vmem:[%s30 + $0x90] sm:$0xff] %v67
      %v69 = vld [vmem:[%s29 + $0x98] sm:$0xff]
      %70 = vst [vmem:[%s30 + $0x98] sm:$0xff] %v69
      %v71 = vld [vmem:[%s29 + $0xa0] sm:$0xff]
      %72 = vst [vmem:[%s30 + $0xa0] sm:$0xff] %v71
      %v73 = vld [vmem:[%s29 + $0xa8] sm:$0xff]
      %74 = vst [vmem:[%s30 + $0xa8] sm:$0xff] %v73
      %v75 = vld [vmem:[%s29 + $0xb0] sm:$0xff]
      %76 = vst [vmem:[%s30 + $0xb0] sm:$0xff] %v75
      %v77 = vld [vmem:[%s29 + $0xb8] sm:$0xff]
      %78 = vst [vmem:[%s30 + $0xb8] sm:$0xff] %v77
      %v79 = vld [vmem:[%s29 + $0xc0] sm:$0xff]
      %80 = vst [vmem:[%s30 + $0xc0] sm:$0xff] %v79
      %v81 = vld [vmem:[%s29 + $0xc8] sm:$0xff]
      %82 = vst [vmem:[%s30 + $0xc8] sm:$0xff] %v81
      %v83 = vld [vmem:[%s29 + $0xd0] sm:$0xff]
      %84 = vst [vmem:[%s30 + $0xd0] sm:$0xff] %v83
      %v85 = vld [vmem:[%s29 + $0xd8] sm:$0xff]
      %86 = vst [vmem:[%s30 + $0xd8] sm:$0xff] %v85
      %v87 = vld [vmem:[%s29 + $0xe0] sm:$0xff]
      %88 = vst [vmem:[%s30 + $0xe0] sm:$0xff] %v87
      %v89 = vld [vmem:[%s29 + $0xe8] sm:$0xff]
      %90 = vst [vmem:[%s30 + $0xe8] sm:$0xff] %v89
      %v91 = vld [vmem:[%s29 + $0xf0] sm:$0xff]
      %92 = vst [vmem:[%s30 + $0xf0] sm:$0xff] %v91
      %v93 = vld [vmem:[%s29 + $0xf8] sm:$0xff]
      %94 = vst [vmem:[%s30 + $0xf8] sm:$0xff] %v93
      %v95 = vld [vmem:[%s29 + $0x100] sm:$0xff]
      %96 = vst [vmem:[%s30 + $0x100] sm:$0xff] %v95
      %v97 = vld [vmem:[%s29 + $0x108] sm:$0xff]
      %98 = vst [vmem:[%s30 + $0x108] sm:$0xff] %v97
      %v99 = vld [vmem:[%s29 + $0x110] sm:$0xff]
      %100 = vst [vmem:[%s30 + $0x110] sm:$0xff] %v99
      %v101 = vld [vmem:[%s29 + $0x118] sm:$0xff]
      %102 = vst [vmem:[%s30 + $0x118] sm:$0xff] %v101
      %v103 = vld [vmem:[%s29 + $0x120] sm:$0xff]
      %104 = vst [vmem:[%s30 + $0x120] sm:$0xff] %v103
      %v105 = vld [vmem:[%s29 + $0x128] sm:$0xff]
      %106 = vst [vmem:[%s30 + $0x128] sm:$0xff] %v105
      %v107 = vld [vmem:[%s29 + $0x130] sm:$0xff]
      %108 = vst [vmem:[%s30 + $0x130] sm:$0xff] %v107
      %v109 = vld [vmem:[%s29 + $0x138] sm:$0xff]
      %110 = vst [vmem:[%s30 + $0x138] sm:$0xff] %v109
      %v111 = vld [vmem:[%s29 + $0x140] sm:$0xff]
      %112 = vst [vmem:[%s30 + $0x140] sm:$0xff] %v111
      %v113 = vld [vmem:[%s29 + $0x148] sm:$0xff]
      %114 = vst [vmem:[%s30 + $0x148] sm:$0xff] %v113
      %v115 = vld [vmem:[%s29 + $0x150] sm:$0xff]
      %116 = vst [vmem:[%s30 + $0x150] sm:$0xff] %v115
      %v117 = vld [vmem:[%s29 + $0x158] sm:$0xff]
      %118 = vst [vmem:[%s30 + $0x158] sm:$0xff] %v117
      %v119 = vld [vmem:[%s29 + $0x160] sm:$0xff]
      %120 = vst [vmem:[%s30 + $0x160] sm:$0xff] %v119
      %v121 = vld [vmem:[%s29 + $0x168] sm:$0xff]
      %122 = vst [vmem:[%s30 + $0x168] sm:$0xff] %v121
      %v123 = vld [vmem:[%s29 + $0x170] sm:$0xff]
      %124 = vst [vmem:[%s30 + $0x170] sm:$0xff] %v123
      %v125 = vld [vmem:[%s29 + $0x178] sm:$0xff]
      %126 = vst [vmem:[%s30 + $0x178] sm:$0xff] %v125
      %v127 = vld [vmem:[%s29 + $0x180] sm:$0xff]
      %128 = vst [vmem:[%s30 + $0x180] sm:$0xff] %v127
      %v129 = vld [vmem:[%s29 + $0x188] sm:$0xff]
      %130 = vst [vmem:[%s30 + $0x188] sm:$0xff] %v129
      %v131 = vld [vmem:[%s29 + $0x190] sm:$0xff]
      %132 = vst [vmem:[%s30 + $0x190] sm:$0xff] %v131
      %v133 = vld [vmem:[%s29 + $0x198] sm:$0xff]
      %134 = vst [vmem:[%s30 + $0x198] sm:$0xff] %v133
      %v135 = vld [vmem:[%s29 + $0x1a0] sm:$0xff]
      %136 = vst [vmem:[%s30 + $0x1a0] sm:$0xff] %v135
      %v137 = vld [vmem:[%s29 + $0x1a8] sm:$0xff]
      %138 = vst [vmem:[%s30 + $0x1a8] sm:$0xff] %v137
      %v139 = vld [vmem:[%s29 + $0x1b0] sm:$0xff]
      %140 = vst [vmem:[%s30 + $0x1b0] sm:$0xff] %v139
      %v141 = vld [vmem:[%s29 + $0x1b8] sm:$0xff]
      %142 = vst [vmem:[%s30 + $0x1b8] sm:$0xff] %v141
      %v143 = vld [vmem:[%s29 + $0x1c0] sm:$0xff]
      %144 = vst [vmem:[%s30 + $0x1c0] sm:$0xff] %v143
      %v145 = vld [vmem:[%s29 + $0x1c8] sm:$0xff]
      %146 = vst [vmem:[%s30 + $0x1c8] sm:$0xff] %v145
      %v147 = vld [vmem:[%s29 + $0x1d0] sm:$0xff]
      %148 = vst [vmem:[%s30 + $0x1d0] sm:$0xff] %v147
      %v149 = vld [vmem:[%s29 + $0x1d8] sm:$0xff]
      %150 = vst [vmem:[%s30 + $0x1d8] sm:$0xff] %v149
      %v151 = vld [vmem:[%s29 + $0x1e0] sm:$0xff]
      %152 = vst [vmem:[%s30 + $0x1e0] sm:$0xff] %v151
      %v153 = vld [vmem:[%s29 + $0x1e8] sm:$0xff]
      %154 = vst [vmem:[%s30 + $0x1e8] sm:$0xff] %v153
      %v155 = vld [vmem:[%s29 + $0x1f0] sm:$0xff]
      %156 = vst [vmem:[%s30 + $0x1f0] sm:$0xff] %v155
      %v157 = vld [vmem:[%s29 + $0x1f8] sm:$0xff]
      %158 = vst [vmem:[%s30 + $0x1f8] sm:$0xff] %v157
      %v159 = vld [vmem:[%s29 + $0x200] sm:$0xff]
      %160 = vst [vmem:[%s30 + $0x200] sm:$0xff] %v159
      %v161 = vld [vmem:[%s29 + $0x208] sm:$0xff]
      %162 = vst [vmem:[%s30 + $0x208] sm:$0xff] %v161
      %v163 = vld [vmem:[%s29 + $0x210] sm:$0xff]
      %164 = vst [vmem:[%s30 + $0x210] sm:$0xff] %v163
      %v165 = vld [vmem:[%s29 + $0x218] sm:$0xff]
      %166 = vst [vmem:[%s30 + $0x218] sm:$0xff] %v165
      %v167 = vld [vmem:[%s29 + $0x220] sm:$0xff]
      %168 = vst [vmem:[%s30 + $0x220] sm:$0xff] %v167
      %v169 = vld [vmem:[%s29 + $0x228] sm:$0xff]
      %170 = vst [vmem:[%s30 + $0x228] sm:$0xff] %v169
      %v171 = vld [vmem:[%s29 + $0x230] sm:$0xff]
      %172 = vst [vmem:[%s30 + $0x230] sm:$0xff] %v171
      %v173 = vld [vmem:[%s29 + $0x238] sm:$0xff]
      %174 = vst [vmem:[%s30 + $0x238] sm:$0xff] %v173
      %v175 = vld [vmem:[%s29 + $0x240] sm:$0xff]
      %176 = vst [vmem:[%s30 + $0x240] sm:$0xff] %v175
      %v177 = vld [vmem:[%s29 + $0x248] sm:$0xff]
      %178 = vst [vmem:[%s30 + $0x248] sm:$0xff] %v177
      %v179 = vld [vmem:[%s29 + $0x250] sm:$0xff]
      %180 = vst [vmem:[%s30 + $0x250] sm:$0xff] %v179
      %v181 = vld [vmem:[%s29 + $0x258] sm:$0xff]
      %182 = vst [vmem:[%s30 + $0x258] sm:$0xff] %v181
      %v183 = vld [vmem:[%s29 + $0x260] sm:$0xff]
      %184 = vst [vmem:[%s30 + $0x260] sm:$0xff] %v183
      %v185 = vld [vmem:[%s29 + $0x268] sm:$0xff]
      %186 = vst [vmem:[%s30 + $0x268] sm:$0xff] %v185
      %v187 = vld [vmem:[%s29 + $0x270] sm:$0xff]
      %188 = vst [vmem:[%s30 + $0x270] sm:$0xff] %v187
      %v189 = vld [vmem:[%s29 + $0x278] sm:$0xff]
      %190 = vst [vmem:[%s30 + $0x278] sm:$0xff] %v189
      %v191 = vld [vmem:[%s29 + $0x280] sm:$0xff]
      %192 = vst [vmem:[%s30 + $0x280] sm:$0xff] %v191
      %v193 = vld [vmem:[%s29 + $0x288] sm:$0xff]
      %194 = vst [vmem:[%s30 + $0x288] sm:$0xff] %v193
      %v195 = vld [vmem:[%s29 + $0x290] sm:$0xff]
      %196 = vst [vmem:[%s30 + $0x290] sm:$0xff] %v195
      %v197 = vld [vmem:[%s29 + $0x298] sm:$0xff]
      %198 = vst [vmem:[%s30 + $0x298] sm:$0xff] %v197
      %v199 = vld [vmem:[%s29 + $0x2a0] sm:$0xff]
      %200 = vst [vmem:[%s30 + $0x2a0] sm:$0xff] %v199
      %v201 = vld [vmem:[%s29 + $0x2a8] sm:$0xff]
      %202 = vst [vmem:[%s30 + $0x2a8] sm:$0xff] %v201
      %v203 = vld [vmem:[%s29 + $0x2b0] sm:$0xff]
      %204 = vst [vmem:[%s30 + $0x2b0] sm:$0xff] %v203
      %v205 = vld [vmem:[%s29 + $0x2b8] sm:$0xff]
      %206 = vst [vmem:[%s30 + $0x2b8] sm:$0xff] %v205
      %v207 = vld [vmem:[%s29 + $0x2c0] sm:$0xff]
      %208 = vst [vmem:[%s30 + $0x2c0] sm:$0xff] %v207
      %v209 = vld [vmem:[%s29 + $0x2c8] sm:$0xff]
      %210 = vst [vmem:[%s30 + $0x2c8] sm:$0xff] %v209
      %v211 = vld [vmem:[%s29 + $0x2d0] sm:$0xff]
      %212 = vst [vmem:[%s30 + $0x2d0] sm:$0xff] %v211
      %v213 = vld [vmem:[%s29 + $0x2d8] sm:$0xff]
      %214 = vst [vmem:[%s30 + $0x2d8] sm:$0xff] %v213
      %v215 = vld [vmem:[%s29 + $0x2e0] sm:$0xff]
      %216 = vst [vmem:[%s30 + $0x2e0] sm:$0xff] %v215
      %v217 = vld [vmem:[%s29 + $0x2e8] sm:$0xff]
      %218 = vst [vmem:[%s30 + $0x2e8] sm:$0xff] %v217
      %v219 = vld [vmem:[%s29 + $0x2f0] sm:$0xff]
      %220 = vst [vmem:[%s30 + $0x2f0] sm:$0xff] %v219
      %v221 = vld [vmem:[%s29 + $0x2f8] sm:$0xff]
      %222 = vst [vmem:[%s30 + $0x2f8] sm:$0xff] %v221
      %v223 = vld [vmem:[%s29 + $0x300] sm:$0xff]
      %224 = vst [vmem:[%s30 + $0x300] sm:$0xff] %v223
      %v225 = vld [vmem:[%s29 + $0x308] sm:$0xff]
      %226 = vst [vmem:[%s30 + $0x308] sm:$0xff] %v225
      %v227 = vld [vmem:[%s29 + $0x310] sm:$0xff]
      %228 = vst [vmem:[%s30 + $0x310] sm:$0xff] %v227
      %v229 = vld [vmem:[%s29 + $0x318] sm:$0xff]
      %230 = vst [vmem:[%s30 + $0x318] sm:$0xff] %v229
      %v231 = vld [vmem:[%s29 + $0x320] sm:$0xff]
      %232 = vst [vmem:[%s30 + $0x320] sm:$0xff] %v231
      %v233 = vld [vmem:[%s29 + $0x328] sm:$0xff]
      %234 = vst [vmem:[%s30 + $0x328] sm:$0xff] %v233
      %v235 = vld [vmem:[%s29 + $0x330] sm:$0xff]
      %236 = vst [vmem:[%s30 + $0x330] sm:$0xff] %v235
      %v237 = vld [vmem:[%s29 + $0x338] sm:$0xff]
      %238 = vst [vmem:[%s30 + $0x338] sm:$0xff] %v237
      %v239 = vld [vmem:[%s29 + $0x340] sm:$0xff]
      %240 = vst [vmem:[%s30 + $0x340] sm:$0xff] %v239
      %v241 = vld [vmem:[%s29 + $0x348] sm:$0xff]
      %242 = vst [vmem:[%s30 + $0x348] sm:$0xff] %v241
      %v243 = vld [vmem:[%s29 + $0x350] sm:$0xff]
      %244 = vst [vmem:[%s30 + $0x350] sm:$0xff] %v243
      %v245 = vld [vmem:[%s29 + $0x358] sm:$0xff]
      %246 = vst [vmem:[%s30 + $0x358] sm:$0xff] %v245
      %v247 = vld [vmem:[%s29 + $0x360] sm:$0xff]
      %248 = vst [vmem:[%s30 + $0x360] sm:$0xff] %v247
      %v249 = vld [vmem:[%s29 + $0x368] sm:$0xff]
      %250 = vst [vmem:[%s30 + $0x368] sm:$0xff] %v249
      %v251 = vld [vmem:[%s29 + $0x370] sm:$0xff]
      %252 = vst [vmem:[%s30 + $0x370] sm:$0xff] %v251
      %v253 = vld [vmem:[%s29 + $0x378] sm:$0xff]
      %254 = vst [vmem:[%s30 + $0x378] sm:$0xff] %v253
      %v255 = vld [vmem:[%s29 + $0x380] sm:$0xff]
      %256 = vst [vmem:[%s30 + $0x380] sm:$0xff] %v255
      %v257 = vld [vmem:[%s29 + $0x388] sm:$0xff]
      %258 = vst [vmem:[%s30 + $0x388] sm:$0xff] %v257
      %v259 = vld [vmem:[%s29 + $0x390] sm:$0xff]
      %260 = vst [vmem:[%s30 + $0x390] sm:$0xff] %v259
      %v261 = vld [vmem:[%s29 + $0x398] sm:$0xff]
      %262 = vst [vmem:[%s30 + $0x398] sm:$0xff] %v261
      %v263 = vld [vmem:[%s29 + $0x3a0] sm:$0xff]
      %264 = vst [vmem:[%s30 + $0x3a0] sm:$0xff] %v263
      %v265 = vld [vmem:[%s29 + $0x3a8] sm:$0xff]
      %266 = vst [vmem:[%s30 + $0x3a8] sm:$0xff] %v265
      %v267 = vld [vmem:[%s29 + $0x3b0] sm:$0xff]
      %268 = vst [vmem:[%s30 + $0x3b0] sm:$0xff] %v267
      %v269 = vld [vmem:[%s29 + $0x3b8] sm:$0xff]
      %270 = vst [vmem:[%s30 + $0x3b8] sm:$0xff] %v269
      %v271 = vld [vmem:[%s29 + $0x3c0] sm:$0xff]
      %272 = vst [vmem:[%s30 + $0x3c0] sm:$0xff] %v271
      %v273 = vld [vmem:[%s29 + $0x3c8] sm:$0xff]
      %274 = vst [vmem:[%s30 + $0x3c8] sm:$0xff] %v273
      %v275 = vld [vmem:[%s29 + $0x3d0] sm:$0xff]
      %276 = vst [vmem:[%s30 + $0x3d0] sm:$0xff] %v275
      %v277 = vld [vmem:[%s29 + $0x3d8] sm:$0xff]
      %278 = vst [vmem:[%s30 + $0x3d8] sm:$0xff] %v277
      %v279 = vld [vmem:[%s29 + $0x3e0] sm:$0xff]
      %280 = vst [vmem:[%s30 + $0x3e0] sm:$0xff] %v279
      %v281 = vld [vmem:[%s29 + $0x3e8] sm:$0xff]
      %282 = vst [vmem:[%s30 + $0x3e8] sm:$0xff] %v281
      %v283 = vld [vmem:[%s29 + $0x3f0] sm:$0xff]
      %284 = vst [vmem:[%s30 + $0x3f0] sm:$0xff] %v283
      %v285 = vld [vmem:[%s29 + $0x3f8] sm:$0xff]
      %286 = vst [vmem:[%s30 + $0x3f8] sm:$0xff] %v285
      %v287 = vld [vmem:[%s29 + $0x400] sm:$0xff]
      %288 = vst [vmem:[%s30 + $0x400] sm:$0xff] %v287
      %v289 = vld [vmem:[%s29 + $0x408] sm:$0xff]
      %290 = vst [vmem:[%s30 + $0x408] sm:$0xff] %v289
      %v291 = vld [vmem:[%s29 + $0x410] sm:$0xff]
      %292 = vst [vmem:[%s30 + $0x410] sm:$0xff] %v291
      %v293 = vld [vmem:[%s29 + $0x418] sm:$0xff]
      %294 = vst [vmem:[%s30 + $0x418] sm:$0xff] %v293
      %v295 = vld [vmem:[%s29 + $0x420] sm:$0xff]
      %296 = vst [vmem:[%s30 + $0x420] sm:$0xff] %v295
      %v297 = vld [vmem:[%s29 + $0x428] sm:$0xff]
      %298 = vst [vmem:[%s30 + $0x428] sm:$0xff] %v297
      %v299 = vld [vmem:[%s29 + $0x430] sm:$0xff]
      %300 = vst [vmem:[%s30 + $0x430] sm:$0xff] %v299
      %v301 = vld [vmem:[%s29 + $0x438] sm:$0xff]
      %302 = vst [vmem:[%s30 + $0x438] sm:$0xff] %v301
      %v303 = vld [vmem:[%s29 + $0x440] sm:$0xff]
      %304 = vst [vmem:[%s30 + $0x440] sm:$0xff] %v303
      %v305 = vld [vmem:[%s29 + $0x448] sm:$0xff]
      %306 = vst [vmem:[%s30 + $0x448] sm:$0xff] %v305
      %v307 = vld [vmem:[%s29 + $0x450] sm:$0xff]
      %308 = vst [vmem:[%s30 + $0x450] sm:$0xff] %v307
      %v309 = vld [vmem:[%s29 + $0x458] sm:$0xff]
      %310 = vst [vmem:[%s30 + $0x458] sm:$0xff] %v309
      %v311 = vld [vmem:[%s29 + $0x460] sm:$0xff]
      %312 = vst [vmem:[%s30 + $0x460] sm:$0xff] %v311
      %v313 = vld [vmem:[%s29 + $0x468] sm:$0xff]
      %314 = vst [vmem:[%s30 + $0x468] sm:$0xff] %v313
      %v315 = vld [vmem:[%s29 + $0x470] sm:$0xff]
      %316 = vst [vmem:[%s30 + $0x470] sm:$0xff] %v315
      %v317 = vld [vmem:[%s29 + $0x478] sm:$0xff]
      %318 = vst [vmem:[%s30 + $0x478] sm:$0xff] %v317
      %v319 = vld [vmem:[%s29 + $0x480] sm:$0xff]
      %320 = vst [vmem:[%s30 + $0x480] sm:$0xff] %v319
      %v321 = vld [vmem:[%s29 + $0x488] sm:$0xff]
      %322 = vst [vmem:[%s30 + $0x488] sm:$0xff] %v321
      %v323 = vld [vmem:[%s29 + $0x490] sm:$0xff]
      %324 = vst [vmem:[%s30 + $0x490] sm:$0xff] %v323
      %v325 = vld [vmem:[%s29 + $0x498] sm:$0xff]
      %326 = vst [vmem:[%s30 + $0x498] sm:$0xff] %v325
      %v327 = vld [vmem:[%s29 + $0x4a0] sm:$0xff]
      %328 = vst [vmem:[%s30 + $0x4a0] sm:$0xff] %v327
      %v329 = vld [vmem:[%s29 + $0x4a8] sm:$0xff]
      %330 = vst [vmem:[%s30 + $0x4a8] sm:$0xff] %v329
      %v331 = vld [vmem:[%s29 + $0x4b0] sm:$0xff]
      %332 = vst [vmem:[%s30 + $0x4b0] sm:$0xff] %v331
      %v333 = vld [vmem:[%s29 + $0x4b8] sm:$0xff]
      %334 = vst [vmem:[%s30 + $0x4b8] sm:$0xff] %v333
      %v335 = vld [vmem:[%s29 + $0x4c0] sm:$0xff]
      %336 = vst [vmem:[%s30 + $0x4c0] sm:$0xff] %v335
      %v337 = vld [vmem:[%s29 + $0x4c8] sm:$0xff]
      %338 = vst [vmem:[%s30 + $0x4c8] sm:$0xff] %v337
      %v339 = vld [vmem:[%s29 + $0x4d0] sm:$0xff]
      %340 = vst [vmem:[%s30 + $0x4d0] sm:$0xff] %v339
      %v341 = vld [vmem:[%s29 + $0x4d8] sm:$0xff]
      %342 = vst [vmem:[%s30 + $0x4d8] sm:$0xff] %v341
      %v343 = vld [vmem:[%s29 + $0x4e0] sm:$0xff]
      %344 = vst [vmem:[%s30 + $0x4e0] sm:$0xff] %v343
      %v345 = vld [vmem:[%s29 + $0x4e8] sm:$0xff]
      %346 = vst [vmem:[%s30 + $0x4e8] sm:$0xff] %v345
      %v347 = vld [vmem:[%s29 + $0x4f0] sm:$0xff]
      %348 = vst [vmem:[%s30 + $0x4f0] sm:$0xff] %v347
      %v349 = vld [vmem:[%s29 + $0x4f8] sm:$0xff]
      %350 = vst [vmem:[%s30 + $0x4f8] sm:$0xff] %v349
      %v351 = vld [vmem:[%s29 + $0x500] sm:$0xff]
      %352 = vst [vmem:[%s30 + $0x500] sm:$0xff] %v351
      %v353 = vld [vmem:[%s29 + $0x508] sm:$0xff]
      %354 = vst [vmem:[%s30 + $0x508] sm:$0xff] %v353
      %v355 = vld [vmem:[%s29 + $0x510] sm:$0xff]
      %356 = vst [vmem:[%s30 + $0x510] sm:$0xff] %v355
      %v357 = vld [vmem:[%s29 + $0x518] sm:$0xff]
      %358 = vst [vmem:[%s30 + $0x518] sm:$0xff] %v357
      %v359 = vld [vmem:[%s29 + $0x520] sm:$0xff]
      %360 = vst [vmem:[%s30 + $0x520] sm:$0xff] %v359
      %v361 = vld [vmem:[%s29 + $0x528] sm:$0xff]
      %362 = vst [vmem:[%s30 + $0x528] sm:$0xff] %v361
      %v363 = vld [vmem:[%s29 + $0x530] sm:$0xff]
      %364 = vst [vmem:[%s30 + $0x530] sm:$0xff] %v363
      %v365 = vld [vmem:[%s29 + $0x538] sm:$0xff]
      %366 = vst [vmem:[%s30 + $0x538] sm:$0xff] %v365
      %v367 = vld [vmem:[%s29 + $0x540] sm:$0xff]
      %368 = vst [vmem:[%s30 + $0x540] sm:$0xff] %v367
      %v369 = vld [vmem:[%s29 + $0x548] sm:$0xff]
      %370 = vst [vmem:[%s30 + $0x548] sm:$0xff] %v369
      %v371 = vld [vmem:[%s29 + $0x550] sm:$0xff]
      %372 = vst [vmem:[%s30 + $0x550] sm:$0xff] %v371
      %v373 = vld [vmem:[%s29 + $0x558] sm:$0xff]
      %374 = vst [vmem:[%s30 + $0x558] sm:$0xff] %v373
      %v375 = vld [vmem:[%s29 + $0x560] sm:$0xff]
      %376 = vst [vmem:[%s30 + $0x560] sm:$0xff] %v375
      %v377 = vld [vmem:[%s29 + $0x568] sm:$0xff]
      %378 = vst [vmem:[%s30 + $0x568] sm:$0xff] %v377
      %v379 = vld [vmem:[%s29 + $0x570] sm:$0xff]
      %380 = vst [vmem:[%s30 + $0x570] sm:$0xff] %v379
      %v381 = vld [vmem:[%s29 + $0x578] sm:$0xff]
      %382 = vst [vmem:[%s30 + $0x578] sm:$0xff] %v381
      %v383 = vld [vmem:[%s29 + $0x580] sm:$0xff]
      %384 = vst [vmem:[%s30 + $0x580] sm:$0xff] %v383
      %v385 = vld [vmem:[%s29 + $0x588] sm:$0xff]
      %386 = vst [vmem:[%s30 + $0x588] sm:$0xff] %v385
      %v387 = vld [vmem:[%s29 + $0x590] sm:$0xff]
      %388 = vst [vmem:[%s30 + $0x590] sm:$0xff] %v387
      %v389 = vld [vmem:[%s29 + $0x598] sm:$0xff]
      %390 = vst [vmem:[%s30 + $0x598] sm:$0xff] %v389
      %v391 = vld [vmem:[%s29 + $0x5a0] sm:$0xff]
      %392 = vst [vmem:[%s30 + $0x5a0] sm:$0xff] %v391
      %v393 = vld [vmem:[%s29 + $0x5a8] sm:$0xff]
      %394 = vst [vmem:[%s30 + $0x5a8] sm:$0xff] %v393
      %v395 = vld [vmem:[%s29 + $0x5b0] sm:$0xff]
      %396 = vst [vmem:[%s30 + $0x5b0] sm:$0xff] %v395
      %v397 = vld [vmem:[%s29 + $0x5b8] sm:$0xff]
      %398 = vst [vmem:[%s30 + $0x5b8] sm:$0xff] %v397
      %v399 = vld [vmem:[%s29 + $0x5c0] sm:$0xff]
      %400 = vst [vmem:[%s30 + $0x5c0] sm:$0xff] %v399
      %v401 = vld [vmem:[%s29 + $0x5c8] sm:$0xff]
      %402 = vst [vmem:[%s30 + $0x5c8] sm:$0xff] %v401
      %v403 = vld [vmem:[%s29 + $0x5d0] sm:$0xff]
      %404 = vst [vmem:[%s30 + $0x5d0] sm:$0xff] %v403
      %v405 = vld [vmem:[%s29 + $0x5d8] sm:$0xff]
      %406 = vst [vmem:[%s30 + $0x5d8] sm:$0xff] %v405
      %v407 = vld [vmem:[%s29 + $0x5e0] sm:$0xff]
      %408 = vst [vmem:[%s30 + $0x5e0] sm:$0xff] %v407
      %v409 = vld [vmem:[%s29 + $0x5e8] sm:$0xff]
      %410 = vst [vmem:[%s30 + $0x5e8] sm:$0xff] %v409
      %v411 = vld [vmem:[%s29 + $0x5f0] sm:$0xff]
      %412 = vst [vmem:[%s30 + $0x5f0] sm:$0xff] %v411
      %v413 = vld [vmem:[%s29 + $0x5f8] sm:$0xff]
      %414 = vst [vmem:[%s30 + $0x5f8] sm:$0xff] %v413
      %v415 = vld [vmem:[%s29 + $0x600] sm:$0xff]
      %416 = vst [vmem:[%s30 + $0x600] sm:$0xff] %v415
      %v417 = vld [vmem:[%s29 + $0x608] sm:$0xff]
      %418 = vst [vmem:[%s30 + $0x608] sm:$0xff] %v417
      %v419 = vld [vmem:[%s29 + $0x610] sm:$0xff]
      %420 = vst [vmem:[%s30 + $0x610] sm:$0xff] %v419
      %v421 = vld [vmem:[%s29 + $0x618] sm:$0xff]
      %422 = vst [vmem:[%s30 + $0x618] sm:$0xff] %v421
      %v423 = vld [vmem:[%s29 + $0x620] sm:$0xff]
      %424 = vst [vmem:[%s30 + $0x620] sm:$0xff] %v423
      %v425 = vld [vmem:[%s29 + $0x628] sm:$0xff]
      %426 = vst [vmem:[%s30 + $0x628] sm:$0xff] %v425
      %v427 = vld [vmem:[%s29 + $0x630] sm:$0xff]
      %428 = vst [vmem:[%s30 + $0x630] sm:$0xff] %v427
      %v429 = vld [vmem:[%s29 + $0x638] sm:$0xff]
      %430 = vst [vmem:[%s30 + $0x638] sm:$0xff] %v429
      %v431 = vld [vmem:[%s29 + $0x640] sm:$0xff]
      %432 = vst [vmem:[%s30 + $0x640] sm:$0xff] %v431
      %v433 = vld [vmem:[%s29 + $0x648] sm:$0xff]
      %434 = vst [vmem:[%s30 + $0x648] sm:$0xff] %v433
      %v435 = vld [vmem:[%s29 + $0x650] sm:$0xff]
      %436 = vst [vmem:[%s30 + $0x650] sm:$0xff] %v435
      %v437 = vld [vmem:[%s29 + $0x658] sm:$0xff]
      %438 = vst [vmem:[%s30 + $0x658] sm:$0xff] %v437
      %v439 = vld [vmem:[%s29 + $0x660] sm:$0xff]
      %440 = vst [vmem:[%s30 + $0x660] sm:$0xff] %v439
      %v441 = vld [vmem:[%s29 + $0x668] sm:$0xff]
      %442 = vst [vmem:[%s30 + $0x668] sm:$0xff] %v441
      %v443 = vld [vmem:[%s29 + $0x670] sm:$0xff]
      %444 = vst [vmem:[%s30 + $0x670] sm:$0xff] %v443
      %v445 = vld [vmem:[%s29 + $0x678] sm:$0xff]
      %446 = vst [vmem:[%s30 + $0x678] sm:$0xff] %v445
      %v447 = vld [vmem:[%s29 + $0x680] sm:$0xff]
      %448 = vst [vmem:[%s30 + $0x680] sm:$0xff] %v447
      %v449 = vld [vmem:[%s29 + $0x688] sm:$0xff]
      %450 = vst [vmem:[%s30 + $0x688] sm:$0xff] %v449
      %v451 = vld [vmem:[%s29 + $0x690] sm:$0xff]
      %452 = vst [vmem:[%s30 + $0x690] sm:$0xff] %v451
      %v453 = vld [vmem:[%s29 + $0x698] sm:$0xff]
      %454 = vst [vmem:[%s30 + $0x698] sm:$0xff] %v453
      %v455 = vld [vmem:[%s29 + $0x6a0] sm:$0xff]
      %456 = vst [vmem:[%s30 + $0x6a0] sm:$0xff] %v455
      %v457 = vld [vmem:[%s29 + $0x6a8] sm:$0xff]
      %458 = vst [vmem:[%s30 + $0x6a8] sm:$0xff] %v457
      %v459 = vld [vmem:[%s29 + $0x6b0] sm:$0xff]
      %460 = vst [vmem:[%s30 + $0x6b0] sm:$0xff] %v459
      %v461 = vld [vmem:[%s29 + $0x6b8] sm:$0xff]
      %462 = vst [vmem:[%s30 + $0x6b8] sm:$0xff] %v461
      %v463 = vld [vmem:[%s29 + $0x6c0] sm:$0xff]
      %464 = vst [vmem:[%s30 + $0x6c0] sm:$0xff] %v463
      %v465 = vld [vmem:[%s29 + $0x6c8] sm:$0xff]
      %466 = vst [vmem:[%s30 + $0x6c8] sm:$0xff] %v465
      %v467 = vld [vmem:[%s29 + $0x6d0] sm:$0xff]
      %468 = vst [vmem:[%s30 + $0x6d0] sm:$0xff] %v467
      %v469 = vld [vmem:[%s29 + $0x6d8] sm:$0xff]
      %470 = vst [vmem:[%s30 + $0x6d8] sm:$0xff] %v469
      %v471 = vld [vmem:[%s29 + $0x6e0] sm:$0xff]
      %472 = vst [vmem:[%s30 + $0x6e0] sm:$0xff] %v471
      %v473 = vld [vmem:[%s29 + $0x6e8] sm:$0xff]
      %474 = vst [vmem:[%s30 + $0x6e8] sm:$0xff] %v473
      %v475 = vld [vmem:[%s29 + $0x6f0] sm:$0xff]
      %476 = vst [vmem:[%s30 + $0x6f0] sm:$0xff] %v475
      %v477 = vld [vmem:[%s29 + $0x6f8] sm:$0xff]
      %478 = vst [vmem:[%s30 + $0x6f8] sm:$0xff] %v477
      %v479 = vld [vmem:[%s29 + $0x700] sm:$0xff]
      %480 = vst [vmem:[%s30 + $0x700] sm:$0xff] %v479
      %v481 = vld [vmem:[%s29 + $0x708] sm:$0xff]
      %482 = vst [vmem:[%s30 + $0x708] sm:$0xff] %v481
      %v483 = vld [vmem:[%s29 + $0x710] sm:$0xff]
      %484 = vst [vmem:[%s30 + $0x710] sm:$0xff] %v483
      %v485 = vld [vmem:[%s29 + $0x718] sm:$0xff]
      %486 = vst [vmem:[%s30 + $0x718] sm:$0xff] %v485
      %v487 = vld [vmem:[%s29 + $0x720] sm:$0xff]
      %488 = vst [vmem:[%s30 + $0x720] sm:$0xff] %v487
      %v489 = vld [vmem:[%s29 + $0x728] sm:$0xff]
      %490 = vst [vmem:[%s30 + $0x728] sm:$0xff] %v489
      %v491 = vld [vmem:[%s29 + $0x730] sm:$0xff]
      %492 = vst [vmem:[%s30 + $0x730] sm:$0xff] %v491
      %v493 = vld [vmem:[%s29 + $0x738] sm:$0xff]
      %494 = vst [vmem:[%s30 + $0x738] sm:$0xff] %v493
      %v495 = vld [vmem:[%s29 + $0x740] sm:$0xff]
      %496 = vst [vmem:[%s30 + $0x740] sm:$0xff] %v495
      %v497 = vld [vmem:[%s29 + $0x748] sm:$0xff]
      %498 = vst [vmem:[%s30 + $0x748] sm:$0xff] %v497
      %v499 = vld [vmem:[%s29 + $0x750] sm:$0xff]
      %500 = vst [vmem:[%s30 + $0x750] sm:$0xff] %v499
      %v501 = vld [vmem:[%s29 + $0x758] sm:$0xff]
      %502 = vst [vmem:[%s30 + $0x758] sm:$0xff] %v501
      %v503 = vld [vmem:[%s29 + $0x760] sm:$0xff]
      %504 = vst [vmem:[%s30 + $0x760] sm:$0xff] %v503
      %v505 = vld [vmem:[%s29 + $0x768] sm:$0xff]
      %506 = vst [vmem:[%s30 + $0x768] sm:$0xff] %v505
      %v507 = vld [vmem:[%s29 + $0x770] sm:$0xff]
      %508 = vst [vmem:[%s30 + $0x770] sm:$0xff] %v507
      %v509 = vld [vmem:[%s29 + $0x778] sm:$0xff]
      %510 = vst [vmem:[%s30 + $0x778] sm:$0xff] %v509
      %v511 = vld [vmem:[%s29 + $0x780] sm:$0xff]
      %512 = vst [vmem:[%s30 + $0x780] sm:$0xff] %v511
      %v513 = vld [vmem:[%s29 + $0x788] sm:$0xff]
      %514 = vst [vmem:[%s30 + $0x788] sm:$0xff] %v513
      %v515 = vld [vmem:[%s29 + $0x790] sm:$0xff]
      %516 = vst [vmem:[%s30 + $0x790] sm:$0xff] %v515
      %v517 = vld [vmem:[%s29 + $0x798] sm:$0xff]
      %518 = vst [vmem:[%s30 + $0x798] sm:$0xff] %v517
      %v519 = vld [vmem:[%s29 + $0x7a0] sm:$0xff]
      %520 = vst [vmem:[%s30 + $0x7a0] sm:$0xff] %v519
      %v521 = vld [vmem:[%s29 + $0x7a8] sm:$0xff]
      %522 = vst [vmem:[%s30 + $0x7a8] sm:$0xff] %v521
      %v523 = vld [vmem:[%s29 + $0x7b0] sm:$0xff]
      %524 = vst [vmem:[%s30 + $0x7b0] sm:$0xff] %v523
      %v525 = vld [vmem:[%s29 + $0x7b8] sm:$0xff]
      %526 = vst [vmem:[%s30 + $0x7b8] sm:$0xff] %v525
      %v527 = vld [vmem:[%s29 + $0x7c0] sm:$0xff]
      %528 = vst [vmem:[%s30 + $0x7c0] sm:$0xff] %v527
      %v529 = vld [vmem:[%s29 + $0x7c8] sm:$0xff]
      %530 = vst [vmem:[%s30 + $0x7c8] sm:$0xff] %v529
      %v531 = vld [vmem:[%s29 + $0x7d0] sm:$0xff]
      %532 = vst [vmem:[%s30 + $0x7d0] sm:$0xff] %v531
      %v533 = vld [vmem:[%s29 + $0x7d8] sm:$0xff]
      %534 = vst [vmem:[%s30 + $0x7d8] sm:$0xff] %v533
      %v535 = vld [vmem:[%s29 + $0x7e0] sm:$0xff]
      %536 = vst [vmem:[%s30 + $0x7e0] sm:$0xff] %v535
      %v537 = vld [vmem:[%s29 + $0x7e8] sm:$0xff]
      %538 = vst [vmem:[%s30 + $0x7e8] sm:$0xff] %v537
      %v539 = vld [vmem:[%s29 + $0x7f0] sm:$0xff]
      %540 = vst [vmem:[%s30 + $0x7f0] sm:$0xff] %v539
      %v541 = vld [vmem:[%s29 + $0x7f8] sm:$0xff]
      %542 = vst [vmem:[%s30 + $0x7f8] sm:$0xff] %v541
      %v543 = vld [vmem:[%s29 + $0x800] sm:$0xff]
      %544 = vst [vmem:[%s30 + $0x800] sm:$0xff] %v543
      %v545 = vld [vmem:[%s29 + $0x808] sm:$0xff]
      %546 = vst [vmem:[%s30 + $0x808] sm:$0xff] %v545
      %v547 = vld [vmem:[%s29 + $0x810] sm:$0xff]
      %548 = vst [vmem:[%s30 + $0x810] sm:$0xff] %v547
      %v549 = vld [vmem:[%s29 + $0x818] sm:$0xff]
      %550 = vst [vmem:[%s30 + $0x818] sm:$0xff] %v549
      %v551 = vld [vmem:[%s29 + $0x820] sm:$0xff]
      %552 = vst [vmem:[%s30 + $0x820] sm:$0xff] %v551
      %v553 = vld [vmem:[%s29 + $0x828] sm:$0xff]
      %554 = vst [vmem:[%s30 + $0x828] sm:$0xff] %v553
      %v555 = vld [vmem:[%s29 + $0x830] sm:$0xff]
      %556 = vst [vmem:[%s30 + $0x830] sm:$0xff] %v555
      %v557 = vld [vmem:[%s29 + $0x838] sm:$0xff]
      %558 = vst [vmem:[%s30 + $0x838] sm:$0xff] %v557
      %v559 = vld [vmem:[%s29 + $0x840] sm:$0xff]
      %560 = vst [vmem:[%s30 + $0x840] sm:$0xff] %v559
      %v561 = vld [vmem:[%s29 + $0x848] sm:$0xff]
      %562 = vst [vmem:[%s30 + $0x848] sm:$0xff] %v561
      %v563 = vld [vmem:[%s29 + $0x850] sm:$0xff]
      %564 = vst [vmem:[%s30 + $0x850] sm:$0xff] %v563
      %v565 = vld [vmem:[%s29 + $0x858] sm:$0xff]
      %566 = vst [vmem:[%s30 + $0x858] sm:$0xff] %v565
      %v567 = vld [vmem:[%s29 + $0x860] sm:$0xff]
      %568 = vst [vmem:[%s30 + $0x860] sm:$0xff] %v567
      %v569 = vld [vmem:[%s29 + $0x868] sm:$0xff]
      %570 = vst [vmem:[%s30 + $0x868] sm:$0xff] %v569
      %v571 = vld [vmem:[%s29 + $0x870] sm:$0xff]
      %572 = vst [vmem:[%s30 + $0x870] sm:$0xff] %v571
      %v573 = vld [vmem:[%s29 + $0x878] sm:$0xff]
      %574 = vst [vmem:[%s30 + $0x878] sm:$0xff] %v573
      %v575 = vld [vmem:[%s29 + $0x880] sm:$0xff]
      %576 = vst [vmem:[%s30 + $0x880] sm:$0xff] %v575
      %v577 = vld [vmem:[%s29 + $0x888] sm:$0xff]
      %578 = vst [vmem:[%s30 + $0x888] sm:$0xff] %v577
      %v579 = vld [vmem:[%s29 + $0x890] sm:$0xff]
      %580 = vst [vmem:[%s30 + $0x890] sm:$0xff] %v579
      %v581 = vld [vmem:[%s29 + $0x898] sm:$0xff]
      %582 = vst [vmem:[%s30 + $0x898] sm:$0xff] %v581
    $region30: #{dti_forward.1} parent=24 // loop_footer
      %s28 = sadd.s32 1, %s24
    $region31: #{dti_forward.1} parent=24 // loop_footer_branch
      %23 = sbr.rel target = $region27
    $region32: #{dti_forward.1} parent=24 // loop_exit
      _
  $region25: #{dti_forward.1} parent=0 // pred_fallthru
    _
  // Predicated region
  $region33: #{dti_forward.1} parent=0 // pred_check
    _
  $region34: #{dti_forward.1} parent=0 // pred_check_branch
    %584 = sbr.rel target = $region36
  $region35: #{dti_forward.1} parent=0 // pred_region
    _
  $region36: #{dti_forward.1} parent=0 // pred_fallthru
    _
  // Predicated region
  $region37: #{dti_forward.1} parent=0 // pred_check
    _
  $region38: #{dti_forward.1} parent=0 // pred_check_branch
    %587 = sbr.rel (0) target = $region40
  $region39: #{dti_forward.1} parent=0 // pred_region
    %588 = vsyncadd [#allocation4], 35328
  $region40: #{dti_forward.1} parent=0 // pred_fallthru
    _
  %v589 = vld [vmem:[%s2] sm:$0xff]
  %v590 = vld [vmem:[%s2 + $0x8] sm:$0xff]
  %v591 = vld [vmem:[%s2 + $0x10] sm:$0xff]
  %v592 = vld [vmem:[%s2 + $0x18] sm:$0xff]
  %v593 = vld [vmem:[%s2 + $0x20] sm:$0xff]
  %v594 = vld [vmem:[%s2 + $0x28] sm:$0xff]
  %v595 = vld [vmem:[%s2 + $0x30] sm:$0xff]
  %v596 = vld [vmem:[%s2 + $0x38] sm:$0xff]
  %v597 = vld [vmem:[%s2 + $0x40] sm:$0xff]
  %v598 = vld [vmem:[%s2 + $0x48] sm:$0xff]
  %v599 = vld [vmem:[%s2 + $0x50] sm:$0xff]
  %v600 = vld [vmem:[%s2 + $0x58] sm:$0xff]
  %v601 = vld [vmem:[%s2 + $0x60] sm:$0xff]
  %v602 = vld [vmem:[%s2 + $0x68] sm:$0xff]
  %v603 = vld [vmem:[%s2 + $0x70] sm:$0xff]
  %v604 = vld [vmem:[%s2 + $0x78] sm:$0xff]
  %v605 = vld [vmem:[%s2 + $0x80] sm:$0xff]
  %v606 = vld [vmem:[%s2 + $0x88] sm:$0xff]
  %v607 = vld [vmem:[%s2 + $0x90] sm:$0xff]
  %v608 = vld [vmem:[%s2 + $0x98] sm:$0xff]
  %v609 = vld [vmem:[%s2 + $0xa0] sm:$0xff]
  %v610 = vld [vmem:[%s2 + $0xa8] sm:$0xff]
  %v611 = vld [vmem:[%s2 + $0xb0] sm:$0xff]
  %v612 = vld [vmem:[%s2 + $0xb8] sm:$0xff]
  %v613 = vld [vmem:[%s2 + $0xc0] sm:$0xff]
  %v614 = vld [vmem:[%s2 + $0xc8] sm:$0xff]
  %v615 = vld [vmem:[%s2 + $0xd0] sm:$0xff]
  %v616 = vld [vmem:[%s2 + $0xd8] sm:$0xff]
  %v617 = vld [vmem:[%s2 + $0xe0] sm:$0xff]
  %v618 = vld [vmem:[%s2 + $0xe8] sm:$0xff]
  %v619 = vld [vmem:[%s2 + $0xf0] sm:$0xff]
  %v620 = vld [vmem:[%s2 + $0xf8] sm:$0xff]
  %v621 = vld [vmem:[%s2 + $0x100] sm:$0xff]
  %v622 = vld [vmem:[%s2 + $0x108] sm:$0xff]
  %v623 = vld [vmem:[%s2 + $0x110] sm:$0xff]
  %v624 = vld [vmem:[%s2 + $0x118] sm:$0xff]
  %v625 = vld [vmem:[%s2 + $0x120] sm:$0xff]
  %v626 = vld [vmem:[%s2 + $0x128] sm:$0xff]
  %v627 = vld [vmem:[%s2 + $0x130] sm:$0xff]
  %v628 = vld [vmem:[%s2 + $0x138] sm:$0xff]
  %v629 = vld [vmem:[%s3] ss:$2 sm:$0x3]
  %s630 = scalar_lea.vmem %s3, 1
  %v631 = vld [vmem:[%s630] ss:$2 sm:$0x3]
  %v632 = vld [vmem:[%s1] sm:$0xff]
  %v633 = vld [vmem:[%s0] sm:$0xff]
  %v634 = vld [vmem:[%s0 + $0x8] sm:$0xff]
  %v635 = vld [vmem:[%s0 + $0x10] sm:$0xff]
  %v636 = vld [vmem:[%s0 + $0x18] sm:$0xff]
  %v637 = vld [vmem:[%s0 + $0x20] sm:$0xff]
  %v638 = vld [vmem:[%s0 + $0x28] sm:$0xff]
  %v639 = vld [vmem:[%s0 + $0x30] sm:$0xff]
  %v640 = vld [vmem:[%s0 + $0x38] sm:$0xff]
  %v641 = vld [vmem:[%s0 + $0x40] sm:$0xff]
  %v642 = vld [vmem:[%s0 + $0x48] sm:$0xff]
  %v644 = vperm.slane %v629, 0
  %v645 = vperm.slane %v629, 1
  %vm648 = vcmask 326656
  %v650 = vsel %vm648, %v633, 0
  %v653 = vsel %vm648, %v634, 0
  %v656 = vsel %vm648, %v635, 0
  %v659 = vsel %vm648, %v636, 0
  %v662 = vsel %vm648, %v637, 0
  %v665 = vsel %vm648, %v638, 0
  %v668 = vsel %vm648, %v639, 0
  %v671 = vsel %vm648, %v640, 0
  %v674 = vsel %vm648, %v641, 0
  %v677 = vsel %vm648, %v642, 0
  %679 = vmatpush.msra.mxu0 0.0
  %680 = vmatpush.msra.mxu0 0.0
  %681 = vmatpush.msra.mxu0 0.0
  %682 = vmatpush.msra.mxu0 0.0
  %683 = vmatpush.msra.mxu0 0.0
  %684 = vmatpush.msra.mxu0 0.0
  %685 = vmatpush.msra.mxu0 0.0
  %686 = vmatpush.msra.mxu0 0.0
  %687 = vmatpush.msra.mxu0 0.0
  %688 = vmatpush.msra.mxu0 0.0
  %689 = vmatpush.msra.mxu0 0.0
  %690 = vmatpush.msra.mxu0 %v597
  %691 = vmatpush.msra.mxu0 %v595
  %692 = vmatpush.msra.mxu0 %v593
  %693 = vmatpush.msra.mxu0 %v591
  %694 = vmatpush.msra.mxu0 %v589
  %695 = vmatmul.f32.gmra.mxu0 %v650
  %v696 = vpop.f32.mrf.mxu0
  %v697 = vadd.f32 %v644, %v696
  %698 = vmatmul.f32.gmra.mxu0 %v653
  %v699 = vpop.f32.mrf.mxu0
  %v700 = vadd.f32 %v644, %v699
  %701 = vmatmul.f32.gmra.mxu0 %v656
  %v702 = vpop.f32.mrf.mxu0
  %v703 = vadd.f32 %v644, %v702
  %704 = vmatmul.f32.gmra.mxu0 %v659
  %v705 = vpop.f32.mrf.mxu0
  %v706 = vadd.f32 %v644, %v705
  %707 = vmatmul.f32.gmra.mxu0 %v662
  %v708 = vpop.f32.mrf.mxu0
  %v709 = vadd.f32 %v644, %v708
  %710 = vmatmul.f32.gmra.mxu0 %v665
  %v711 = vpop.f32.mrf.mxu0
  %v712 = vadd.f32 %v644, %v711
  %713 = vmatmul.f32.gmra.mxu0 %v668
  %v714 = vpop.f32.mrf.mxu0
  %v715 = vadd.f32 %v644, %v714
  %716 = vmatmul.f32.gmra.mxu0 %v671
  %v717 = vpop.f32.mrf.mxu0
  %v718 = vadd.f32 %v644, %v717
  %719 = vmatmul.f32.gmra.mxu0 %v674
  %v720 = vpop.f32.mrf.mxu0
  %v721 = vadd.f32 %v644, %v720
  %722 = vmatmul.f32.gmra.mxu0 %v677
  %v723 = vpop.f32.mrf.mxu0
  %v724 = vadd.f32 %v644, %v723
  %725 = vdwg.mxu0
  %726 = vmatpush.msra.mxu0 0.0
  %727 = vmatpush.msra.mxu0 0.0
  %728 = vmatpush.msra.mxu0 0.0
  %729 = vmatpush.msra.mxu0 0.0
  %730 = vmatpush.msra.mxu0 0.0
  %731 = vmatpush.msra.mxu0 0.0
  %732 = vmatpush.msra.mxu0 0.0
  %733 = vmatpush.msra.mxu0 0.0
  %734 = vmatpush.msra.mxu0 0.0
  %735 = vmatpush.msra.mxu0 0.0
  %736 = vmatpush.msra.mxu0 0.0
  %737 = vmatpush.msra.mxu0 %v598
  %738 = vmatpush.msra.mxu0 %v596
  %739 = vmatpush.msra.mxu0 %v594
  %740 = vmatpush.msra.mxu0 %v592
  %741 = vmatpush.msra.mxu0 %v590
  %742 = vmatmul.f32.gmra.mxu0 %v650
  %v743 = vpop.f32.mrf.mxu0
  %v744 = vadd.f32 %v645, %v743
  %745 = vmatmul.f32.gmra.mxu0 %v653
  %v746 = vpop.f32.mrf.mxu0
  %v747 = vadd.f32 %v645, %v746
  %748 = vmatmul.f32.gmra.mxu0 %v656
  %v749 = vpop.f32.mrf.mxu0
  %v750 = vadd.f32 %v645, %v749
  %751 = vmatmul.f32.gmra.mxu0 %v659
  %v752 = vpop.f32.mrf.mxu0
  %v753 = vadd.f32 %v645, %v752
  %754 = vmatmul.f32.gmra.mxu0 %v662
  %v755 = vpop.f32.mrf.mxu0
  %v756 = vadd.f32 %v645, %v755
  %757 = vmatmul.f32.gmra.mxu0 %v665
  %v758 = vpop.f32.mrf.mxu0
  %v759 = vadd.f32 %v645, %v758
  %760 = vmatmul.f32.gmra.mxu0 %v668
  %v761 = vpop.f32.mrf.mxu0
  %v762 = vadd.f32 %v645, %v761
  %763 = vmatmul.f32.gmra.mxu0 %v671
  %v764 = vpop.f32.mrf.mxu0
  %v765 = vadd.f32 %v645, %v764
  %766 = vmatmul.f32.gmra.mxu0 %v674
  %v767 = vpop.f32.mrf.mxu0
  %v768 = vadd.f32 %v645, %v767
  %769 = vmatmul.f32.gmra.mxu0 %v677
  %v770 = vpop.f32.mrf.mxu0
  %v771 = vadd.f32 %v645, %v770
  %772 = vdwg.mxu0
  %773 = vst [vmem:[#allocation2] sm:$0xff] %v697
  %vm774 = vcmask 261120
  %775 = vst.msk [vmem:[#allocation2 + $0x8] sm:$0xff] %vm774, %v744
  %776 = vst [vmem:[#allocation2 + $0x10] sm:$0xff] %v700
  %777 = vst.msk [vmem:[#allocation2 + $0x18] sm:$0xff] %vm774, %v747
  %778 = vst [vmem:[#allocation2 + $0x20] sm:$0xff] %v703
  %779 = vst.msk [vmem:[#allocation2 + $0x28] sm:$0xff] %vm774, %v750
  %780 = vst [vmem:[#allocation2 + $0x30] sm:$0xff] %v706
  %781 = vst.msk [vmem:[#allocation2 + $0x38] sm:$0xff] %vm774, %v753
  %782 = vst [vmem:[#allocation2 + $0x40] sm:$0xff] %v709
  %783 = vst.msk [vmem:[#allocation2 + $0x48] sm:$0xff] %vm774, %v756
  %784 = vst [vmem:[#allocation2 + $0x50] sm:$0xff] %v712
  %785 = vst.msk [vmem:[#allocation2 + $0x58] sm:$0xff] %vm774, %v759
  %786 = vst [vmem:[#allocation2 + $0x60] sm:$0xff] %v715
  %787 = vst.msk [vmem:[#allocation2 + $0x68] sm:$0xff] %vm774, %v762
  %788 = vst [vmem:[#allocation2 + $0x70] sm:$0xff] %v718
  %789 = vst.msk [vmem:[#allocation2 + $0x78] sm:$0xff] %vm774, %v765
  %790 = vst [vmem:[#allocation2 + $0x80] sm:$0xff] %v721
  %791 = vst.msk [vmem:[#allocation2 + $0x88] sm:$0xff] %vm774, %v768
  %792 = vst [vmem:[#allocation2 + $0x90] sm:$0xff] %v724
  %793 = vst.msk [vmem:[#allocation2 + $0x98] sm:$0xff] %vm774, %v771
  %v794 = vld [vmem:[#allocation2] sm:$0xff]
  %v795 = vld [vmem:[#allocation2 + $0x8] sm:$0xff]
  %v797 = vsel %vm648, 0.0, 0
  %799 = vmatpush.msra.mxu0 0.0
  %800 = vmatpush.msra.mxu0 0.0
  %801 = vmatpush.msra.mxu0 0.0
  %802 = vmatpush.msra.mxu0 0.0
  %803 = vmatpush.msra.mxu0 0.0
  %804 = vmatpush.msra.mxu0 0.0
  %805 = vmatpush.msra.mxu0 0.0
  %806 = vmatpush.msra.mxu0 0.0
  %807 = vmatpush.msra.mxu0 0.0
  %808 = vmatpush.msra.mxu0 0.0
  %809 = vmatpush.msra.mxu0 0.0
  %810 = vmatpush.msra.mxu0 %v607
  %811 = vmatpush.msra.mxu0 %v605
  %812 = vmatpush.msra.mxu0 %v603
  %813 = vmatpush.msra.mxu0 %v601
  %814 = vmatpush.msra.mxu0 %v599
  %815 = vmatmul.f32.gmra.mxu0 %v797
  %v816 = vpop.f32.mrf.mxu0
  %v817 = vadd.f32 0.0, %v816
  %818 = vdwg.mxu0
  %819 = vmatpush.msra.mxu0 0.0
  %820 = vmatpush.msra.mxu0 0.0
  %821 = vmatpush.msra.mxu0 0.0
  %822 = vmatpush.msra.mxu0 0.0
  %823 = vmatpush.msra.mxu0 0.0
  %824 = vmatpush.msra.mxu0 0.0
  %825 = vmatpush.msra.mxu0 0.0
  %826 = vmatpush.msra.mxu0 0.0
  %827 = vmatpush.msra.mxu0 0.0
  %828 = vmatpush.msra.mxu0 0.0
  %829 = vmatpush.msra.mxu0 0.0
  %830 = vmatpush.msra.mxu0 %v608
  %831 = vmatpush.msra.mxu0 %v606
  %832 = vmatpush.msra.mxu0 %v604
  %833 = vmatpush.msra.mxu0 %v602
  %834 = vmatpush.msra.mxu0 %v600
  %835 = vmatmul.f32.gmra.mxu0 %v797
  %v836 = vpop.f32.mrf.mxu0
  %v837 = vadd.f32 0.0, %v836
  %838 = vdwg.mxu0
  %v839 = vadd.f32 %v794, %v817
  %v840 = vadd.f32 %v795, %v837
  %v841 = vxor.u32 %v839, 2147483648
  %v842 = vxor.u32 %v840, 2147483648
  %v843 = vmul.f32 %v841, 1.442695
  %v844 = vpow.pop %v843
  %v845 = vmul.f32 %v842, 1.442695
  %v846 = vpow.pop %v845
  %v847 = vadd.f32 %v844, 1.0
  %v848 = vadd.f32 %v846, 1.0
  %v849 = vrcp.pop %v847
  %v850 = vmul.f32 %v847, %v849
  %v851 = vsub.f32 1.0, %v850
  %v852 = vmul.f32 %v849, %v851
  %v853 = vadd.f32 %v849, %v852
  %vm854 = vweird.f32 %v847
  %vm855 = vweird.f32 %v849
  %vm856 = vmor %vm854, %vm855
  %v857 = vsel %vm856, %v849, %v853
  %v858 = vand.u32 2147483647, %v847
  %vm859 = vcmp.eq.f32.partialorder %v858, 8.507059e+37
  %v860 = vand.u32 %v847, 2147483648
  %v861 = vor.u32 1.1754944e-38, %v860
  %v862 = vsel %vm859, %v861, %v857
  %v863 = vmul.f32 1.0, %v862
  %v864 = vrcp.pop %v848
  %v865 = vmul.f32 %v848, %v864
  %v866 = vsub.f32 1.0, %v865
  %v867 = vmul.f32 %v864, %v866
  %v868 = vadd.f32 %v864, %v867
  %vm869 = vweird.f32 %v848
  %vm870 = vweird.f32 %v864
  %vm871 = vmor %vm869, %vm870
  %v872 = vsel %vm871, %v864, %v868
  %v873 = vand.u32 2147483647, %v848
  %vm874 = vcmp.eq.f32.partialorder %v873, 8.507059e+37
  %v875 = vand.u32 %v848, 2147483648
  %v876 = vor.u32 1.1754944e-38, %v875
  %v877 = vsel %vm874, %v876, %v872
  %v878 = vmul.f32 1.0, %v877
  %v879 = vtanh.pop %v839
  %v880 = vmul.f32 %v863, 0.0
  %882 = vrot.lane.b32.xlu0 %v879, 48
  %v883 = vpop.permute.xlu0 %882
  %v885 = vmul.f32 %v863, %v883
  %887 = vrot.lane.b32.xlu0 %v885, 40
  %v888 = vpop.permute.xlu0 %887
  %v890 = vadd.f32 %v880, %v888
  %v891 = vtanh.pop %v890
  %893 = vrot.lane.b32.xlu0 %v891, 80
  %v894 = vpop.permute.xlu0 %893
  %v896 = vmul.f32 %v863, %v894
  %v897 = vmul.f32 %v878, %v894
  %900 = vrot.lane.b32.xlu0 %v896, 8
  %v901 = vpop.permute.xlu0 %900
  %902 = vrot.lane.b32.xlu0 %v897, 8
  %v903 = vpop.permute.xlu0 %902
  %vm904 = vcmask 64512
  %v905 = vsel %vm904, %v901, %v903
  %v907 = vsel %vm648, %v905, 0.0
  %v909 = vperm.slane %v631, 0
  %v910 = vperm.slane %v631, 1
  %vm913 = vcmask 654336
  %v915 = vsel %vm913, %v907, 0
  %917 = vmatpush.msra.mxu0 0.0
  %918 = vmatpush.msra.mxu0 0.0
  %919 = vmatpush.msra.mxu0 0.0
  %920 = vmatpush.msra.mxu0 0.0
  %921 = vmatpush.msra.mxu0 0.0
  %922 = vmatpush.msra.mxu0 0.0
  %923 = vmatpush.msra.mxu0 %v627
  %924 = vmatpush.msra.mxu0 %v625
  %925 = vmatpush.msra.mxu0 %v623
  %926 = vmatpush.msra.mxu0 %v621
  %927 = vmatpush.msra.mxu0 %v619
  %928 = vmatpush.msra.mxu0 %v617
  %929 = vmatpush.msra.mxu0 %v615
  %930 = vmatpush.msra.mxu0 %v613
  %931 = vmatpush.msra.mxu0 %v611
  %932 = vmatpush.msra.mxu0 %v609
  %933 = vmatmul.f32.gmra.mxu0 %v915
  %v934 = vpop.f32.mrf.mxu0
  %v935 = vadd.f32 %v909, %v934
  %936 = vdwg.mxu0
  %937 = vmatpush.msra.mxu0 0.0
  %938 = vmatpush.msra.mxu0 0.0
  %939 = vmatpush.msra.mxu0 0.0
  %940 = vmatpush.msra.mxu0 0.0
  %941 = vmatpush.msra.mxu0 0.0
  %942 = vmatpush.msra.mxu0 0.0
  %943 = vmatpush.msra.mxu0 %v628
  %944 = vmatpush.msra.mxu0 %v626
  %945 = vmatpush.msra.mxu0 %v624
  %946 = vmatpush.msra.mxu0 %v622
  %947 = vmatpush.msra.mxu0 %v620
  %948 = vmatpush.msra.mxu0 %v618
  %949 = vmatpush.msra.mxu0 %v616
  %950 = vmatpush.msra.mxu0 %v614
  %951 = vmatpush.msra.mxu0 %v612
  %952 = vmatpush.msra.mxu0 %v610
  %953 = vmatmul.f32.gmra.mxu0 %v915
  %v954 = vpop.f32.mrf.mxu0
  %v955 = vadd.f32 %v910, %v954
  %956 = vdwg.mxu0
  %v957 = vxor.u32 %v935, 2147483648
  %v958 = vxor.u32 %v955, 2147483648
  %v959 = vmul.f32 %v957, 1.442695
  %v960 = vpow.pop %v959
  %v961 = vmul.f32 %v958, 1.442695
  %v962 = vpow.pop %v961
  %v963 = vadd.f32 %v960, 1.0
  %v964 = vadd.f32 %v962, 1.0
  %v965 = vrcp.pop %v963
  %v966 = vmul.f32 %v963, %v965
  %v967 = vsub.f32 1.0, %v966
  %v968 = vmul.f32 %v965, %v967
  %v969 = vadd.f32 %v965, %v968
  %vm970 = vweird.f32 %v963
  %vm971 = vweird.f32 %v965
  %vm972 = vmor %vm970, %vm971
  %v973 = vsel %vm972, %v965, %v969
  %v974 = vand.u32 2147483647, %v963
  %vm975 = vcmp.eq.f32.partialorder %v974, 8.507059e+37
  %v976 = vand.u32 %v963, 2147483648
  %v977 = vor.u32 1.1754944e-38, %v976
  %v978 = vsel %vm975, %v977, %v973
  %v979 = vmul.f32 1.0, %v978
  %v980 = vrcp.pop %v964
  %v981 = vmul.f32 %v964, %v980
  %v982 = vsub.f32 1.0, %v981
  %v983 = vmul.f32 %v980, %v982
  %v984 = vadd.f32 %v980, %v983
  %vm985 = vweird.f32 %v964
  %vm986 = vweird.f32 %v980
  %vm987 = vmor %vm985, %vm986
  %v988 = vsel %vm987, %v980, %v984
  %v989 = vand.u32 2147483647, %v964
  %vm990 = vcmp.eq.f32.partialorder %v989, 8.507059e+37
  %v991 = vand.u32 %v964, 2147483648
  %v992 = vor.u32 1.1754944e-38, %v991
  %v993 = vsel %vm990, %v992, %v988
  %v994 = vmul.f32 1.0, %v993
  %v995 = vtanh.pop %v935
  %v996 = vmul.f32 %v979, 0.0
  %998 = vrot.lane.b32.xlu0 %v995, 48
  %v999 = vpop.permute.xlu0 %998
  %v1001 = vmul.f32 %v979, %v999
  %1003 = vrot.lane.b32.xlu0 %v1001, 40
  %v1004 = vpop.permute.xlu0 %1003
  %v1006 = vadd.f32 %v996, %v1004
  %v1007 = vtanh.pop %v1006
  %1009 = vrot.lane.b32.xlu0 %v1007, 80
  %v1010 = vpop.permute.xlu0 %1009
  %v1012 = vmul.f32 %v979, %v1010
  %v1013 = vmul.f32 %v994, %v1010
  %vm1014 = vcmp.gt.s32.totalorder %v632, 0
  %1017 = vrot.lane.b32.xlu0 %v1012, 8
  %v1018 = vpop.permute.xlu0 %1017
  %1019 = vrot.lane.b32.xlu0 %v1013, 8
  %v1020 = vpop.permute.xlu0 %1019
  %v1021 = vsel %vm904, %v1018, %v1020
  %v1023 = vsel %vm1014, %v1021, 0.0
  %1025 = vrot.lane.b32.xlu0 %v1006, 88
  %v1026 = vpop.permute.xlu0 %1025
  %v1028 = vsel %vm1014, %v1026, 0.0
  %v1029 = vld [vmem:[#allocation2 + $0x10] sm:$0xff]
  %v1030 = vld [vmem:[#allocation2 + $0x18] sm:$0xff]
  %v1031 = vsel %vm648, %v905, 0
  %1033 = vmatpush.msra.mxu0 0.0
  %1034 = vmatpush.msra.mxu0 0.0
  %1035 = vmatpush.msra.mxu0 0.0
  %1036 = vmatpush.msra.mxu0 0.0
  %1037 = vmatpush.msra.mxu0 0.0
  %1038 = vmatpush.msra.mxu0 0.0
  %1039 = vmatpush.msra.mxu0 0.0
  %1040 = vmatpush.msra.mxu0 0.0
  %1041 = vmatpush.msra.mxu0 0.0
  %1042 = vmatpush.msra.mxu0 0.0
  %1043 = vmatpush.msra.mxu0 0.0
  %1044 = vmatpush.msra.mxu0 %v607
  %1045 = vmatpush.msra.mxu0 %v605
  %1046 = vmatpush.msra.mxu0 %v603
  %1047 = vmatpush.msra.mxu0 %v601
  %1048 = vmatpush.msra.mxu0 %v599
  %1049 = vmatmul.f32.gmra.mxu0 %v1031
  %v1050 = vpop.f32.mrf.mxu0
  %v1051 = vadd.f32 0.0, %v1050
  %1052 = vdwg.mxu0
  %1053 = vmatpush.msra.mxu0 0.0
  %1054 = vmatpush.msra.mxu0 0.0
  %1055 = vmatpush.msra.mxu0 0.0
  %1056 = vmatpush.msra.mxu0 0.0
  %1057 = vmatpush.msra.mxu0 0.0
  %1058 = vmatpush.msra.mxu0 0.0
  %1059 = vmatpush.msra.mxu0 0.0
  %1060 = vmatpush.msra.mxu0 0.0
  %1061 = vmatpush.msra.mxu0 0.0
  %1062 = vmatpush.msra.mxu0 0.0
  %1063 = vmatpush.msra.mxu0 0.0
  %1064 = vmatpush.msra.mxu0 %v608
  %1065 = vmatpush.msra.mxu0 %v606
  %1066 = vmatpush.msra.mxu0 %v604
  %1067 = vmatpush.msra.mxu0 %v602
  %1068 = vmatpush.msra.mxu0 %v600
  %1069 = vmatmul.f32.gmra.mxu0 %v1031
  %v1070 = vpop.f32.mrf.mxu0
  %v1071 = vadd.f32 0.0, %v1070
  %1072 = vdwg.mxu0
  %v1073 = vadd.f32 %v1029, %v1051
  %v1074 = vadd.f32 %v1030, %v1071
  %v1075 = vxor.u32 %v1073, 2147483648
  %v1076 = vxor.u32 %v1074, 2147483648
  %v1077 = vmul.f32 %v1075, 1.442695
  %v1078 = vpow.pop %v1077
  %v1079 = vmul.f32 %v1076, 1.442695
  %v1080 = vpow.pop %v1079
  %v1081 = vadd.f32 %v1078, 1.0
  %v1082 = vadd.f32 %v1080, 1.0
  %v1083 = vrcp.pop %v1081
  %v1084 = vmul.f32 %v1081, %v1083
  %v1085 = vsub.f32 1.0, %v1084
  %v1086 = vmul.f32 %v1083, %v1085
  %v1087 = vadd.f32 %v1083, %v1086
  %vm1088 = vweird.f32 %v1081
  %vm1089 = vweird.f32 %v1083
  %vm1090 = vmor %vm1088, %vm1089
  %v1091 = vsel %vm1090, %v1083, %v1087
  %v1092 = vand.u32 2147483647, %v1081
  %vm1093 = vcmp.eq.f32.partialorder %v1092, 8.507059e+37
  %v1094 = vand.u32 %v1081, 2147483648
  %v1095 = vor.u32 1.1754944e-38, %v1094
  %v1096 = vsel %vm1093, %v1095, %v1091
  %v1097 = vmul.f32 1.0, %v1096
  %v1098 = vrcp.pop %v1082
  %v1099 = vmul.f32 %v1082, %v1098
  %v1100 = vsub.f32 1.0, %v1099
  %v1101 = vmul.f32 %v1098, %v1100
  %v1102 = vadd.f32 %v1098, %v1101
  %vm1103 = vweird.f32 %v1082
  %vm1104 = vweird.f32 %v1098
  %vm1105 = vmor %vm1103, %vm1104
  %v1106 = vsel %vm1105, %v1098, %v1102
  %v1107 = vand.u32 2147483647, %v1082
  %vm1108 = vcmp.eq.f32.partialorder %v1107, 8.507059e+37
  %v1109 = vand.u32 %v1082, 2147483648
  %v1110 = vor.u32 1.1754944e-38, %v1109
  %v1111 = vsel %vm1108, %v1110, %v1106
  %v1112 = vmul.f32 1.0, %v1111
  %v1113 = vtanh.pop %v1073
  %v1114 = vmul.f32 %v1097, %v890
  %1116 = vrot.lane.b32.xlu0 %v1113, 48
  %v1117 = vpop.permute.xlu0 %1116
  %v1119 = vmul.f32 %v1097, %v1117
  %1121 = vrot.lane.b32.xlu0 %v1119, 40
  %v1122 = vpop.permute.xlu0 %1121
  %v1124 = vadd.f32 %v1114, %v1122
  %v1125 = vtanh.pop %v1124
  %1127 = vrot.lane.b32.xlu0 %v1125, 80
  %v1128 = vpop.permute.xlu0 %1127
  %v1130 = vmul.f32 %v1097, %v1128
  %v1131 = vmul.f32 %v1112, %v1128
  %1134 = vrot.lane.b32.xlu0 %v1130, 8
  %v1135 = vpop.permute.xlu0 %1134
  %1136 = vrot.lane.b32.xlu0 %v1131, 8
  %v1137 = vpop.permute.xlu0 %1136
  %v1138 = vsel %vm904, %v1135, %v1137
  %1141 = vrot.lane.b32.xlu0 %v1023, 40
  %v1142 = vpop.permute.xlu0 %1141
  %v1144 = vsel %vm648, %v1138, %v1142
  %v1146 = vsel %vm913, %v1144, 0
  %1148 = vmatpush.msra.mxu0 0.0
  %1149 = vmatpush.msra.mxu0 0.0
  %1150 = vmatpush.msra.mxu0 0.0
  %1151 = vmatpush.msra.mxu0 0.0
  %1152 = vmatpush.msra.mxu0 0.0
  %1153 = vmatpush.msra.mxu0 0.0
  %1154 = vmatpush.msra.mxu0 %v627
  %1155 = vmatpush.msra.mxu0 %v625
  %1156 = vmatpush.msra.mxu0 %v623
  %1157 = vmatpush.msra.mxu0 %v621
  %1158 = vmatpush.msra.mxu0 %v619
  %1159 = vmatpush.msra.mxu0 %v617
  %1160 = vmatpush.msra.mxu0 %v615
  %1161 = vmatpush.msra.mxu0 %v613
  %1162 = vmatpush.msra.mxu0 %v611
  %1163 = vmatpush.msra.mxu0 %v609
  %1164 = vmatmul.f32.gmra.mxu0 %v1146
  %v1165 = vpop.f32.mrf.mxu0
  %v1166 = vadd.f32 %v909, %v1165
  %1167 = vdwg.mxu0
  %1168 = vmatpush.msra.mxu0 0.0
  %1169 = vmatpush.msra.mxu0 0.0
  %1170 = vmatpush.msra.mxu0 0.0
  %1171 = vmatpush.msra.mxu0 0.0
  %1172 = vmatpush.msra.mxu0 0.0
  %1173 = vmatpush.msra.mxu0 0.0
  %1174 = vmatpush.msra.mxu0 %v628
  %1175 = vmatpush.msra.mxu0 %v626
  %1176 = vmatpush.msra.mxu0 %v624
  %1177 = vmatpush.msra.mxu0 %v622
  %1178 = vmatpush.msra.mxu0 %v620
  %1179 = vmatpush.msra.mxu0 %v618
  %1180 = vmatpush.msra.mxu0 %v616
  %1181 = vmatpush.msra.mxu0 %v614
  %1182 = vmatpush.msra.mxu0 %v612
  %1183 = vmatpush.msra.mxu0 %v610
  %1184 = vmatmul.f32.gmra.mxu0 %v1146
  %v1185 = vpop.f32.mrf.mxu0
  %v1186 = vadd.f32 %v910, %v1185
  %1187 = vdwg.mxu0
  %v1188 = vxor.u32 %v1166, 2147483648
  %v1189 = vxor.u32 %v1186, 2147483648
  %v1190 = vmul.f32 %v1188, 1.442695
  %v1191 = vpow.pop %v1190
  %v1192 = vmul.f32 %v1189, 1.442695
  %v1193 = vpow.pop %v1192
  %v1194 = vadd.f32 %v1191, 1.0
  %v1195 = vadd.f32 %v1193, 1.0
  %v1196 = vrcp.pop %v1194
  %v1197 = vmul.f32 %v1194, %v1196
  %v1198 = vsub.f32 1.0, %v1197
  %v1199 = vmul.f32 %v1196, %v1198
  %v1200 = vadd.f32 %v1196, %v1199
  %vm1201 = vweird.f32 %v1194
  %vm1202 = vweird.f32 %v1196
  %vm1203 = vmor %vm1201, %vm1202
  %v1204 = vsel %vm1203, %v1196, %v1200
  %v1205 = vand.u32 2147483647, %v1194
  %vm1206 = vcmp.eq.f32.partialorder %v1205, 8.507059e+37
  %v1207 = vand.u32 %v1194, 2147483648
  %v1208 = vor.u32 1.1754944e-38, %v1207
  %v1209 = vsel %vm1206, %v1208, %v1204
  %v1210 = vmul.f32 1.0, %v1209
  %v1211 = vrcp.pop %v1195
  %v1212 = vmul.f32 %v1195, %v1211
  %v1213 = vsub.f32 1.0, %v1212
  %v1214 = vmul.f32 %v1211, %v1213
  %v1215 = vadd.f32 %v1211, %v1214
  %vm1216 = vweird.f32 %v1195
  %vm1217 = vweird.f32 %v1211
  %vm1218 = vmor %vm1216, %vm1217
  %v1219 = vsel %vm1218, %v1211, %v1215
  %v1220 = vand.u32 2147483647, %v1195
  %vm1221 = vcmp.eq.f32.partialorder %v1220, 8.507059e+37
  %v1222 = vand.u32 %v1195, 2147483648
  %v1223 = vor.u32 1.1754944e-38, %v1222
  %v1224 = vsel %vm1221, %v1223, %v1219
  %v1225 = vmul.f32 1.0, %v1224
  %v1226 = vtanh.pop %v1166
  %1228 = vrot.lane.b32.xlu0 %v1028, 40
  %v1229 = vpop.permute.xlu0 %1228
  %v1231 = vmul.f32 %v1210, %v1229
  %1233 = vrot.lane.b32.xlu0 %v1226, 48
  %v1234 = vpop.permute.xlu0 %1233
  %v1236 = vmul.f32 %v1210, %v1234
  %1238 = vrot.lane.b32.xlu0 %v1236, 40
  %v1239 = vpop.permute.xlu0 %1238
  %v1241 = vadd.f32 %v1231, %v1239
  %v1242 = vtanh.pop %v1241
  %1244 = vrot.lane.b32.xlu0 %v1242, 80
  %v1245 = vpop.permute.xlu0 %1244
  %v1247 = vmul.f32 %v1210, %v1245
  %v1248 = vmul.f32 %v1225, %v1245
  %vm1249 = vcmp.gt.s32.totalorder %v632, 1
  %1252 = vrot.lane.b32.xlu0 %v1247, 8
  %v1253 = vpop.permute.xlu0 %1252
  %1254 = vrot.lane.b32.xlu0 %v1248, 8
  %v1255 = vpop.permute.xlu0 %1254
  %v1256 = vsel %vm904, %v1253, %v1255
  %v1258 = vsel %vm1249, %v1256, %v1023
  %1260 = vrot.lane.b32.xlu0 %v1241, 88
  %v1261 = vpop.permute.xlu0 %1260
  %v1263 = vsel %vm1249, %v1261, %v1028
  %v1264 = vld [vmem:[#allocation2 + $0x20] sm:$0xff]
  %v1265 = vld [vmem:[#allocation2 + $0x28] sm:$0xff]
  %v1266 = vsel %vm648, %v1138, 0
  %1268 = vmatpush.msra.mxu0 0.0
  %1269 = vmatpush.msra.mxu0 0.0
  %1270 = vmatpush.msra.mxu0 0.0
  %1271 = vmatpush.msra.mxu0 0.0
  %1272 = vmatpush.msra.mxu0 0.0
  %1273 = vmatpush.msra.mxu0 0.0
  %1274 = vmatpush.msra.mxu0 0.0
  %1275 = vmatpush.msra.mxu0 0.0
  %1276 = vmatpush.msra.mxu0 0.0
  %1277 = vmatpush.msra.mxu0 0.0
  %1278 = vmatpush.msra.mxu0 0.0
  %1279 = vmatpush.msra.mxu0 %v607
  %1280 = vmatpush.msra.mxu0 %v605
  %1281 = vmatpush.msra.mxu0 %v603
  %1282 = vmatpush.msra.mxu0 %v601
  %1283 = vmatpush.msra.mxu0 %v599
  %1284 = vmatmul.f32.gmra.mxu0 %v1266
  %v1285 = vpop.f32.mrf.mxu0
  %v1286 = vadd.f32 0.0, %v1285
  %1287 = vdwg.mxu0
  %1288 = vmatpush.msra.mxu0 0.0
  %1289 = vmatpush.msra.mxu0 0.0
  %1290 = vmatpush.msra.mxu0 0.0
  %1291 = vmatpush.msra.mxu0 0.0
  %1292 = vmatpush.msra.mxu0 0.0
  %1293 = vmatpush.msra.mxu0 0.0
  %1294 = vmatpush.msra.mxu0 0.0
  %1295 = vmatpush.msra.mxu0 0.0
  %1296 = vmatpush.msra.mxu0 0.0
  %1297 = vmatpush.msra.mxu0 0.0
  %1298 = vmatpush.msra.mxu0 0.0
  %1299 = vmatpush.msra.mxu0 %v608
  %1300 = vmatpush.msra.mxu0 %v606
  %1301 = vmatpush.msra.mxu0 %v604
  %1302 = vmatpush.msra.mxu0 %v602
  %1303 = vmatpush.msra.mxu0 %v600
  %1304 = vmatmul.f32.gmra.mxu0 %v1266
  %v1305 = vpop.f32.mrf.mxu0
  %v1306 = vadd.f32 0.0, %v1305
  %1307 = vdwg.mxu0
  %v1308 = vadd.f32 %v1264, %v1286
  %v1309 = vadd.f32 %v1265, %v1306
  %v1310 = vxor.u32 %v1308, 2147483648
  %v1311 = vxor.u32 %v1309, 2147483648
  %v1312 = vmul.f32 %v1310, 1.442695
  %v1313 = vpow.pop %v1312
  %v1314 = vmul.f32 %v1311, 1.442695
  %v1315 = vpow.pop %v1314
  %v1316 = vadd.f32 %v1313, 1.0
  %v1317 = vadd.f32 %v1315, 1.0
  %v1318 = vrcp.pop %v1316
  %v1319 = vmul.f32 %v1316, %v1318
  %v1320 = vsub.f32 1.0, %v1319
  %v1321 = vmul.f32 %v1318, %v1320
  %v1322 = vadd.f32 %v1318, %v1321
  %vm1323 = vweird.f32 %v1316
  %vm1324 = vweird.f32 %v1318
  %vm1325 = vmor %vm1323, %vm1324
  %v1326 = vsel %vm1325, %v1318, %v1322
  %v1327 = vand.u32 2147483647, %v1316
  %vm1328 = vcmp.eq.f32.partialorder %v1327, 8.507059e+37
  %v1329 = vand.u32 %v1316, 2147483648
  %v1330 = vor.u32 1.1754944e-38, %v1329
  %v1331 = vsel %vm1328, %v1330, %v1326
  %v1332 = vmul.f32 1.0, %v1331
  %v1333 = vrcp.pop %v1317
  %v1334 = vmul.f32 %v1317, %v1333
  %v1335 = vsub.f32 1.0, %v1334
  %v1336 = vmul.f32 %v1333, %v1335
  %v1337 = vadd.f32 %v1333, %v1336
  %vm1338 = vweird.f32 %v1317
  %vm1339 = vweird.f32 %v1333
  %vm1340 = vmor %vm1338, %vm1339
  %v1341 = vsel %vm1340, %v1333, %v1337
  %v1342 = vand.u32 2147483647, %v1317
  %vm1343 = vcmp.eq.f32.partialorder %v1342, 8.507059e+37
  %v1344 = vand.u32 %v1317, 2147483648
  %v1345 = vor.u32 1.1754944e-38, %v1344
  %v1346 = vsel %vm1343, %v1345, %v1341
  %v1347 = vmul.f32 1.0, %v1346
  %v1348 = vtanh.pop %v1308
  %v1349 = vmul.f32 %v1332, %v1124
  %1351 = vrot.lane.b32.xlu0 %v1348, 48
  %v1352 = vpop.permute.xlu0 %1351
  %v1354 = vmul.f32 %v1332, %v1352
  %1356 = vrot.lane.b32.xlu0 %v1354, 40
  %v1357 = vpop.permute.xlu0 %1356
  %v1359 = vadd.f32 %v1349, %v1357
  %v1360 = vtanh.pop %v1359
  %1362 = vrot.lane.b32.xlu0 %v1360, 80
  %v1363 = vpop.permute.xlu0 %1362
  %v1365 = vmul.f32 %v1332, %v1363
  %v1366 = vmul.f32 %v1347, %v1363
  %1369 = vrot.lane.b32.xlu0 %v1365, 8
  %v1370 = vpop.permute.xlu0 %1369
  %1371 = vrot.lane.b32.xlu0 %v1366, 8
  %v1372 = vpop.permute.xlu0 %1371
  %v1373 = vsel %vm904, %v1370, %v1372
  %1376 = vrot.lane.b32.xlu0 %v1258, 40
  %v1377 = vpop.permute.xlu0 %1376
  %v1379 = vsel %vm648, %v1373, %v1377
  %v1381 = vsel %vm913, %v1379, 0
  %1383 = vmatpush.msra.mxu0 0.0
  %1384 = vmatpush.msra.mxu0 0.0
  %1385 = vmatpush.msra.mxu0 0.0
  %1386 = vmatpush.msra.mxu0 0.0
  %1387 = vmatpush.msra.mxu0 0.0
  %1388 = vmatpush.msra.mxu0 0.0
  %1389 = vmatpush.msra.mxu0 %v627
  %1390 = vmatpush.msra.mxu0 %v625
  %1391 = vmatpush.msra.mxu0 %v623
  %1392 = vmatpush.msra.mxu0 %v621
  %1393 = vmatpush.msra.mxu0 %v619
  %1394 = vmatpush.msra.mxu0 %v617
  %1395 = vmatpush.msra.mxu0 %v615
  %1396 = vmatpush.msra.mxu0 %v613
  %1397 = vmatpush.msra.mxu0 %v611
  %1398 = vmatpush.msra.mxu0 %v609
  %1399 = vmatmul.f32.gmra.mxu0 %v1381
  %v1400 = vpop.f32.mrf.mxu0
  %v1401 = vadd.f32 %v909, %v1400
  %1402 = vdwg.mxu0
  %1403 = vmatpush.msra.mxu0 0.0
  %1404 = vmatpush.msra.mxu0 0.0
  %1405 = vmatpush.msra.mxu0 0.0
  %1406 = vmatpush.msra.mxu0 0.0
  %1407 = vmatpush.msra.mxu0 0.0
  %1408 = vmatpush.msra.mxu0 0.0
  %1409 = vmatpush.msra.mxu0 %v628
  %1410 = vmatpush.msra.mxu0 %v626
  %1411 = vmatpush.msra.mxu0 %v624
  %1412 = vmatpush.msra.mxu0 %v622
  %1413 = vmatpush.msra.mxu0 %v620
  %1414 = vmatpush.msra.mxu0 %v618
  %1415 = vmatpush.msra.mxu0 %v616
  %1416 = vmatpush.msra.mxu0 %v614
  %1417 = vmatpush.msra.mxu0 %v612
  %1418 = vmatpush.msra.mxu0 %v610
  %1419 = vmatmul.f32.gmra.mxu0 %v1381
  %v1420 = vpop.f32.mrf.mxu0
  %v1421 = vadd.f32 %v910, %v1420
  %1422 = vdwg.mxu0
  %v1423 = vxor.u32 %v1401, 2147483648
  %v1424 = vxor.u32 %v1421, 2147483648
  %v1425 = vmul.f32 %v1423, 1.442695
  %v1426 = vpow.pop %v1425
  %v1427 = vmul.f32 %v1424, 1.442695
  %v1428 = vpow.pop %v1427
  %v1429 = vadd.f32 %v1426, 1.0
  %v1430 = vadd.f32 %v1428, 1.0
  %v1431 = vrcp.pop %v1429
  %v1432 = vmul.f32 %v1429, %v1431
  %v1433 = vsub.f32 1.0, %v1432
  %v1434 = vmul.f32 %v1431, %v1433
  %v1435 = vadd.f32 %v1431, %v1434
  %vm1436 = vweird.f32 %v1429
  %vm1437 = vweird.f32 %v1431
  %vm1438 = vmor %vm1436, %vm1437
  %v1439 = vsel %vm1438, %v1431, %v1435
  %v1440 = vand.u32 2147483647, %v1429
  %vm1441 = vcmp.eq.f32.partialorder %v1440, 8.507059e+37
  %v1442 = vand.u32 %v1429, 2147483648
  %v1443 = vor.u32 1.1754944e-38, %v1442
  %v1444 = vsel %vm1441, %v1443, %v1439
  %v1445 = vmul.f32 1.0, %v1444
  %v1446 = vrcp.pop %v1430
  %v1447 = vmul.f32 %v1430, %v1446
  %v1448 = vsub.f32 1.0, %v1447
  %v1449 = vmul.f32 %v1446, %v1448
  %v1450 = vadd.f32 %v1446, %v1449
  %vm1451 = vweird.f32 %v1430
  %vm1452 = vweird.f32 %v1446
  %vm1453 = vmor %vm1451, %vm1452
  %v1454 = vsel %vm1453, %v1446, %v1450
  %v1455 = vand.u32 2147483647, %v1430
  %vm1456 = vcmp.eq.f32.partialorder %v1455, 8.507059e+37
  %v1457 = vand.u32 %v1430, 2147483648
  %v1458 = vor.u32 1.1754944e-38, %v1457
  %v1459 = vsel %vm1456, %v1458, %v1454
  %v1460 = vmul.f32 1.0, %v1459
  %v1461 = vtanh.pop %v1401
  %1463 = vrot.lane.b32.xlu0 %v1263, 40
  %v1464 = vpop.permute.xlu0 %1463
  %v1466 = vmul.f32 %v1445, %v1464
  %1468 = vrot.lane.b32.xlu0 %v1461, 48
  %v1469 = vpop.permute.xlu0 %1468
  %v1471 = vmul.f32 %v1445, %v1469
  %1473 = vrot.lane.b32.xlu0 %v1471, 40
  %v1474 = vpop.permute.xlu0 %1473
  %v1476 = vadd.f32 %v1466, %v1474
  %v1477 = vtanh.pop %v1476
  %1479 = vrot.lane.b32.xlu0 %v1477, 80
  %v1480 = vpop.permute.xlu0 %1479
  %v1482 = vmul.f32 %v1445, %v1480
  %v1483 = vmul.f32 %v1460, %v1480
  %vm1484 = vcmp.gt.s32.totalorder %v632, 2
  %1487 = vrot.lane.b32.xlu0 %v1482, 8
  %v1488 = vpop.permute.xlu0 %1487
  %1489 = vrot.lane.b32.xlu0 %v1483, 8
  %v1490 = vpop.permute.xlu0 %1489
  %v1491 = vsel %vm904, %v1488, %v1490
  %v1493 = vsel %vm1484, %v1491, %v1258
  %1495 = vrot.lane.b32.xlu0 %v1476, 88
  %v1496 = vpop.permute.xlu0 %1495
  %v1498 = vsel %vm1484, %v1496, %v1263
  %v1499 = vld [vmem:[#allocation2 + $0x30] sm:$0xff]
  %v1500 = vld [vmem:[#allocation2 + $0x38] sm:$0xff]
  %v1501 = vsel %vm648, %v1373, 0
  %1503 = vmatpush.msra.mxu0 0.0
  %1504 = vmatpush.msra.mxu0 0.0
  %1505 = vmatpush.msra.mxu0 0.0
  %1506 = vmatpush.msra.mxu0 0.0
  %1507 = vmatpush.msra.mxu0 0.0
  %1508 = vmatpush.msra.mxu0 0.0
  %1509 = vmatpush.msra.mxu0 0.0
  %1510 = vmatpush.msra.mxu0 0.0
  %1511 = vmatpush.msra.mxu0 0.0
  %1512 = vmatpush.msra.mxu0 0.0
  %1513 = vmatpush.msra.mxu0 0.0
  %1514 = vmatpush.msra.mxu0 %v607
  %1515 = vmatpush.msra.mxu0 %v605
  %1516 = vmatpush.msra.mxu0 %v603
  %1517 = vmatpush.msra.mxu0 %v601
  %1518 = vmatpush.msra.mxu0 %v599
  %1519 = vmatmul.f32.gmra.mxu0 %v1501
  %v1520 = vpop.f32.mrf.mxu0
  %v1521 = vadd.f32 0.0, %v1520
  %1522 = vdwg.mxu0
  %1523 = vmatpush.msra.mxu0 0.0
  %1524 = vmatpush.msra.mxu0 0.0
  %1525 = vmatpush.msra.mxu0 0.0
  %1526 = vmatpush.msra.mxu0 0.0
  %1527 = vmatpush.msra.mxu0 0.0
  %1528 = vmatpush.msra.mxu0 0.0
  %1529 = vmatpush.msra.mxu0 0.0
  %1530 = vmatpush.msra.mxu0 0.0
  %1531 = vmatpush.msra.mxu0 0.0
  %1532 = vmatpush.msra.mxu0 0.0
  %1533 = vmatpush.msra.mxu0 0.0
  %1534 = vmatpush.msra.mxu0 %v608
  %1535 = vmatpush.msra.mxu0 %v606
  %1536 = vmatpush.msra.mxu0 %v604
  %1537 = vmatpush.msra.mxu0 %v602
  %1538 = vmatpush.msra.mxu0 %v600
  %1539 = vmatmul.f32.gmra.mxu0 %v1501
  %v1540 = vpop.f32.mrf.mxu0
  %v1541 = vadd.f32 0.0, %v1540
  %1542 = vdwg.mxu0
  %v1543 = vadd.f32 %v1499, %v1521
  %v1544 = vadd.f32 %v1500, %v1541
  %v1545 = vxor.u32 %v1543, 2147483648
  %v1546 = vxor.u32 %v1544, 2147483648
  %v1547 = vmul.f32 %v1545, 1.442695
  %v1548 = vpow.pop %v1547
  %v1549 = vmul.f32 %v1546, 1.442695
  %v1550 = vpow.pop %v1549
  %v1551 = vadd.f32 %v1548, 1.0
  %v1552 = vadd.f32 %v1550, 1.0
  %v1553 = vrcp.pop %v1551
  %v1554 = vmul.f32 %v1551, %v1553
  %v1555 = vsub.f32 1.0, %v1554
  %v1556 = vmul.f32 %v1553, %v1555
  %v1557 = vadd.f32 %v1553, %v1556
  %vm1558 = vweird.f32 %v1551
  %vm1559 = vweird.f32 %v1553
  %vm1560 = vmor %vm1558, %vm1559
  %v1561 = vsel %vm1560, %v1553, %v1557
  %v1562 = vand.u32 2147483647, %v1551
  %vm1563 = vcmp.eq.f32.partialorder %v1562, 8.507059e+37
  %v1564 = vand.u32 %v1551, 2147483648
  %v1565 = vor.u32 1.1754944e-38, %v1564
  %v1566 = vsel %vm1563, %v1565, %v1561
  %v1567 = vmul.f32 1.0, %v1566
  %v1568 = vrcp.pop %v1552
  %v1569 = vmul.f32 %v1552, %v1568
  %v1570 = vsub.f32 1.0, %v1569
  %v1571 = vmul.f32 %v1568, %v1570
  %v1572 = vadd.f32 %v1568, %v1571
  %vm1573 = vweird.f32 %v1552
  %vm1574 = vweird.f32 %v1568
  %vm1575 = vmor %vm1573, %vm1574
  %v1576 = vsel %vm1575, %v1568, %v1572
  %v1577 = vand.u32 2147483647, %v1552
  %vm1578 = vcmp.eq.f32.partialorder %v1577, 8.507059e+37
  %v1579 = vand.u32 %v1552, 2147483648
  %v1580 = vor.u32 1.1754944e-38, %v1579
  %v1581 = vsel %vm1578, %v1580, %v1576
  %v1582 = vmul.f32 1.0, %v1581
  %v1583 = vtanh.pop %v1543
  %v1584 = vmul.f32 %v1567, %v1359
  %1586 = vrot.lane.b32.xlu0 %v1583, 48
  %v1587 = vpop.permute.xlu0 %1586
  %v1589 = vmul.f32 %v1567, %v1587
  %1591 = vrot.lane.b32.xlu0 %v1589, 40
  %v1592 = vpop.permute.xlu0 %1591
  %v1594 = vadd.f32 %v1584, %v1592
  %v1595 = vtanh.pop %v1594
  %1597 = vrot.lane.b32.xlu0 %v1595, 80
  %v1598 = vpop.permute.xlu0 %1597
  %v1600 = vmul.f32 %v1567, %v1598
  %v1601 = vmul.f32 %v1582, %v1598
  %1604 = vrot.lane.b32.xlu0 %v1600, 8
  %v1605 = vpop.permute.xlu0 %1604
  %1606 = vrot.lane.b32.xlu0 %v1601, 8
  %v1607 = vpop.permute.xlu0 %1606
  %v1608 = vsel %vm904, %v1605, %v1607
  %1611 = vrot.lane.b32.xlu0 %v1493, 40
  %v1612 = vpop.permute.xlu0 %1611
  %v1614 = vsel %vm648, %v1608, %v1612
  %v1616 = vsel %vm913, %v1614, 0
  %1618 = vmatpush.msra.mxu0 0.0
  %1619 = vmatpush.msra.mxu0 0.0
  %1620 = vmatpush.msra.mxu0 0.0
  %1621 = vmatpush.msra.mxu0 0.0
  %1622 = vmatpush.msra.mxu0 0.0
  %1623 = vmatpush.msra.mxu0 0.0
  %1624 = vmatpush.msra.mxu0 %v627
  %1625 = vmatpush.msra.mxu0 %v625
  %1626 = vmatpush.msra.mxu0 %v623
  %1627 = vmatpush.msra.mxu0 %v621
  %1628 = vmatpush.msra.mxu0 %v619
  %1629 = vmatpush.msra.mxu0 %v617
  %1630 = vmatpush.msra.mxu0 %v615
  %1631 = vmatpush.msra.mxu0 %v613
  %1632 = vmatpush.msra.mxu0 %v611
  %1633 = vmatpush.msra.mxu0 %v609
  %1634 = vmatmul.f32.gmra.mxu0 %v1616
  %v1635 = vpop.f32.mrf.mxu0
  %v1636 = vadd.f32 %v909, %v1635
  %1637 = vdwg.mxu0
  %1638 = vmatpush.msra.mxu0 0.0
  %1639 = vmatpush.msra.mxu0 0.0
  %1640 = vmatpush.msra.mxu0 0.0
  %1641 = vmatpush.msra.mxu0 0.0
  %1642 = vmatpush.msra.mxu0 0.0
  %1643 = vmatpush.msra.mxu0 0.0
  %1644 = vmatpush.msra.mxu0 %v628
  %1645 = vmatpush.msra.mxu0 %v626
  %1646 = vmatpush.msra.mxu0 %v624
  %1647 = vmatpush.msra.mxu0 %v622
  %1648 = vmatpush.msra.mxu0 %v620
  %1649 = vmatpush.msra.mxu0 %v618
  %1650 = vmatpush.msra.mxu0 %v616
  %1651 = vmatpush.msra.mxu0 %v614
  %1652 = vmatpush.msra.mxu0 %v612
  %1653 = vmatpush.msra.mxu0 %v610
  %1654 = vmatmul.f32.gmra.mxu0 %v1616
  %v1655 = vpop.f32.mrf.mxu0
  %v1656 = vadd.f32 %v910, %v1655
  %1657 = vdwg.mxu0
  %v1658 = vxor.u32 %v1636, 2147483648
  %v1659 = vxor.u32 %v1656, 2147483648
  %v1660 = vmul.f32 %v1658, 1.442695
  %v1661 = vpow.pop %v1660
  %v1662 = vmul.f32 %v1659, 1.442695
  %v1663 = vpow.pop %v1662
  %v1664 = vadd.f32 %v1661, 1.0
  %v1665 = vadd.f32 %v1663, 1.0
  %v1666 = vrcp.pop %v1664
  %v1667 = vmul.f32 %v1664, %v1666
  %v1668 = vsub.f32 1.0, %v1667
  %v1669 = vmul.f32 %v1666, %v1668
  %v1670 = vadd.f32 %v1666, %v1669
  %vm1671 = vweird.f32 %v1664
  %vm1672 = vweird.f32 %v1666
  %vm1673 = vmor %vm1671, %vm1672
  %v1674 = vsel %vm1673, %v1666, %v1670
  %v1675 = vand.u32 2147483647, %v1664
  %vm1676 = vcmp.eq.f32.partialorder %v1675, 8.507059e+37
  %v1677 = vand.u32 %v1664, 2147483648
  %v1678 = vor.u32 1.1754944e-38, %v1677
  %v1679 = vsel %vm1676, %v1678, %v1674
  %v1680 = vmul.f32 1.0, %v1679
  %v1681 = vrcp.pop %v1665
  %v1682 = vmul.f32 %v1665, %v1681
  %v1683 = vsub.f32 1.0, %v1682
  %v1684 = vmul.f32 %v1681, %v1683
  %v1685 = vadd.f32 %v1681, %v1684
  %vm1686 = vweird.f32 %v1665
  %vm1687 = vweird.f32 %v1681
  %vm1688 = vmor %vm1686, %vm1687
  %v1689 = vsel %vm1688, %v1681, %v1685
  %v1690 = vand.u32 2147483647, %v1665
  %vm1691 = vcmp.eq.f32.partialorder %v1690, 8.507059e+37
  %v1692 = vand.u32 %v1665, 2147483648
  %v1693 = vor.u32 1.1754944e-38, %v1692
  %v1694 = vsel %vm1691, %v1693, %v1689
  %v1695 = vmul.f32 1.0, %v1694
  %v1696 = vtanh.pop %v1636
  %1698 = vrot.lane.b32.xlu0 %v1498, 40
  %v1699 = vpop.permute.xlu0 %1698
  %v1701 = vmul.f32 %v1680, %v1699
  %1703 = vrot.lane.b32.xlu0 %v1696, 48
  %v1704 = vpop.permute.xlu0 %1703
  %v1706 = vmul.f32 %v1680, %v1704
  %1708 = vrot.lane.b32.xlu0 %v1706, 40
  %v1709 = vpop.permute.xlu0 %1708
  %v1711 = vadd.f32 %v1701, %v1709
  %v1712 = vtanh.pop %v1711
  %1714 = vrot.lane.b32.xlu0 %v1712, 80
  %v1715 = vpop.permute.xlu0 %1714
  %v1717 = vmul.f32 %v1680, %v1715
  %v1718 = vmul.f32 %v1695, %v1715
  %vm1719 = vcmp.gt.s32.totalorder %v632, 3
  %1722 = vrot.lane.b32.xlu0 %v1717, 8
  %v1723 = vpop.permute.xlu0 %1722
  %1724 = vrot.lane.b32.xlu0 %v1718, 8
  %v1725 = vpop.permute.xlu0 %1724
  %v1726 = vsel %vm904, %v1723, %v1725
  %v1728 = vsel %vm1719, %v1726, %v1493
  %1730 = vrot.lane.b32.xlu0 %v1711, 88
  %v1731 = vpop.permute.xlu0 %1730
  %v1733 = vsel %vm1719, %v1731, %v1498
  %v1734 = vld [vmem:[#allocation2 + $0x40] sm:$0xff]
  %v1735 = vld [vmem:[#allocation2 + $0x48] sm:$0xff]
  %v1736 = vsel %vm648, %v1608, 0
  %1738 = vmatpush.msra.mxu0 0.0
  %1739 = vmatpush.msra.mxu0 0.0
  %1740 = vmatpush.msra.mxu0 0.0
  %1741 = vmatpush.msra.mxu0 0.0
  %1742 = vmatpush.msra.mxu0 0.0
  %1743 = vmatpush.msra.mxu0 0.0
  %1744 = vmatpush.msra.mxu0 0.0
  %1745 = vmatpush.msra.mxu0 0.0
  %1746 = vmatpush.msra.mxu0 0.0
  %1747 = vmatpush.msra.mxu0 0.0
  %1748 = vmatpush.msra.mxu0 0.0
  %1749 = vmatpush.msra.mxu0 %v607
  %1750 = vmatpush.msra.mxu0 %v605
  %1751 = vmatpush.msra.mxu0 %v603
  %1752 = vmatpush.msra.mxu0 %v601
  %1753 = vmatpush.msra.mxu0 %v599
  %1754 = vmatmul.f32.gmra.mxu0 %v1736
  %v1755 = vpop.f32.mrf.mxu0
  %v1756 = vadd.f32 0.0, %v1755
  %1757 = vdwg.mxu0
  %1758 = vmatpush.msra.mxu0 0.0
  %1759 = vmatpush.msra.mxu0 0.0
  %1760 = vmatpush.msra.mxu0 0.0
  %1761 = vmatpush.msra.mxu0 0.0
  %1762 = vmatpush.msra.mxu0 0.0
  %1763 = vmatpush.msra.mxu0 0.0
  %1764 = vmatpush.msra.mxu0 0.0
  %1765 = vmatpush.msra.mxu0 0.0
  %1766 = vmatpush.msra.mxu0 0.0
  %1767 = vmatpush.msra.mxu0 0.0
  %1768 = vmatpush.msra.mxu0 0.0
  %1769 = vmatpush.msra.mxu0 %v608
  %1770 = vmatpush.msra.mxu0 %v606
  %1771 = vmatpush.msra.mxu0 %v604
  %1772 = vmatpush.msra.mxu0 %v602
  %1773 = vmatpush.msra.mxu0 %v600
  %1774 = vmatmul.f32.gmra.mxu0 %v1736
  %v1775 = vpop.f32.mrf.mxu0
  %v1776 = vadd.f32 0.0, %v1775
  %1777 = vdwg.mxu0
  %v1778 = vadd.f32 %v1734, %v1756
  %v1779 = vadd.f32 %v1735, %v1776
  %v1780 = vxor.u32 %v1778, 2147483648
  %v1781 = vxor.u32 %v1779, 2147483648
  %v1782 = vmul.f32 %v1780, 1.442695
  %v1783 = vpow.pop %v1782
  %v1784 = vmul.f32 %v1781, 1.442695
  %v1785 = vpow.pop %v1784
  %v1786 = vadd.f32 %v1783, 1.0
  %v1787 = vadd.f32 %v1785, 1.0
  %v1788 = vrcp.pop %v1786
  %v1789 = vmul.f32 %v1786, %v1788
  %v1790 = vsub.f32 1.0, %v1789
  %v1791 = vmul.f32 %v1788, %v1790
  %v1792 = vadd.f32 %v1788, %v1791
  %vm1793 = vweird.f32 %v1786
  %vm1794 = vweird.f32 %v1788
  %vm1795 = vmor %vm1793, %vm1794
  %v1796 = vsel %vm1795, %v1788, %v1792
  %v1797 = vand.u32 2147483647, %v1786
  %vm1798 = vcmp.eq.f32.partialorder %v1797, 8.507059e+37
  %v1799 = vand.u32 %v1786, 2147483648
  %v1800 = vor.u32 1.1754944e-38, %v1799
  %v1801 = vsel %vm1798, %v1800, %v1796
  %v1802 = vmul.f32 1.0, %v1801
  %v1803 = vrcp.pop %v1787
  %v1804 = vmul.f32 %v1787, %v1803
  %v1805 = vsub.f32 1.0, %v1804
  %v1806 = vmul.f32 %v1803, %v1805
  %v1807 = vadd.f32 %v1803, %v1806
  %vm1808 = vweird.f32 %v1787
  %vm1809 = vweird.f32 %v1803
  %vm1810 = vmor %vm1808, %vm1809
  %v1811 = vsel %vm1810, %v1803, %v1807
  %v1812 = vand.u32 2147483647, %v1787
  %vm1813 = vcmp.eq.f32.partialorder %v1812, 8.507059e+37
  %v1814 = vand.u32 %v1787, 2147483648
  %v1815 = vor.u32 1.1754944e-38, %v1814
  %v1816 = vsel %vm1813, %v1815, %v1811
  %v1817 = vmul.f32 1.0, %v1816
  %v1818 = vtanh.pop %v1778
  %v1819 = vmul.f32 %v1802, %v1594
  %1821 = vrot.lane.b32.xlu0 %v1818, 48
  %v1822 = vpop.permute.xlu0 %1821
  %v1824 = vmul.f32 %v1802, %v1822
  %1826 = vrot.lane.b32.xlu0 %v1824, 40
  %v1827 = vpop.permute.xlu0 %1826
  %v1829 = vadd.f32 %v1819, %v1827
  %v1830 = vtanh.pop %v1829
  %1832 = vrot.lane.b32.xlu0 %v1830, 80
  %v1833 = vpop.permute.xlu0 %1832
  %v1835 = vmul.f32 %v1802, %v1833
  %v1836 = vmul.f32 %v1817, %v1833
  %1839 = vrot.lane.b32.xlu0 %v1835, 8
  %v1840 = vpop.permute.xlu0 %1839
  %1841 = vrot.lane.b32.xlu0 %v1836, 8
  %v1842 = vpop.permute.xlu0 %1841
  %v1843 = vsel %vm904, %v1840, %v1842
  %1846 = vrot.lane.b32.xlu0 %v1728, 40
  %v1847 = vpop.permute.xlu0 %1846
  %v1849 = vsel %vm648, %v1843, %v1847
  %v1851 = vsel %vm913, %v1849, 0
  %1853 = vmatpush.msra.mxu0 0.0
  %1854 = vmatpush.msra.mxu0 0.0
  %1855 = vmatpush.msra.mxu0 0.0
  %1856 = vmatpush.msra.mxu0 0.0
  %1857 = vmatpush.msra.mxu0 0.0
  %1858 = vmatpush.msra.mxu0 0.0
  %1859 = vmatpush.msra.mxu0 %v627
  %1860 = vmatpush.msra.mxu0 %v625
  %1861 = vmatpush.msra.mxu0 %v623
  %1862 = vmatpush.msra.mxu0 %v621
  %1863 = vmatpush.msra.mxu0 %v619
  %1864 = vmatpush.msra.mxu0 %v617
  %1865 = vmatpush.msra.mxu0 %v615
  %1866 = vmatpush.msra.mxu0 %v613
  %1867 = vmatpush.msra.mxu0 %v611
  %1868 = vmatpush.msra.mxu0 %v609
  %1869 = vmatmul.f32.gmra.mxu0 %v1851
  %v1870 = vpop.f32.mrf.mxu0
  %v1871 = vadd.f32 %v909, %v1870
  %1872 = vdwg.mxu0
  %1873 = vmatpush.msra.mxu0 0.0
  %1874 = vmatpush.msra.mxu0 0.0
  %1875 = vmatpush.msra.mxu0 0.0
  %1876 = vmatpush.msra.mxu0 0.0
  %1877 = vmatpush.msra.mxu0 0.0
  %1878 = vmatpush.msra.mxu0 0.0
  %1879 = vmatpush.msra.mxu0 %v628
  %1880 = vmatpush.msra.mxu0 %v626
  %1881 = vmatpush.msra.mxu0 %v624
  %1882 = vmatpush.msra.mxu0 %v622
  %1883 = vmatpush.msra.mxu0 %v620
  %1884 = vmatpush.msra.mxu0 %v618
  %1885 = vmatpush.msra.mxu0 %v616
  %1886 = vmatpush.msra.mxu0 %v614
  %1887 = vmatpush.msra.mxu0 %v612
  %1888 = vmatpush.msra.mxu0 %v610
  %1889 = vmatmul.f32.gmra.mxu0 %v1851
  %v1890 = vpop.f32.mrf.mxu0
  %v1891 = vadd.f32 %v910, %v1890
  %1892 = vdwg.mxu0
  %v1893 = vxor.u32 %v1871, 2147483648
  %v1894 = vxor.u32 %v1891, 2147483648
  %v1895 = vmul.f32 %v1893, 1.442695
  %v1896 = vpow.pop %v1895
  %v1897 = vmul.f32 %v1894, 1.442695
  %v1898 = vpow.pop %v1897
  %v1899 = vadd.f32 %v1896, 1.0
  %v1900 = vadd.f32 %v1898, 1.0
  %v1901 = vrcp.pop %v1899
  %v1902 = vmul.f32 %v1899, %v1901
  %v1903 = vsub.f32 1.0, %v1902
  %v1904 = vmul.f32 %v1901, %v1903
  %v1905 = vadd.f32 %v1901, %v1904
  %vm1906 = vweird.f32 %v1899
  %vm1907 = vweird.f32 %v1901
  %vm1908 = vmor %vm1906, %vm1907
  %v1909 = vsel %vm1908, %v1901, %v1905
  %v1910 = vand.u32 2147483647, %v1899
  %vm1911 = vcmp.eq.f32.partialorder %v1910, 8.507059e+37
  %v1912 = vand.u32 %v1899, 2147483648
  %v1913 = vor.u32 1.1754944e-38, %v1912
  %v1914 = vsel %vm1911, %v1913, %v1909
  %v1915 = vmul.f32 1.0, %v1914
  %v1916 = vrcp.pop %v1900
  %v1917 = vmul.f32 %v1900, %v1916
  %v1918 = vsub.f32 1.0, %v1917
  %v1919 = vmul.f32 %v1916, %v1918
  %v1920 = vadd.f32 %v1916, %v1919
  %vm1921 = vweird.f32 %v1900
  %vm1922 = vweird.f32 %v1916
  %vm1923 = vmor %vm1921, %vm1922
  %v1924 = vsel %vm1923, %v1916, %v1920
  %v1925 = vand.u32 2147483647, %v1900
  %vm1926 = vcmp.eq.f32.partialorder %v1925, 8.507059e+37
  %v1927 = vand.u32 %v1900, 2147483648
  %v1928 = vor.u32 1.1754944e-38, %v1927
  %v1929 = vsel %vm1926, %v1928, %v1924
  %v1930 = vmul.f32 1.0, %v1929
  %v1931 = vtanh.pop %v1871
  %1933 = vrot.lane.b32.xlu0 %v1733, 40
  %v1934 = vpop.permute.xlu0 %1933
  %v1936 = vmul.f32 %v1915, %v1934
  %1938 = vrot.lane.b32.xlu0 %v1931, 48
  %v1939 = vpop.permute.xlu0 %1938
  %v1941 = vmul.f32 %v1915, %v1939
  %1943 = vrot.lane.b32.xlu0 %v1941, 40
  %v1944 = vpop.permute.xlu0 %1943
  %v1946 = vadd.f32 %v1936, %v1944
  %v1947 = vtanh.pop %v1946
  %1949 = vrot.lane.b32.xlu0 %v1947, 80
  %v1950 = vpop.permute.xlu0 %1949
  %v1952 = vmul.f32 %v1915, %v1950
  %v1953 = vmul.f32 %v1930, %v1950
  %vm1954 = vcmp.gt.s32.totalorder %v632, 4
  %1957 = vrot.lane.b32.xlu0 %v1952, 8
  %v1958 = vpop.permute.xlu0 %1957
  %1959 = vrot.lane.b32.xlu0 %v1953, 8
  %v1960 = vpop.permute.xlu0 %1959
  %v1961 = vsel %vm904, %v1958, %v1960
  %v1963 = vsel %vm1954, %v1961, %v1728
  %1965 = vrot.lane.b32.xlu0 %v1946, 88
  %v1966 = vpop.permute.xlu0 %1965
  %v1968 = vsel %vm1954, %v1966, %v1733
  %v1969 = vld [vmem:[#allocation2 + $0x50] sm:$0xff]
  %v1970 = vld [vmem:[#allocation2 + $0x58] sm:$0xff]
  %v1971 = vsel %vm648, %v1843, 0
  %1973 = vmatpush.msra.mxu0 0.0
  %1974 = vmatpush.msra.mxu0 0.0
  %1975 = vmatpush.msra.mxu0 0.0
  %1976 = vmatpush.msra.mxu0 0.0
  %1977 = vmatpush.msra.mxu0 0.0
  %1978 = vmatpush.msra.mxu0 0.0
  %1979 = vmatpush.msra.mxu0 0.0
  %1980 = vmatpush.msra.mxu0 0.0
  %1981 = vmatpush.msra.mxu0 0.0
  %1982 = vmatpush.msra.mxu0 0.0
  %1983 = vmatpush.msra.mxu0 0.0
  %1984 = vmatpush.msra.mxu0 %v607
  %1985 = vmatpush.msra.mxu0 %v605
  %1986 = vmatpush.msra.mxu0 %v603
  %1987 = vmatpush.msra.mxu0 %v601
  %1988 = vmatpush.msra.mxu0 %v599
  %1989 = vmatmul.f32.gmra.mxu0 %v1971
  %v1990 = vpop.f32.mrf.mxu0
  %v1991 = vadd.f32 0.0, %v1990
  %1992 = vdwg.mxu0
  %1993 = vmatpush.msra.mxu0 0.0
  %1994 = vmatpush.msra.mxu0 0.0
  %1995 = vmatpush.msra.mxu0 0.0
  %1996 = vmatpush.msra.mxu0 0.0
  %1997 = vmatpush.msra.mxu0 0.0
  %1998 = vmatpush.msra.mxu0 0.0
  %1999 = vmatpush.msra.mxu0 0.0
  %2000 = vmatpush.msra.mxu0 0.0
  %2001 = vmatpush.msra.mxu0 0.0
  %2002 = vmatpush.msra.mxu0 0.0
  %2003 = vmatpush.msra.mxu0 0.0
  %2004 = vmatpush.msra.mxu0 %v608
  %2005 = vmatpush.msra.mxu0 %v606
  %2006 = vmatpush.msra.mxu0 %v604
  %2007 = vmatpush.msra.mxu0 %v602
  %2008 = vmatpush.msra.mxu0 %v600
  %2009 = vmatmul.f32.gmra.mxu0 %v1971
  %v2010 = vpop.f32.mrf.mxu0
  %v2011 = vadd.f32 0.0, %v2010
  %2012 = vdwg.mxu0
  %v2013 = vadd.f32 %v1969, %v1991
  %v2014 = vadd.f32 %v1970, %v2011
  %v2015 = vxor.u32 %v2013, 2147483648
  %v2016 = vxor.u32 %v2014, 2147483648
  %v2017 = vmul.f32 %v2015, 1.442695
  %v2018 = vpow.pop %v2017
  %v2019 = vmul.f32 %v2016, 1.442695
  %v2020 = vpow.pop %v2019
  %v2021 = vadd.f32 %v2018, 1.0
  %v2022 = vadd.f32 %v2020, 1.0
  %v2023 = vrcp.pop %v2021
  %v2024 = vmul.f32 %v2021, %v2023
  %v2025 = vsub.f32 1.0, %v2024
  %v2026 = vmul.f32 %v2023, %v2025
  %v2027 = vadd.f32 %v2023, %v2026
  %vm2028 = vweird.f32 %v2021
  %vm2029 = vweird.f32 %v2023
  %vm2030 = vmor %vm2028, %vm2029
  %v2031 = vsel %vm2030, %v2023, %v2027
  %v2032 = vand.u32 2147483647, %v2021
  %vm2033 = vcmp.eq.f32.partialorder %v2032, 8.507059e+37
  %v2034 = vand.u32 %v2021, 2147483648
  %v2035 = vor.u32 1.1754944e-38, %v2034
  %v2036 = vsel %vm2033, %v2035, %v2031
  %v2037 = vmul.f32 1.0, %v2036
  %v2038 = vrcp.pop %v2022
  %v2039 = vmul.f32 %v2022, %v2038
  %v2040 = vsub.f32 1.0, %v2039
  %v2041 = vmul.f32 %v2038, %v2040
  %v2042 = vadd.f32 %v2038, %v2041
  %vm2043 = vweird.f32 %v2022
  %vm2044 = vweird.f32 %v2038
  %vm2045 = vmor %vm2043, %vm2044
  %v2046 = vsel %vm2045, %v2038, %v2042
  %v2047 = vand.u32 2147483647, %v2022
  %vm2048 = vcmp.eq.f32.partialorder %v2047, 8.507059e+37
  %v2049 = vand.u32 %v2022, 2147483648
  %v2050 = vor.u32 1.1754944e-38, %v2049
  %v2051 = vsel %vm2048, %v2050, %v2046
  %v2052 = vmul.f32 1.0, %v2051
  %v2053 = vtanh.pop %v2013
  %v2054 = vmul.f32 %v2037, %v1829
  %2056 = vrot.lane.b32.xlu0 %v2053, 48
  %v2057 = vpop.permute.xlu0 %2056
  %v2059 = vmul.f32 %v2037, %v2057
  %2061 = vrot.lane.b32.xlu0 %v2059, 40
  %v2062 = vpop.permute.xlu0 %2061
  %v2064 = vadd.f32 %v2054, %v2062
  %v2065 = vtanh.pop %v2064
  %2067 = vrot.lane.b32.xlu0 %v2065, 80
  %v2068 = vpop.permute.xlu0 %2067
  %v2070 = vmul.f32 %v2037, %v2068
  %v2071 = vmul.f32 %v2052, %v2068
  %2074 = vrot.lane.b32.xlu0 %v2070, 8
  %v2075 = vpop.permute.xlu0 %2074
  %2076 = vrot.lane.b32.xlu0 %v2071, 8
  %v2077 = vpop.permute.xlu0 %2076
  %v2078 = vsel %vm904, %v2075, %v2077
  %2081 = vrot.lane.b32.xlu0 %v1963, 40
  %v2082 = vpop.permute.xlu0 %2081
  %v2084 = vsel %vm648, %v2078, %v2082
  %v2086 = vsel %vm913, %v2084, 0
  %2088 = vmatpush.msra.mxu0 0.0
  %2089 = vmatpush.msra.mxu0 0.0
  %2090 = vmatpush.msra.mxu0 0.0
  %2091 = vmatpush.msra.mxu0 0.0
  %2092 = vmatpush.msra.mxu0 0.0
  %2093 = vmatpush.msra.mxu0 0.0
  %2094 = vmatpush.msra.mxu0 %v627
  %2095 = vmatpush.msra.mxu0 %v625
  %2096 = vmatpush.msra.mxu0 %v623
  %2097 = vmatpush.msra.mxu0 %v621
  %2098 = vmatpush.msra.mxu0 %v619
  %2099 = vmatpush.msra.mxu0 %v617
  %2100 = vmatpush.msra.mxu0 %v615
  %2101 = vmatpush.msra.mxu0 %v613
  %2102 = vmatpush.msra.mxu0 %v611
  %2103 = vmatpush.msra.mxu0 %v609
  %2104 = vmatmul.f32.gmra.mxu0 %v2086
  %v2105 = vpop.f32.mrf.mxu0
  %v2106 = vadd.f32 %v909, %v2105
  %2107 = vdwg.mxu0
  %2108 = vmatpush.msra.mxu0 0.0
  %2109 = vmatpush.msra.mxu0 0.0
  %2110 = vmatpush.msra.mxu0 0.0
  %2111 = vmatpush.msra.mxu0 0.0
  %2112 = vmatpush.msra.mxu0 0.0
  %2113 = vmatpush.msra.mxu0 0.0
  %2114 = vmatpush.msra.mxu0 %v628
  %2115 = vmatpush.msra.mxu0 %v626
  %2116 = vmatpush.msra.mxu0 %v624
  %2117 = vmatpush.msra.mxu0 %v622
  %2118 = vmatpush.msra.mxu0 %v620
  %2119 = vmatpush.msra.mxu0 %v618
  %2120 = vmatpush.msra.mxu0 %v616
  %2121 = vmatpush.msra.mxu0 %v614
  %2122 = vmatpush.msra.mxu0 %v612
  %2123 = vmatpush.msra.mxu0 %v610
  %2124 = vmatmul.f32.gmra.mxu0 %v2086
  %v2125 = vpop.f32.mrf.mxu0
  %v2126 = vadd.f32 %v910, %v2125
  %2127 = vdwg.mxu0
  %v2128 = vxor.u32 %v2106, 2147483648
  %v2129 = vxor.u32 %v2126, 2147483648
  %v2130 = vmul.f32 %v2128, 1.442695
  %v2131 = vpow.pop %v2130
  %v2132 = vmul.f32 %v2129, 1.442695
  %v2133 = vpow.pop %v2132
  %v2134 = vadd.f32 %v2131, 1.0
  %v2135 = vadd.f32 %v2133, 1.0
  %v2136 = vrcp.pop %v2134
  %v2137 = vmul.f32 %v2134, %v2136
  %v2138 = vsub.f32 1.0, %v2137
  %v2139 = vmul.f32 %v2136, %v2138
  %v2140 = vadd.f32 %v2136, %v2139
  %vm2141 = vweird.f32 %v2134
  %vm2142 = vweird.f32 %v2136
  %vm2143 = vmor %vm2141, %vm2142
  %v2144 = vsel %vm2143, %v2136, %v2140
  %v2145 = vand.u32 2147483647, %v2134
  %vm2146 = vcmp.eq.f32.partialorder %v2145, 8.507059e+37
  %v2147 = vand.u32 %v2134, 2147483648
  %v2148 = vor.u32 1.1754944e-38, %v2147
  %v2149 = vsel %vm2146, %v2148, %v2144
  %v2150 = vmul.f32 1.0, %v2149
  %v2151 = vrcp.pop %v2135
  %v2152 = vmul.f32 %v2135, %v2151
  %v2153 = vsub.f32 1.0, %v2152
  %v2154 = vmul.f32 %v2151, %v2153
  %v2155 = vadd.f32 %v2151, %v2154
  %vm2156 = vweird.f32 %v2135
  %vm2157 = vweird.f32 %v2151
  %vm2158 = vmor %vm2156, %vm2157
  %v2159 = vsel %vm2158, %v2151, %v2155
  %v2160 = vand.u32 2147483647, %v2135
  %vm2161 = vcmp.eq.f32.partialorder %v2160, 8.507059e+37
  %v2162 = vand.u32 %v2135, 2147483648
  %v2163 = vor.u32 1.1754944e-38, %v2162
  %v2164 = vsel %vm2161, %v2163, %v2159
  %v2165 = vmul.f32 1.0, %v2164
  %v2166 = vtanh.pop %v2106
  %2168 = vrot.lane.b32.xlu0 %v1968, 40
  %v2169 = vpop.permute.xlu0 %2168
  %v2171 = vmul.f32 %v2150, %v2169
  %2173 = vrot.lane.b32.xlu0 %v2166, 48
  %v2174 = vpop.permute.xlu0 %2173
  %v2176 = vmul.f32 %v2150, %v2174
  %2178 = vrot.lane.b32.xlu0 %v2176, 40
  %v2179 = vpop.permute.xlu0 %2178
  %v2181 = vadd.f32 %v2171, %v2179
  %v2182 = vtanh.pop %v2181
  %2184 = vrot.lane.b32.xlu0 %v2182, 80
  %v2185 = vpop.permute.xlu0 %2184
  %v2187 = vmul.f32 %v2150, %v2185
  %v2188 = vmul.f32 %v2165, %v2185
  %vm2189 = vcmp.gt.s32.totalorder %v632, 5
  %2192 = vrot.lane.b32.xlu0 %v2187, 8
  %v2193 = vpop.permute.xlu0 %2192
  %2194 = vrot.lane.b32.xlu0 %v2188, 8
  %v2195 = vpop.permute.xlu0 %2194
  %v2196 = vsel %vm904, %v2193, %v2195
  %v2198 = vsel %vm2189, %v2196, %v1963
  %2200 = vrot.lane.b32.xlu0 %v2181, 88
  %v2201 = vpop.permute.xlu0 %2200
  %v2203 = vsel %vm2189, %v2201, %v1968
  %v2204 = vld [vmem:[#allocation2 + $0x60] sm:$0xff]
  %v2205 = vld [vmem:[#allocation2 + $0x68] sm:$0xff]
  %v2206 = vsel %vm648, %v2078, 0
  %2208 = vmatpush.msra.mxu0 0.0
  %2209 = vmatpush.msra.mxu0 0.0
  %2210 = vmatpush.msra.mxu0 0.0
  %2211 = vmatpush.msra.mxu0 0.0
  %2212 = vmatpush.msra.mxu0 0.0
  %2213 = vmatpush.msra.mxu0 0.0
  %2214 = vmatpush.msra.mxu0 0.0
  %2215 = vmatpush.msra.mxu0 0.0
  %2216 = vmatpush.msra.mxu0 0.0
  %2217 = vmatpush.msra.mxu0 0.0
  %2218 = vmatpush.msra.mxu0 0.0
  %2219 = vmatpush.msra.mxu0 %v607
  %2220 = vmatpush.msra.mxu0 %v605
  %2221 = vmatpush.msra.mxu0 %v603
  %2222 = vmatpush.msra.mxu0 %v601
  %2223 = vmatpush.msra.mxu0 %v599
  %2224 = vmatmul.f32.gmra.mxu0 %v2206
  %v2225 = vpop.f32.mrf.mxu0
  %v2226 = vadd.f32 0.0, %v2225
  %2227 = vdwg.mxu0
  %2228 = vmatpush.msra.mxu0 0.0
  %2229 = vmatpush.msra.mxu0 0.0
  %2230 = vmatpush.msra.mxu0 0.0
  %2231 = vmatpush.msra.mxu0 0.0
  %2232 = vmatpush.msra.mxu0 0.0
  %2233 = vmatpush.msra.mxu0 0.0
  %2234 = vmatpush.msra.mxu0 0.0
  %2235 = vmatpush.msra.mxu0 0.0
  %2236 = vmatpush.msra.mxu0 0.0
  %2237 = vmatpush.msra.mxu0 0.0
  %2238 = vmatpush.msra.mxu0 0.0
  %2239 = vmatpush.msra.mxu0 %v608
  %2240 = vmatpush.msra.mxu0 %v606
  %2241 = vmatpush.msra.mxu0 %v604
  %2242 = vmatpush.msra.mxu0 %v602
  %2243 = vmatpush.msra.mxu0 %v600
  %2244 = vmatmul.f32.gmra.mxu0 %v2206
  %v2245 = vpop.f32.mrf.mxu0
  %v2246 = vadd.f32 0.0, %v2245
  %2247 = vdwg.mxu0
  %v2248 = vadd.f32 %v2204, %v2226
  %v2249 = vadd.f32 %v2205, %v2246
  %v2250 = vxor.u32 %v2248, 2147483648
  %v2251 = vxor.u32 %v2249, 2147483648
  %v2252 = vmul.f32 %v2250, 1.442695
  %v2253 = vpow.pop %v2252
  %v2254 = vmul.f32 %v2251, 1.442695
  %v2255 = vpow.pop %v2254
  %v2256 = vadd.f32 %v2253, 1.0
  %v2257 = vadd.f32 %v2255, 1.0
  %v2258 = vrcp.pop %v2256
  %v2259 = vmul.f32 %v2256, %v2258
  %v2260 = vsub.f32 1.0, %v2259
  %v2261 = vmul.f32 %v2258, %v2260
  %v2262 = vadd.f32 %v2258, %v2261
  %vm2263 = vweird.f32 %v2256
  %vm2264 = vweird.f32 %v2258
  %vm2265 = vmor %vm2263, %vm2264
  %v2266 = vsel %vm2265, %v2258, %v2262
  %v2267 = vand.u32 2147483647, %v2256
  %vm2268 = vcmp.eq.f32.partialorder %v2267, 8.507059e+37
  %v2269 = vand.u32 %v2256, 2147483648
  %v2270 = vor.u32 1.1754944e-38, %v2269
  %v2271 = vsel %vm2268, %v2270, %v2266
  %v2272 = vmul.f32 1.0, %v2271
  %v2273 = vrcp.pop %v2257
  %v2274 = vmul.f32 %v2257, %v2273
  %v2275 = vsub.f32 1.0, %v2274
  %v2276 = vmul.f32 %v2273, %v2275
  %v2277 = vadd.f32 %v2273, %v2276
  %vm2278 = vweird.f32 %v2257
  %vm2279 = vweird.f32 %v2273
  %vm2280 = vmor %vm2278, %vm2279
  %v2281 = vsel %vm2280, %v2273, %v2277
  %v2282 = vand.u32 2147483647, %v2257
  %vm2283 = vcmp.eq.f32.partialorder %v2282, 8.507059e+37
  %v2284 = vand.u32 %v2257, 2147483648
  %v2285 = vor.u32 1.1754944e-38, %v2284
  %v2286 = vsel %vm2283, %v2285, %v2281
  %v2287 = vmul.f32 1.0, %v2286
  %v2288 = vtanh.pop %v2248
  %v2289 = vmul.f32 %v2272, %v2064
  %2291 = vrot.lane.b32.xlu0 %v2288, 48
  %v2292 = vpop.permute.xlu0 %2291
  %v2294 = vmul.f32 %v2272, %v2292
  %2296 = vrot.lane.b32.xlu0 %v2294, 40
  %v2297 = vpop.permute.xlu0 %2296
  %v2299 = vadd.f32 %v2289, %v2297
  %v2300 = vtanh.pop %v2299
  %2302 = vrot.lane.b32.xlu0 %v2300, 80
  %v2303 = vpop.permute.xlu0 %2302
  %v2305 = vmul.f32 %v2272, %v2303
  %v2306 = vmul.f32 %v2287, %v2303
  %2309 = vrot.lane.b32.xlu0 %v2305, 8
  %v2310 = vpop.permute.xlu0 %2309
  %2311 = vrot.lane.b32.xlu0 %v2306, 8
  %v2312 = vpop.permute.xlu0 %2311
  %v2313 = vsel %vm904, %v2310, %v2312
  %2316 = vrot.lane.b32.xlu0 %v2198, 40
  %v2317 = vpop.permute.xlu0 %2316
  %v2319 = vsel %vm648, %v2313, %v2317
  %v2321 = vsel %vm913, %v2319, 0
  %2323 = vmatpush.msra.mxu0 0.0
  %2324 = vmatpush.msra.mxu0 0.0
  %2325 = vmatpush.msra.mxu0 0.0
  %2326 = vmatpush.msra.mxu0 0.0
  %2327 = vmatpush.msra.mxu0 0.0
  %2328 = vmatpush.msra.mxu0 0.0
  %2329 = vmatpush.msra.mxu0 %v627
  %2330 = vmatpush.msra.mxu0 %v625
  %2331 = vmatpush.msra.mxu0 %v623
  %2332 = vmatpush.msra.mxu0 %v621
  %2333 = vmatpush.msra.mxu0 %v619
  %2334 = vmatpush.msra.mxu0 %v617
  %2335 = vmatpush.msra.mxu0 %v615
  %2336 = vmatpush.msra.mxu0 %v613
  %2337 = vmatpush.msra.mxu0 %v611
  %2338 = vmatpush.msra.mxu0 %v609
  %2339 = vmatmul.f32.gmra.mxu0 %v2321
  %v2340 = vpop.f32.mrf.mxu0
  %v2341 = vadd.f32 %v909, %v2340
  %2342 = vdwg.mxu0
  %2343 = vmatpush.msra.mxu0 0.0
  %2344 = vmatpush.msra.mxu0 0.0
  %2345 = vmatpush.msra.mxu0 0.0
  %2346 = vmatpush.msra.mxu0 0.0
  %2347 = vmatpush.msra.mxu0 0.0
  %2348 = vmatpush.msra.mxu0 0.0
  %2349 = vmatpush.msra.mxu0 %v628
  %2350 = vmatpush.msra.mxu0 %v626
  %2351 = vmatpush.msra.mxu0 %v624
  %2352 = vmatpush.msra.mxu0 %v622
  %2353 = vmatpush.msra.mxu0 %v620
  %2354 = vmatpush.msra.mxu0 %v618
  %2355 = vmatpush.msra.mxu0 %v616
  %2356 = vmatpush.msra.mxu0 %v614
  %2357 = vmatpush.msra.mxu0 %v612
  %2358 = vmatpush.msra.mxu0 %v610
  %2359 = vmatmul.f32.gmra.mxu0 %v2321
  %v2360 = vpop.f32.mrf.mxu0
  %v2361 = vadd.f32 %v910, %v2360
  %2362 = vdwg.mxu0
  %v2363 = vxor.u32 %v2341, 2147483648
  %v2364 = vxor.u32 %v2361, 2147483648
  %v2365 = vmul.f32 %v2363, 1.442695
  %v2366 = vpow.pop %v2365
  %v2367 = vmul.f32 %v2364, 1.442695
  %v2368 = vpow.pop %v2367
  %v2369 = vadd.f32 %v2366, 1.0
  %v2370 = vadd.f32 %v2368, 1.0
  %v2371 = vrcp.pop %v2369
  %v2372 = vmul.f32 %v2369, %v2371
  %v2373 = vsub.f32 1.0, %v2372
  %v2374 = vmul.f32 %v2371, %v2373
  %v2375 = vadd.f32 %v2371, %v2374
  %vm2376 = vweird.f32 %v2369
  %vm2377 = vweird.f32 %v2371
  %vm2378 = vmor %vm2376, %vm2377
  %v2379 = vsel %vm2378, %v2371, %v2375
  %v2380 = vand.u32 2147483647, %v2369
  %vm2381 = vcmp.eq.f32.partialorder %v2380, 8.507059e+37
  %v2382 = vand.u32 %v2369, 2147483648
  %v2383 = vor.u32 1.1754944e-38, %v2382
  %v2384 = vsel %vm2381, %v2383, %v2379
  %v2385 = vmul.f32 1.0, %v2384
  %v2386 = vrcp.pop %v2370
  %v2387 = vmul.f32 %v2370, %v2386
  %v2388 = vsub.f32 1.0, %v2387
  %v2389 = vmul.f32 %v2386, %v2388
  %v2390 = vadd.f32 %v2386, %v2389
  %vm2391 = vweird.f32 %v2370
  %vm2392 = vweird.f32 %v2386
  %vm2393 = vmor %vm2391, %vm2392
  %v2394 = vsel %vm2393, %v2386, %v2390
  %v2395 = vand.u32 2147483647, %v2370
  %vm2396 = vcmp.eq.f32.partialorder %v2395, 8.507059e+37
  %v2397 = vand.u32 %v2370, 2147483648
  %v2398 = vor.u32 1.1754944e-38, %v2397
  %v2399 = vsel %vm2396, %v2398, %v2394
  %v2400 = vmul.f32 1.0, %v2399
  %v2401 = vtanh.pop %v2341
  %2403 = vrot.lane.b32.xlu0 %v2203, 40
  %v2404 = vpop.permute.xlu0 %2403
  %v2406 = vmul.f32 %v2385, %v2404
  %2408 = vrot.lane.b32.xlu0 %v2401, 48
  %v2409 = vpop.permute.xlu0 %2408
  %v2411 = vmul.f32 %v2385, %v2409
  %2413 = vrot.lane.b32.xlu0 %v2411, 40
  %v2414 = vpop.permute.xlu0 %2413
  %v2416 = vadd.f32 %v2406, %v2414
  %v2417 = vtanh.pop %v2416
  %2419 = vrot.lane.b32.xlu0 %v2417, 80
  %v2420 = vpop.permute.xlu0 %2419
  %v2422 = vmul.f32 %v2385, %v2420
  %v2423 = vmul.f32 %v2400, %v2420
  %vm2424 = vcmp.gt.s32.totalorder %v632, 6
  %2427 = vrot.lane.b32.xlu0 %v2422, 8
  %v2428 = vpop.permute.xlu0 %2427
  %2429 = vrot.lane.b32.xlu0 %v2423, 8
  %v2430 = vpop.permute.xlu0 %2429
  %v2431 = vsel %vm904, %v2428, %v2430
  %v2433 = vsel %vm2424, %v2431, %v2198
  %2435 = vrot.lane.b32.xlu0 %v2416, 88
  %v2436 = vpop.permute.xlu0 %2435
  %v2438 = vsel %vm2424, %v2436, %v2203
  %v2439 = vld [vmem:[#allocation2 + $0x70] sm:$0xff]
  %v2440 = vld [vmem:[#allocation2 + $0x78] sm:$0xff]
  %v2441 = vsel %vm648, %v2313, 0
  %2443 = vmatpush.msra.mxu0 0.0
  %2444 = vmatpush.msra.mxu0 0.0
  %2445 = vmatpush.msra.mxu0 0.0
  %2446 = vmatpush.msra.mxu0 0.0
  %2447 = vmatpush.msra.mxu0 0.0
  %2448 = vmatpush.msra.mxu0 0.0
  %2449 = vmatpush.msra.mxu0 0.0
  %2450 = vmatpush.msra.mxu0 0.0
  %2451 = vmatpush.msra.mxu0 0.0
  %2452 = vmatpush.msra.mxu0 0.0
  %2453 = vmatpush.msra.mxu0 0.0
  %2454 = vmatpush.msra.mxu0 %v607
  %2455 = vmatpush.msra.mxu0 %v605
  %2456 = vmatpush.msra.mxu0 %v603
  %2457 = vmatpush.msra.mxu0 %v601
  %2458 = vmatpush.msra.mxu0 %v599
  %2459 = vmatmul.f32.gmra.mxu0 %v2441
  %v2460 = vpop.f32.mrf.mxu0
  %v2461 = vadd.f32 0.0, %v2460
  %2462 = vdwg.mxu0
  %2463 = vmatpush.msra.mxu0 0.0
  %2464 = vmatpush.msra.mxu0 0.0
  %2465 = vmatpush.msra.mxu0 0.0
  %2466 = vmatpush.msra.mxu0 0.0
  %2467 = vmatpush.msra.mxu0 0.0
  %2468 = vmatpush.msra.mxu0 0.0
  %2469 = vmatpush.msra.mxu0 0.0
  %2470 = vmatpush.msra.mxu0 0.0
  %2471 = vmatpush.msra.mxu0 0.0
  %2472 = vmatpush.msra.mxu0 0.0
  %2473 = vmatpush.msra.mxu0 0.0
  %2474 = vmatpush.msra.mxu0 %v608
  %2475 = vmatpush.msra.mxu0 %v606
  %2476 = vmatpush.msra.mxu0 %v604
  %2477 = vmatpush.msra.mxu0 %v602
  %2478 = vmatpush.msra.mxu0 %v600
  %2479 = vmatmul.f32.gmra.mxu0 %v2441
  %v2480 = vpop.f32.mrf.mxu0
  %v2481 = vadd.f32 0.0, %v2480
  %2482 = vdwg.mxu0
  %v2483 = vadd.f32 %v2439, %v2461
  %v2484 = vadd.f32 %v2440, %v2481
  %v2485 = vxor.u32 %v2483, 2147483648
  %v2486 = vxor.u32 %v2484, 2147483648
  %v2487 = vmul.f32 %v2485, 1.442695
  %v2488 = vpow.pop %v2487
  %v2489 = vmul.f32 %v2486, 1.442695
  %v2490 = vpow.pop %v2489
  %v2491 = vadd.f32 %v2488, 1.0
  %v2492 = vadd.f32 %v2490, 1.0
  %v2493 = vrcp.pop %v2491
  %v2494 = vmul.f32 %v2491, %v2493
  %v2495 = vsub.f32 1.0, %v2494
  %v2496 = vmul.f32 %v2493, %v2495
  %v2497 = vadd.f32 %v2493, %v2496
  %vm2498 = vweird.f32 %v2491
  %vm2499 = vweird.f32 %v2493
  %vm2500 = vmor %vm2498, %vm2499
  %v2501 = vsel %vm2500, %v2493, %v2497
  %v2502 = vand.u32 2147483647, %v2491
  %vm2503 = vcmp.eq.f32.partialorder %v2502, 8.507059e+37
  %v2504 = vand.u32 %v2491, 2147483648
  %v2505 = vor.u32 1.1754944e-38, %v2504
  %v2506 = vsel %vm2503, %v2505, %v2501
  %v2507 = vmul.f32 1.0, %v2506
  %v2508 = vrcp.pop %v2492
  %v2509 = vmul.f32 %v2492, %v2508
  %v2510 = vsub.f32 1.0, %v2509
  %v2511 = vmul.f32 %v2508, %v2510
  %v2512 = vadd.f32 %v2508, %v2511
  %vm2513 = vweird.f32 %v2492
  %vm2514 = vweird.f32 %v2508
  %vm2515 = vmor %vm2513, %vm2514
  %v2516 = vsel %vm2515, %v2508, %v2512
  %v2517 = vand.u32 2147483647, %v2492
  %vm2518 = vcmp.eq.f32.partialorder %v2517, 8.507059e+37
  %v2519 = vand.u32 %v2492, 2147483648
  %v2520 = vor.u32 1.1754944e-38, %v2519
  %v2521 = vsel %vm2518, %v2520, %v2516
  %v2522 = vmul.f32 1.0, %v2521
  %v2523 = vtanh.pop %v2483
  %v2524 = vmul.f32 %v2507, %v2299
  %2526 = vrot.lane.b32.xlu0 %v2523, 48
  %v2527 = vpop.permute.xlu0 %2526
  %v2529 = vmul.f32 %v2507, %v2527
  %2531 = vrot.lane.b32.xlu0 %v2529, 40
  %v2532 = vpop.permute.xlu0 %2531
  %v2534 = vadd.f32 %v2524, %v2532
  %v2535 = vtanh.pop %v2534
  %2537 = vrot.lane.b32.xlu0 %v2535, 80
  %v2538 = vpop.permute.xlu0 %2537
  %v2540 = vmul.f32 %v2507, %v2538
  %v2541 = vmul.f32 %v2522, %v2538
  %2544 = vrot.lane.b32.xlu0 %v2540, 8
  %v2545 = vpop.permute.xlu0 %2544
  %2546 = vrot.lane.b32.xlu0 %v2541, 8
  %v2547 = vpop.permute.xlu0 %2546
  %v2548 = vsel %vm904, %v2545, %v2547
  %2551 = vrot.lane.b32.xlu0 %v2433, 40
  %v2552 = vpop.permute.xlu0 %2551
  %v2554 = vsel %vm648, %v2548, %v2552
  %v2556 = vsel %vm913, %v2554, 0
  %2558 = vmatpush.msra.mxu0 0.0
  %2559 = vmatpush.msra.mxu0 0.0
  %2560 = vmatpush.msra.mxu0 0.0
  %2561 = vmatpush.msra.mxu0 0.0
  %2562 = vmatpush.msra.mxu0 0.0
  %2563 = vmatpush.msra.mxu0 0.0
  %2564 = vmatpush.msra.mxu0 %v627
  %2565 = vmatpush.msra.mxu0 %v625
  %2566 = vmatpush.msra.mxu0 %v623
  %2567 = vmatpush.msra.mxu0 %v621
  %2568 = vmatpush.msra.mxu0 %v619
  %2569 = vmatpush.msra.mxu0 %v617
  %2570 = vmatpush.msra.mxu0 %v615
  %2571 = vmatpush.msra.mxu0 %v613
  %2572 = vmatpush.msra.mxu0 %v611
  %2573 = vmatpush.msra.mxu0 %v609
  %2574 = vmatmul.f32.gmra.mxu0 %v2556
  %v2575 = vpop.f32.mrf.mxu0
  %v2576 = vadd.f32 %v909, %v2575
  %2577 = vdwg.mxu0
  %2578 = vmatpush.msra.mxu0 0.0
  %2579 = vmatpush.msra.mxu0 0.0
  %2580 = vmatpush.msra.mxu0 0.0
  %2581 = vmatpush.msra.mxu0 0.0
  %2582 = vmatpush.msra.mxu0 0.0
  %2583 = vmatpush.msra.mxu0 0.0
  %2584 = vmatpush.msra.mxu0 %v628
  %2585 = vmatpush.msra.mxu0 %v626
  %2586 = vmatpush.msra.mxu0 %v624
  %2587 = vmatpush.msra.mxu0 %v622
  %2588 = vmatpush.msra.mxu0 %v620
  %2589 = vmatpush.msra.mxu0 %v618
  %2590 = vmatpush.msra.mxu0 %v616
  %2591 = vmatpush.msra.mxu0 %v614
  %2592 = vmatpush.msra.mxu0 %v612
  %2593 = vmatpush.msra.mxu0 %v610
  %2594 = vmatmul.f32.gmra.mxu0 %v2556
  %v2595 = vpop.f32.mrf.mxu0
  %v2596 = vadd.f32 %v910, %v2595
  %2597 = vdwg.mxu0
  %v2598 = vxor.u32 %v2576, 2147483648
  %v2599 = vxor.u32 %v2596, 2147483648
  %v2600 = vmul.f32 %v2598, 1.442695
  %v2601 = vpow.pop %v2600
  %v2602 = vmul.f32 %v2599, 1.442695
  %v2603 = vpow.pop %v2602
  %v2604 = vadd.f32 %v2601, 1.0
  %v2605 = vadd.f32 %v2603, 1.0
  %v2606 = vrcp.pop %v2604
  %v2607 = vmul.f32 %v2604, %v2606
  %v2608 = vsub.f32 1.0, %v2607
  %v2609 = vmul.f32 %v2606, %v2608
  %v2610 = vadd.f32 %v2606, %v2609
  %vm2611 = vweird.f32 %v2604
  %vm2612 = vweird.f32 %v2606
  %vm2613 = vmor %vm2611, %vm2612
  %v2614 = vsel %vm2613, %v2606, %v2610
  %v2615 = vand.u32 2147483647, %v2604
  %vm2616 = vcmp.eq.f32.partialorder %v2615, 8.507059e+37
  %v2617 = vand.u32 %v2604, 2147483648
  %v2618 = vor.u32 1.1754944e-38, %v2617
  %v2619 = vsel %vm2616, %v2618, %v2614
  %v2620 = vmul.f32 1.0, %v2619
  %v2621 = vrcp.pop %v2605
  %v2622 = vmul.f32 %v2605, %v2621
  %v2623 = vsub.f32 1.0, %v2622
  %v2624 = vmul.f32 %v2621, %v2623
  %v2625 = vadd.f32 %v2621, %v2624
  %vm2626 = vweird.f32 %v2605
  %vm2627 = vweird.f32 %v2621
  %vm2628 = vmor %vm2626, %vm2627
  %v2629 = vsel %vm2628, %v2621, %v2625
  %v2630 = vand.u32 2147483647, %v2605
  %vm2631 = vcmp.eq.f32.partialorder %v2630, 8.507059e+37
  %v2632 = vand.u32 %v2605, 2147483648
  %v2633 = vor.u32 1.1754944e-38, %v2632
  %v2634 = vsel %vm2631, %v2633, %v2629
  %v2635 = vmul.f32 1.0, %v2634
  %v2636 = vtanh.pop %v2576
  %2638 = vrot.lane.b32.xlu0 %v2438, 40
  %v2639 = vpop.permute.xlu0 %2638
  %v2641 = vmul.f32 %v2620, %v2639
  %2643 = vrot.lane.b32.xlu0 %v2636, 48
  %v2644 = vpop.permute.xlu0 %2643
  %v2646 = vmul.f32 %v2620, %v2644
  %2648 = vrot.lane.b32.xlu0 %v2646, 40
  %v2649 = vpop.permute.xlu0 %2648
  %v2651 = vadd.f32 %v2641, %v2649
  %v2652 = vtanh.pop %v2651
  %2654 = vrot.lane.b32.xlu0 %v2652, 80
  %v2655 = vpop.permute.xlu0 %2654
  %v2657 = vmul.f32 %v2620, %v2655
  %v2658 = vmul.f32 %v2635, %v2655
  %vm2659 = vcmp.gt.s32.totalorder %v632, 7
  %2662 = vrot.lane.b32.xlu0 %v2657, 8
  %v2663 = vpop.permute.xlu0 %2662
  %2664 = vrot.lane.b32.xlu0 %v2658, 8
  %v2665 = vpop.permute.xlu0 %2664
  %v2666 = vsel %vm904, %v2663, %v2665
  %v2668 = vsel %vm2659, %v2666, %v2433
  %2670 = vrot.lane.b32.xlu0 %v2651, 88
  %v2671 = vpop.permute.xlu0 %2670
  %v2673 = vsel %vm2659, %v2671, %v2438
  %v2674 = vld [vmem:[#allocation2 + $0x80] sm:$0xff]
  %v2675 = vld [vmem:[#allocation2 + $0x88] sm:$0xff]
  %v2676 = vsel %vm648, %v2548, 0
  %2678 = vmatpush.msra.mxu0 0.0
  %2679 = vmatpush.msra.mxu0 0.0
  %2680 = vmatpush.msra.mxu0 0.0
  %2681 = vmatpush.msra.mxu0 0.0
  %2682 = vmatpush.msra.mxu0 0.0
  %2683 = vmatpush.msra.mxu0 0.0
  %2684 = vmatpush.msra.mxu0 0.0
  %2685 = vmatpush.msra.mxu0 0.0
  %2686 = vmatpush.msra.mxu0 0.0
  %2687 = vmatpush.msra.mxu0 0.0
  %2688 = vmatpush.msra.mxu0 0.0
  %2689 = vmatpush.msra.mxu0 %v607
  %2690 = vmatpush.msra.mxu0 %v605
  %2691 = vmatpush.msra.mxu0 %v603
  %2692 = vmatpush.msra.mxu0 %v601
  %2693 = vmatpush.msra.mxu0 %v599
  %2694 = vmatmul.f32.gmra.mxu0 %v2676
  %v2695 = vpop.f32.mrf.mxu0
  %v2696 = vadd.f32 0.0, %v2695
  %2697 = vdwg.mxu0
  %2698 = vmatpush.msra.mxu0 0.0
  %2699 = vmatpush.msra.mxu0 0.0
  %2700 = vmatpush.msra.mxu0 0.0
  %2701 = vmatpush.msra.mxu0 0.0
  %2702 = vmatpush.msra.mxu0 0.0
  %2703 = vmatpush.msra.mxu0 0.0
  %2704 = vmatpush.msra.mxu0 0.0
  %2705 = vmatpush.msra.mxu0 0.0
  %2706 = vmatpush.msra.mxu0 0.0
  %2707 = vmatpush.msra.mxu0 0.0
  %2708 = vmatpush.msra.mxu0 0.0
  %2709 = vmatpush.msra.mxu0 %v608
  %2710 = vmatpush.msra.mxu0 %v606
  %2711 = vmatpush.msra.mxu0 %v604
  %2712 = vmatpush.msra.mxu0 %v602
  %2713 = vmatpush.msra.mxu0 %v600
  %2714 = vmatmul.f32.gmra.mxu0 %v2676
  %v2715 = vpop.f32.mrf.mxu0
  %v2716 = vadd.f32 0.0, %v2715
  %2717 = vdwg.mxu0
  %v2718 = vadd.f32 %v2674, %v2696
  %v2719 = vadd.f32 %v2675, %v2716
  %v2720 = vxor.u32 %v2718, 2147483648
  %v2721 = vxor.u32 %v2719, 2147483648
  %v2722 = vmul.f32 %v2720, 1.442695
  %v2723 = vpow.pop %v2722
  %v2724 = vmul.f32 %v2721, 1.442695
  %v2725 = vpow.pop %v2724
  %v2726 = vadd.f32 %v2723, 1.0
  %v2727 = vadd.f32 %v2725, 1.0
  %v2728 = vrcp.pop %v2726
  %v2729 = vmul.f32 %v2726, %v2728
  %v2730 = vsub.f32 1.0, %v2729
  %v2731 = vmul.f32 %v2728, %v2730
  %v2732 = vadd.f32 %v2728, %v2731
  %vm2733 = vweird.f32 %v2726
  %vm2734 = vweird.f32 %v2728
  %vm2735 = vmor %vm2733, %vm2734
  %v2736 = vsel %vm2735, %v2728, %v2732
  %v2737 = vand.u32 2147483647, %v2726
  %vm2738 = vcmp.eq.f32.partialorder %v2737, 8.507059e+37
  %v2739 = vand.u32 %v2726, 2147483648
  %v2740 = vor.u32 1.1754944e-38, %v2739
  %v2741 = vsel %vm2738, %v2740, %v2736
  %v2742 = vmul.f32 1.0, %v2741
  %v2743 = vrcp.pop %v2727
  %v2744 = vmul.f32 %v2727, %v2743
  %v2745 = vsub.f32 1.0, %v2744
  %v2746 = vmul.f32 %v2743, %v2745
  %v2747 = vadd.f32 %v2743, %v2746
  %vm2748 = vweird.f32 %v2727
  %vm2749 = vweird.f32 %v2743
  %vm2750 = vmor %vm2748, %vm2749
  %v2751 = vsel %vm2750, %v2743, %v2747
  %v2752 = vand.u32 2147483647, %v2727
  %vm2753 = vcmp.eq.f32.partialorder %v2752, 8.507059e+37
  %v2754 = vand.u32 %v2727, 2147483648
  %v2755 = vor.u32 1.1754944e-38, %v2754
  %v2756 = vsel %vm2753, %v2755, %v2751
  %v2757 = vmul.f32 1.0, %v2756
  %v2758 = vtanh.pop %v2718
  %v2759 = vmul.f32 %v2742, %v2534
  %2761 = vrot.lane.b32.xlu0 %v2758, 48
  %v2762 = vpop.permute.xlu0 %2761
  %v2764 = vmul.f32 %v2742, %v2762
  %2766 = vrot.lane.b32.xlu0 %v2764, 40
  %v2767 = vpop.permute.xlu0 %2766
  %v2769 = vadd.f32 %v2759, %v2767
  %v2770 = vtanh.pop %v2769
  %2772 = vrot.lane.b32.xlu0 %v2770, 80
  %v2773 = vpop.permute.xlu0 %2772
  %v2775 = vmul.f32 %v2742, %v2773
  %v2776 = vmul.f32 %v2757, %v2773
  %2779 = vrot.lane.b32.xlu0 %v2775, 8
  %v2780 = vpop.permute.xlu0 %2779
  %2781 = vrot.lane.b32.xlu0 %v2776, 8
  %v2782 = vpop.permute.xlu0 %2781
  %v2783 = vsel %vm904, %v2780, %v2782
  %2786 = vrot.lane.b32.xlu0 %v2668, 40
  %v2787 = vpop.permute.xlu0 %2786
  %v2789 = vsel %vm648, %v2783, %v2787
  %v2791 = vsel %vm913, %v2789, 0
  %2793 = vmatpush.msra.mxu0 0.0
  %2794 = vmatpush.msra.mxu0 0.0
  %2795 = vmatpush.msra.mxu0 0.0
  %2796 = vmatpush.msra.mxu0 0.0
  %2797 = vmatpush.msra.mxu0 0.0
  %2798 = vmatpush.msra.mxu0 0.0
  %2799 = vmatpush.msra.mxu0 %v627
  %2800 = vmatpush.msra.mxu0 %v625
  %2801 = vmatpush.msra.mxu0 %v623
  %2802 = vmatpush.msra.mxu0 %v621
  %2803 = vmatpush.msra.mxu0 %v619
  %2804 = vmatpush.msra.mxu0 %v617
  %2805 = vmatpush.msra.mxu0 %v615
  %2806 = vmatpush.msra.mxu0 %v613
  %2807 = vmatpush.msra.mxu0 %v611
  %2808 = vmatpush.msra.mxu0 %v609
  %2809 = vmatmul.f32.gmra.mxu0 %v2791
  %v2810 = vpop.f32.mrf.mxu0
  %v2811 = vadd.f32 %v909, %v2810
  %2812 = vdwg.mxu0
  %2813 = vmatpush.msra.mxu0 0.0
  %2814 = vmatpush.msra.mxu0 0.0
  %2815 = vmatpush.msra.mxu0 0.0
  %2816 = vmatpush.msra.mxu0 0.0
  %2817 = vmatpush.msra.mxu0 0.0
  %2818 = vmatpush.msra.mxu0 0.0
  %2819 = vmatpush.msra.mxu0 %v628
  %2820 = vmatpush.msra.mxu0 %v626
  %2821 = vmatpush.msra.mxu0 %v624
  %2822 = vmatpush.msra.mxu0 %v622
  %2823 = vmatpush.msra.mxu0 %v620
  %2824 = vmatpush.msra.mxu0 %v618
  %2825 = vmatpush.msra.mxu0 %v616
  %2826 = vmatpush.msra.mxu0 %v614
  %2827 = vmatpush.msra.mxu0 %v612
  %2828 = vmatpush.msra.mxu0 %v610
  %2829 = vmatmul.f32.gmra.mxu0 %v2791
  %v2830 = vpop.f32.mrf.mxu0
  %v2831 = vadd.f32 %v910, %v2830
  %2832 = vdwg.mxu0
  %v2833 = vxor.u32 %v2811, 2147483648
  %v2834 = vxor.u32 %v2831, 2147483648
  %v2835 = vmul.f32 %v2833, 1.442695
  %v2836 = vpow.pop %v2835
  %v2837 = vmul.f32 %v2834, 1.442695
  %v2838 = vpow.pop %v2837
  %v2839 = vadd.f32 %v2836, 1.0
  %v2840 = vadd.f32 %v2838, 1.0
  %v2841 = vrcp.pop %v2839
  %v2842 = vmul.f32 %v2839, %v2841
  %v2843 = vsub.f32 1.0, %v2842
  %v2844 = vmul.f32 %v2841, %v2843
  %v2845 = vadd.f32 %v2841, %v2844
  %vm2846 = vweird.f32 %v2839
  %vm2847 = vweird.f32 %v2841
  %vm2848 = vmor %vm2846, %vm2847
  %v2849 = vsel %vm2848, %v2841, %v2845
  %v2850 = vand.u32 2147483647, %v2839
  %vm2851 = vcmp.eq.f32.partialorder %v2850, 8.507059e+37
  %v2852 = vand.u32 %v2839, 2147483648
  %v2853 = vor.u32 1.1754944e-38, %v2852
  %v2854 = vsel %vm2851, %v2853, %v2849
  %v2855 = vmul.f32 1.0, %v2854
  %v2856 = vrcp.pop %v2840
  %v2857 = vmul.f32 %v2840, %v2856
  %v2858 = vsub.f32 1.0, %v2857
  %v2859 = vmul.f32 %v2856, %v2858
  %v2860 = vadd.f32 %v2856, %v2859
  %vm2861 = vweird.f32 %v2840
  %vm2862 = vweird.f32 %v2856
  %vm2863 = vmor %vm2861, %vm2862
  %v2864 = vsel %vm2863, %v2856, %v2860
  %v2865 = vand.u32 2147483647, %v2840
  %vm2866 = vcmp.eq.f32.partialorder %v2865, 8.507059e+37
  %v2867 = vand.u32 %v2840, 2147483648
  %v2868 = vor.u32 1.1754944e-38, %v2867
  %v2869 = vsel %vm2866, %v2868, %v2864
  %v2870 = vmul.f32 1.0, %v2869
  %v2871 = vtanh.pop %v2811
  %2873 = vrot.lane.b32.xlu0 %v2673, 40
  %v2874 = vpop.permute.xlu0 %2873
  %v2876 = vmul.f32 %v2855, %v2874
  %2878 = vrot.lane.b32.xlu0 %v2871, 48
  %v2879 = vpop.permute.xlu0 %2878
  %v2881 = vmul.f32 %v2855, %v2879
  %2883 = vrot.lane.b32.xlu0 %v2881, 40
  %v2884 = vpop.permute.xlu0 %2883
  %v2886 = vadd.f32 %v2876, %v2884
  %v2887 = vtanh.pop %v2886
  %2889 = vrot.lane.b32.xlu0 %v2887, 80
  %v2890 = vpop.permute.xlu0 %2889
  %v2892 = vmul.f32 %v2855, %v2890
  %v2893 = vmul.f32 %v2870, %v2890
  %vm2894 = vcmp.gt.s32.totalorder %v632, 8
  %2897 = vrot.lane.b32.xlu0 %v2892, 8
  %v2898 = vpop.permute.xlu0 %2897
  %2899 = vrot.lane.b32.xlu0 %v2893, 8
  %v2900 = vpop.permute.xlu0 %2899
  %v2901 = vsel %vm904, %v2898, %v2900
  %v2903 = vsel %vm2894, %v2901, %v2668
  %2905 = vrot.lane.b32.xlu0 %v2886, 88
  %v2906 = vpop.permute.xlu0 %2905
  %v2908 = vsel %vm2894, %v2906, %v2673
  %v2909 = vld [vmem:[#allocation2 + $0x90] sm:$0xff]
  %v2910 = vld [vmem:[#allocation2 + $0x98] sm:$0xff]
  %v2911 = vsel %vm648, %v2783, 0
  %2913 = vmatpush.msra.mxu0 0.0
  %2914 = vmatpush.msra.mxu0 0.0
  %2915 = vmatpush.msra.mxu0 0.0
  %2916 = vmatpush.msra.mxu0 0.0
  %2917 = vmatpush.msra.mxu0 0.0
  %2918 = vmatpush.msra.mxu0 0.0
  %2919 = vmatpush.msra.mxu0 0.0
  %2920 = vmatpush.msra.mxu0 0.0
  %2921 = vmatpush.msra.mxu0 0.0
  %2922 = vmatpush.msra.mxu0 0.0
  %2923 = vmatpush.msra.mxu0 0.0
  %2924 = vmatpush.msra.mxu0 %v607
  %2925 = vmatpush.msra.mxu0 %v605
  %2926 = vmatpush.msra.mxu0 %v603
  %2927 = vmatpush.msra.mxu0 %v601
  %2928 = vmatpush.msra.mxu0 %v599
  %2929 = vmatmul.f32.gmra.mxu0 %v2911
  %v2930 = vpop.f32.mrf.mxu0
  %v2931 = vadd.f32 0.0, %v2930
  %2932 = vdwg.mxu0
  %2933 = vmatpush.msra.mxu0 0.0
  %2934 = vmatpush.msra.mxu0 0.0
  %2935 = vmatpush.msra.mxu0 0.0
  %2936 = vmatpush.msra.mxu0 0.0
  %2937 = vmatpush.msra.mxu0 0.0
  %2938 = vmatpush.msra.mxu0 0.0
  %2939 = vmatpush.msra.mxu0 0.0
  %2940 = vmatpush.msra.mxu0 0.0
  %2941 = vmatpush.msra.mxu0 0.0
  %2942 = vmatpush.msra.mxu0 0.0
  %2943 = vmatpush.msra.mxu0 0.0
  %2944 = vmatpush.msra.mxu0 %v608
  %2945 = vmatpush.msra.mxu0 %v606
  %2946 = vmatpush.msra.mxu0 %v604
  %2947 = vmatpush.msra.mxu0 %v602
  %2948 = vmatpush.msra.mxu0 %v600
  %2949 = vmatmul.f32.gmra.mxu0 %v2911
  %v2950 = vpop.f32.mrf.mxu0
  %v2951 = vadd.f32 0.0, %v2950
  %2952 = vdwg.mxu0
  %v2953 = vadd.f32 %v2909, %v2931
  %v2954 = vadd.f32 %v2910, %v2951
  %v2955 = vxor.u32 %v2953, 2147483648
  %v2956 = vxor.u32 %v2954, 2147483648
  %v2957 = vmul.f32 %v2955, 1.442695
  %v2958 = vpow.pop %v2957
  %v2959 = vmul.f32 %v2956, 1.442695
  %v2960 = vpow.pop %v2959
  %v2961 = vadd.f32 %v2958, 1.0
  %v2962 = vadd.f32 %v2960, 1.0
  %v2963 = vrcp.pop %v2961
  %v2964 = vmul.f32 %v2961, %v2963
  %v2965 = vsub.f32 1.0, %v2964
  %v2966 = vmul.f32 %v2963, %v2965
  %v2967 = vadd.f32 %v2963, %v2966
  %vm2968 = vweird.f32 %v2961
  %vm2969 = vweird.f32 %v2963
  %vm2970 = vmor %vm2968, %vm2969
  %v2971 = vsel %vm2970, %v2963, %v2967
  %v2972 = vand.u32 2147483647, %v2961
  %vm2973 = vcmp.eq.f32.partialorder %v2972, 8.507059e+37
  %v2974 = vand.u32 %v2961, 2147483648
  %v2975 = vor.u32 1.1754944e-38, %v2974
  %v2976 = vsel %vm2973, %v2975, %v2971
  %v2977 = vmul.f32 1.0, %v2976
  %v2978 = vrcp.pop %v2962
  %v2979 = vmul.f32 %v2962, %v2978
  %v2980 = vsub.f32 1.0, %v2979
  %v2981 = vmul.f32 %v2978, %v2980
  %v2982 = vadd.f32 %v2978, %v2981
  %vm2983 = vweird.f32 %v2962
  %vm2984 = vweird.f32 %v2978
  %vm2985 = vmor %vm2983, %vm2984
  %v2986 = vsel %vm2985, %v2978, %v2982
  %v2987 = vand.u32 2147483647, %v2962
  %vm2988 = vcmp.eq.f32.partialorder %v2987, 8.507059e+37
  %v2989 = vand.u32 %v2962, 2147483648
  %v2990 = vor.u32 1.1754944e-38, %v2989
  %v2991 = vsel %vm2988, %v2990, %v2986
  %v2992 = vmul.f32 1.0, %v2991
  %v2993 = vtanh.pop %v2953
  %v2994 = vmul.f32 %v2977, %v2769
  %2996 = vrot.lane.b32.xlu0 %v2993, 48
  %v2997 = vpop.permute.xlu0 %2996
  %v2999 = vmul.f32 %v2977, %v2997
  %3001 = vrot.lane.b32.xlu0 %v2999, 40
  %v3002 = vpop.permute.xlu0 %3001
  %v3004 = vadd.f32 %v2994, %v3002
  %v3005 = vtanh.pop %v3004
  %3007 = vrot.lane.b32.xlu0 %v3005, 80
  %v3008 = vpop.permute.xlu0 %3007
  %v3010 = vmul.f32 %v2977, %v3008
  %v3011 = vmul.f32 %v2992, %v3008
  %3014 = vrot.lane.b32.xlu0 %v3010, 8
  %v3015 = vpop.permute.xlu0 %3014
  %3016 = vrot.lane.b32.xlu0 %v3011, 8
  %v3017 = vpop.permute.xlu0 %3016
  %v3018 = vsel %vm904, %v3015, %v3017
  %3021 = vrot.lane.b32.xlu0 %v2903, 40
  %v3022 = vpop.permute.xlu0 %3021
  %v3024 = vsel %vm648, %v3018, %v3022
  %v3026 = vsel %vm913, %v3024, 0
  %3028 = vmatpush.msra.mxu0 0.0
  %3029 = vmatpush.msra.mxu0 0.0
  %3030 = vmatpush.msra.mxu0 0.0
  %3031 = vmatpush.msra.mxu0 0.0
  %3032 = vmatpush.msra.mxu0 0.0
  %3033 = vmatpush.msra.mxu0 0.0
  %3034 = vmatpush.msra.mxu0 %v627
  %3035 = vmatpush.msra.mxu0 %v625
  %3036 = vmatpush.msra.mxu0 %v623
  %3037 = vmatpush.msra.mxu0 %v621
  %3038 = vmatpush.msra.mxu0 %v619
  %3039 = vmatpush.msra.mxu0 %v617
  %3040 = vmatpush.msra.mxu0 %v615
  %3041 = vmatpush.msra.mxu0 %v613
  %3042 = vmatpush.msra.mxu0 %v611
  %3043 = vmatpush.msra.mxu0 %v609
  %3044 = vmatmul.f32.gmra.mxu0 %v3026
  %v3045 = vpop.f32.mrf.mxu0
  %v3046 = vadd.f32 %v909, %v3045
  %3047 = vdwg.mxu0
  %3048 = vmatpush.msra.mxu0 0.0
  %3049 = vmatpush.msra.mxu0 0.0
  %3050 = vmatpush.msra.mxu0 0.0
  %3051 = vmatpush.msra.mxu0 0.0
  %3052 = vmatpush.msra.mxu0 0.0
  %3053 = vmatpush.msra.mxu0 0.0
  %3054 = vmatpush.msra.mxu0 %v628
  %3055 = vmatpush.msra.mxu0 %v626
  %3056 = vmatpush.msra.mxu0 %v624
  %3057 = vmatpush.msra.mxu0 %v622
  %3058 = vmatpush.msra.mxu0 %v620
  %3059 = vmatpush.msra.mxu0 %v618
  %3060 = vmatpush.msra.mxu0 %v616
  %3061 = vmatpush.msra.mxu0 %v614
  %3062 = vmatpush.msra.mxu0 %v612
  %3063 = vmatpush.msra.mxu0 %v610
  %3064 = vmatmul.f32.gmra.mxu0 %v3026
  %v3065 = vpop.f32.mrf.mxu0
  %v3066 = vadd.f32 %v910, %v3065
  %3067 = vdwg.mxu0
  %v3068 = vxor.u32 %v3046, 2147483648
  %v3069 = vxor.u32 %v3066, 2147483648
  %v3070 = vmul.f32 %v3068, 1.442695
  %v3071 = vpow.pop %v3070
  %v3072 = vmul.f32 %v3069, 1.442695
  %v3073 = vpow.pop %v3072
  %v3074 = vadd.f32 %v3071, 1.0
  %v3075 = vadd.f32 %v3073, 1.0
  %v3076 = vrcp.pop %v3074
  %v3077 = vmul.f32 %v3074, %v3076
  %v3078 = vsub.f32 1.0, %v3077
  %v3079 = vmul.f32 %v3076, %v3078
  %v3080 = vadd.f32 %v3076, %v3079
  %vm3081 = vweird.f32 %v3074
  %vm3082 = vweird.f32 %v3076
  %vm3083 = vmor %vm3081, %vm3082
  %v3084 = vsel %vm3083, %v3076, %v3080
  %v3085 = vand.u32 2147483647, %v3074
  %vm3086 = vcmp.eq.f32.partialorder %v3085, 8.507059e+37
  %v3087 = vand.u32 %v3074, 2147483648
  %v3088 = vor.u32 1.1754944e-38, %v3087
  %v3089 = vsel %vm3086, %v3088, %v3084
  %v3090 = vmul.f32 1.0, %v3089
  %v3091 = vrcp.pop %v3075
  %v3092 = vmul.f32 %v3075, %v3091
  %v3093 = vsub.f32 1.0, %v3092
  %v3094 = vmul.f32 %v3091, %v3093
  %v3095 = vadd.f32 %v3091, %v3094
  %vm3096 = vweird.f32 %v3075
  %vm3097 = vweird.f32 %v3091
  %vm3098 = vmor %vm3096, %vm3097
  %v3099 = vsel %vm3098, %v3091, %v3095
  %v3100 = vand.u32 2147483647, %v3075
  %vm3101 = vcmp.eq.f32.partialorder %v3100, 8.507059e+37
  %v3102 = vand.u32 %v3075, 2147483648
  %v3103 = vor.u32 1.1754944e-38, %v3102
  %v3104 = vsel %vm3101, %v3103, %v3099
  %v3105 = vmul.f32 1.0, %v3104
  %v3106 = vtanh.pop %v3046
  %3108 = vrot.lane.b32.xlu0 %v2908, 40
  %v3109 = vpop.permute.xlu0 %3108
  %v3111 = vmul.f32 %v3090, %v3109
  %3113 = vrot.lane.b32.xlu0 %v3106, 48
  %v3114 = vpop.permute.xlu0 %3113
  %v3116 = vmul.f32 %v3090, %v3114
  %3118 = vrot.lane.b32.xlu0 %v3116, 40
  %v3119 = vpop.permute.xlu0 %3118
  %v3121 = vadd.f32 %v3111, %v3119
  %v3122 = vtanh.pop %v3121
  %3124 = vrot.lane.b32.xlu0 %v3122, 80
  %v3125 = vpop.permute.xlu0 %3124
  %v3127 = vmul.f32 %v3090, %v3125
  %v3128 = vmul.f32 %v3105, %v3125
  %vm3129 = vcmp.gt.s32.totalorder %v632, 9
  %3132 = vrot.lane.b32.xlu0 %v3127, 8
  %v3133 = vpop.permute.xlu0 %3132
  %3134 = vrot.lane.b32.xlu0 %v3128, 8
  %v3135 = vpop.permute.xlu0 %3134
  %v3136 = vsel %vm904, %v3133, %v3135
  %v3138 = vsel %vm3129, %v3136, %v2903
  %v3139 = vmax.f32 %v3138, 0.0
  %s3140 = smul.u32 8, 69
  %s3141 = smul.u32 %s3140, 4
  %s3142 = sshll.u32 %s3141, 4
  %3143 = dma.done [#allocation4], %s3142
  %v3144 = vld [vmem:[#allocation3] sm:$0xff]
  %v3145 = vld [vmem:[#allocation3 + $0x8] sm:$0xff]
  %v3146 = vld [vmem:[#allocation3 + $0x10] sm:$0xff]
  %v3147 = vld [vmem:[#allocation3 + $0x18] sm:$0xff]
  %v3148 = vld [vmem:[#allocation3 + $0x20] sm:$0xff]
  %v3149 = vld [vmem:[#allocation3 + $0x28] sm:$0xff]
  %v3150 = vld [vmem:[#allocation3 + $0x30] sm:$0xff]
  %v3151 = vld [vmem:[#allocation3 + $0x38] sm:$0xff]
  %v3152 = vld [vmem:[#allocation3 + $0x40] sm:$0xff]
  %v3153 = vld [vmem:[#allocation3 + $0x48] sm:$0xff]
  %v3154 = vld [vmem:[#allocation3 + $0x50] sm:$0xff]
  %v3155 = vld [vmem:[#allocation3 + $0x58] sm:$0xff]
  %v3156 = vld [vmem:[#allocation3 + $0x60] sm:$0xff]
  %v3157 = vld [vmem:[#allocation3 + $0x68] sm:$0xff]
  %v3158 = vld [vmem:[#allocation3 + $0x70] sm:$0xff]
  %v3159 = vld [vmem:[#allocation3 + $0x78] sm:$0xff]
  %v3160 = vld [vmem:[#allocation3 + $0x80] sm:$0xff]
  %v3161 = vld [vmem:[#allocation3 + $0x88] sm:$0xff]
  %v3162 = vld [vmem:[#allocation3 + $0x90] sm:$0xff]
  %v3163 = vld [vmem:[#allocation3 + $0x98] sm:$0xff]
  %v3164 = vld [vmem:[#allocation3 + $0xa0] sm:$0xff]
  %v3165 = vld [vmem:[#allocation3 + $0xa8] sm:$0xff]
  %v3166 = vld [vmem:[#allocation3 + $0xb0] sm:$0xff]
  %v3167 = vld [vmem:[#allocation3 + $0xb8] sm:$0xff]
  %v3168 = vld [vmem:[#allocation3 + $0xc0] sm:$0xff]
  %v3169 = vld [vmem:[#allocation3 + $0xc8] sm:$0xff]
  %v3170 = vld [vmem:[#allocation3 + $0xd0] sm:$0xff]
  %v3171 = vld [vmem:[#allocation3 + $0xd8] sm:$0xff]
  %v3172 = vld [vmem:[#allocation3 + $0xe0] sm:$0xff]
  %v3173 = vld [vmem:[#allocation3 + $0xe8] sm:$0xff]
  %v3174 = vld [vmem:[#allocation3 + $0xf0] sm:$0xff]
  %v3175 = vld [vmem:[#allocation3 + $0xf8] sm:$0xff]
  %v3176 = vld [vmem:[#allocation3 + $0x100] sm:$0xff]
  %v3177 = vld [vmem:[#allocation3 + $0x108] sm:$0xff]
  %v3178 = vld [vmem:[#allocation3 + $0x110] sm:$0xff]
  %v3179 = vld [vmem:[#allocation3 + $0x118] sm:$0xff]
  %v3180 = vld [vmem:[#allocation3 + $0x120] sm:$0xff]
  %v3181 = vld [vmem:[#allocation3 + $0x128] sm:$0xff]
  %v3182 = vld [vmem:[#allocation3 + $0x130] sm:$0xff]
  %v3183 = vld [vmem:[#allocation3 + $0x138] sm:$0xff]
  %v3184 = vld [vmem:[#allocation3 + $0x140] sm:$0xff]
  %v3185 = vld [vmem:[#allocation3 + $0x148] sm:$0xff]
  %v3186 = vld [vmem:[#allocation3 + $0x150] sm:$0xff]
  %v3187 = vld [vmem:[#allocation3 + $0x158] sm:$0xff]
  %v3188 = vld [vmem:[#allocation3 + $0x160] sm:$0xff]
  %v3189 = vld [vmem:[#allocation3 + $0x168] sm:$0xff]
  %v3190 = vld [vmem:[#allocation3 + $0x170] sm:$0xff]
  %v3191 = vld [vmem:[#allocation3 + $0x178] sm:$0xff]
  %v3192 = vld [vmem:[#allocation3 + $0x180] sm:$0xff]
  %v3193 = vld [vmem:[#allocation3 + $0x188] sm:$0xff]
  %v3194 = vld [vmem:[#allocation3 + $0x190] sm:$0xff]
  %v3195 = vld [vmem:[#allocation3 + $0x198] sm:$0xff]
  %v3196 = vld [vmem:[#allocation3 + $0x1a0] sm:$0xff]
  %v3197 = vld [vmem:[#allocation3 + $0x1a8] sm:$0xff]
  %v3198 = vld [vmem:[#allocation3 + $0x1b0] sm:$0xff]
  %v3199 = vld [vmem:[#allocation3 + $0x1b8] sm:$0xff]
  %v3200 = vld [vmem:[#allocation3 + $0x1c0] sm:$0xff]
  %v3201 = vld [vmem:[#allocation3 + $0x1c8] sm:$0xff]
  %v3202 = vld [vmem:[#allocation3 + $0x1d0] sm:$0xff]
  %v3203 = vld [vmem:[#allocation3 + $0x1d8] sm:$0xff]
  %v3204 = vld [vmem:[#allocation3 + $0x1e0] sm:$0xff]
  %v3205 = vld [vmem:[#allocation3 + $0x1e8] sm:$0xff]
  %v3206 = vld [vmem:[#allocation3 + $0x1f0] sm:$0xff]
  %v3207 = vld [vmem:[#allocation3 + $0x1f8] sm:$0xff]
  %v3208 = vld [vmem:[#allocation3 + $0x200] sm:$0xff]
  %v3209 = vld [vmem:[#allocation3 + $0x208] sm:$0xff]
  %v3210 = vld [vmem:[#allocation3 + $0x210] sm:$0xff]
  %v3211 = vld [vmem:[#allocation3 + $0x218] sm:$0xff]
  %v3212 = vld [vmem:[#allocation3 + $0x220] sm:$0xff]
  %v3213 = vld [vmem:[#allocation3 + $0x228] sm:$0xff]
  %v3214 = vld [vmem:[#allocation3 + $0x230] sm:$0xff]
  %v3215 = vld [vmem:[#allocation3 + $0x238] sm:$0xff]
  %v3216 = vld [vmem:[#allocation3 + $0x240] sm:$0xff]
  %v3217 = vld [vmem:[#allocation3 + $0x248] sm:$0xff]
  %v3218 = vld [vmem:[#allocation3 + $0x250] sm:$0xff]
  %v3219 = vld [vmem:[#allocation3 + $0x258] sm:$0xff]
  %v3220 = vld [vmem:[#allocation3 + $0x260] sm:$0xff]
  %v3221 = vld [vmem:[#allocation3 + $0x268] sm:$0xff]
  %v3222 = vld [vmem:[#allocation3 + $0x270] sm:$0xff]
  %v3223 = vld [vmem:[#allocation3 + $0x278] sm:$0xff]
  %v3224 = vld [vmem:[#allocation3 + $0x280] sm:$0xff]
  %v3225 = vld [vmem:[#allocation3 + $0x288] sm:$0xff]
  %v3226 = vld [vmem:[#allocation3 + $0x290] sm:$0xff]
  %v3227 = vld [vmem:[#allocation3 + $0x298] sm:$0xff]
  %v3228 = vld [vmem:[#allocation3 + $0x2a0] sm:$0xff]
  %v3229 = vld [vmem:[#allocation3 + $0x2a8] sm:$0xff]
  %v3230 = vld [vmem:[#allocation3 + $0x2b0] sm:$0xff]
  %v3231 = vld [vmem:[#allocation3 + $0x2b8] sm:$0xff]
  %v3232 = vld [vmem:[#allocation3 + $0x2c0] sm:$0xff]
  %v3233 = vld [vmem:[#allocation3 + $0x2c8] sm:$0xff]
  %v3234 = vld [vmem:[#allocation3 + $0x2d0] sm:$0xff]
  %v3235 = vld [vmem:[#allocation3 + $0x2d8] sm:$0xff]
  %v3236 = vld [vmem:[#allocation3 + $0x2e0] sm:$0xff]
  %v3237 = vld [vmem:[#allocation3 + $0x2e8] sm:$0xff]
  %v3238 = vld [vmem:[#allocation3 + $0x2f0] sm:$0xff]
  %v3239 = vld [vmem:[#allocation3 + $0x2f8] sm:$0xff]
  %v3240 = vld [vmem:[#allocation3 + $0x300] sm:$0xff]
  %v3241 = vld [vmem:[#allocation3 + $0x308] sm:$0xff]
  %v3242 = vld [vmem:[#allocation3 + $0x310] sm:$0xff]
  %v3243 = vld [vmem:[#allocation3 + $0x318] sm:$0xff]
  %v3244 = vld [vmem:[#allocation3 + $0x320] sm:$0xff]
  %v3245 = vld [vmem:[#allocation3 + $0x328] sm:$0xff]
  %v3246 = vld [vmem:[#allocation3 + $0x330] sm:$0xff]
  %v3247 = vld [vmem:[#allocation3 + $0x338] sm:$0xff]
  %v3248 = vld [vmem:[#allocation3 + $0x340] sm:$0xff]
  %v3249 = vld [vmem:[#allocation3 + $0x348] sm:$0xff]
  %v3250 = vld [vmem:[#allocation3 + $0x350] sm:$0xff]
  %v3251 = vld [vmem:[#allocation3 + $0x358] sm:$0xff]
  %v3252 = vld [vmem:[#allocation3 + $0x360] sm:$0xff]
  %v3253 = vld [vmem:[#allocation3 + $0x368] sm:$0xff]
  %v3254 = vld [vmem:[#allocation3 + $0x370] sm:$0xff]
  %v3255 = vld [vmem:[#allocation3 + $0x378] sm:$0xff]
  %v3256 = vld [vmem:[#allocation3 + $0x380] sm:$0xff]
  %v3257 = vld [vmem:[#allocation3 + $0x388] sm:$0xff]
  %v3258 = vld [vmem:[#allocation3 + $0x390] sm:$0xff]
  %v3259 = vld [vmem:[#allocation3 + $0x398] sm:$0xff]
  %v3260 = vld [vmem:[#allocation3 + $0x3a0] sm:$0xff]
  %v3261 = vld [vmem:[#allocation3 + $0x3a8] sm:$0xff]
  %v3262 = vld [vmem:[#allocation3 + $0x3b0] sm:$0xff]
  %v3263 = vld [vmem:[#allocation3 + $0x3b8] sm:$0xff]
  %v3264 = vld [vmem:[#allocation3 + $0x3c0] sm:$0xff]
  %v3265 = vld [vmem:[#allocation3 + $0x3c8] sm:$0xff]
  %v3266 = vld [vmem:[#allocation3 + $0x3d0] sm:$0xff]
  %v3267 = vld [vmem:[#allocation3 + $0x3d8] sm:$0xff]
  %v3268 = vld [vmem:[#allocation3 + $0x3e0] sm:$0xff]
  %v3269 = vld [vmem:[#allocation3 + $0x3e8] sm:$0xff]
  %v3270 = vld [vmem:[#allocation3 + $0x3f0] sm:$0xff]
  %v3271 = vld [vmem:[#allocation3 + $0x3f8] sm:$0xff]
  %v3272 = vld [vmem:[#allocation3 + $0x400] sm:$0xff]
  %v3273 = vld [vmem:[#allocation3 + $0x408] sm:$0xff]
  %v3274 = vld [vmem:[#allocation3 + $0x410] sm:$0xff]
  %v3275 = vld [vmem:[#allocation3 + $0x418] sm:$0xff]
  %v3276 = vld [vmem:[#allocation3 + $0x420] sm:$0xff]
  %v3277 = vld [vmem:[#allocation3 + $0x428] sm:$0xff]
  %v3278 = vld [vmem:[#allocation3 + $0x430] sm:$0xff]
  %v3279 = vld [vmem:[#allocation3 + $0x438] sm:$0xff]
  %v3280 = vld [vmem:[#allocation3 + $0x440] sm:$0xff]
  %v3281 = vld [vmem:[#allocation3 + $0x448] sm:$0xff]
  %v3282 = vld [vmem:[#allocation3 + $0x450] sm:$0xff]
  %v3283 = vld [vmem:[#allocation3 + $0x458] sm:$0xff]
  %v3284 = vld [vmem:[#allocation3 + $0x460] sm:$0xff]
  %v3285 = vld [vmem:[#allocation3 + $0x468] sm:$0xff]
  %v3286 = vld [vmem:[#allocation3 + $0x470] sm:$0xff]
  %v3287 = vld [vmem:[#allocation3 + $0x478] sm:$0xff]
  %v3288 = vld [vmem:[#allocation3 + $0x480] sm:$0xff]
  %v3289 = vld [vmem:[#allocation3 + $0x488] sm:$0xff]
  %v3290 = vld [vmem:[#allocation3 + $0x490] sm:$0xff]
  %v3291 = vld [vmem:[#allocation3 + $0x498] sm:$0xff]
  %v3292 = vld [vmem:[#allocation3 + $0x4a0] sm:$0xff]
  %v3293 = vld [vmem:[#allocation3 + $0x4a8] sm:$0xff]
  %v3294 = vld [vmem:[#allocation3 + $0x4b0] sm:$0xff]
  %v3295 = vld [vmem:[#allocation3 + $0x4b8] sm:$0xff]
  %v3296 = vld [vmem:[#allocation3 + $0x4c0] sm:$0xff]
  %v3297 = vld [vmem:[#allocation3 + $0x4c8] sm:$0xff]
  %v3298 = vld [vmem:[#allocation3 + $0x4d0] sm:$0xff]
  %v3299 = vld [vmem:[#allocation3 + $0x4d8] sm:$0xff]
  %v3300 = vld [vmem:[#allocation3 + $0x4e0] sm:$0xff]
  %v3301 = vld [vmem:[#allocation3 + $0x4e8] sm:$0xff]
  %v3302 = vld [vmem:[#allocation3 + $0x4f0] sm:$0xff]
  %v3303 = vld [vmem:[#allocation3 + $0x4f8] sm:$0xff]
  %v3304 = vld [vmem:[#allocation3 + $0x500] sm:$0xff]
  %v3305 = vld [vmem:[#allocation3 + $0x508] sm:$0xff]
  %v3306 = vld [vmem:[#allocation3 + $0x510] sm:$0xff]
  %v3307 = vld [vmem:[#allocation3 + $0x518] sm:$0xff]
  %v3308 = vld [vmem:[#allocation3 + $0x520] sm:$0xff]
  %v3309 = vld [vmem:[#allocation3 + $0x528] sm:$0xff]
  %v3310 = vld [vmem:[#allocation3 + $0x530] sm:$0xff]
  %v3311 = vld [vmem:[#allocation3 + $0x538] sm:$0xff]
  %v3312 = vld [vmem:[#allocation3 + $0x540] sm:$0xff]
  %v3313 = vld [vmem:[#allocation3 + $0x548] sm:$0xff]
  %v3314 = vld [vmem:[#allocation3 + $0x550] sm:$0xff]
  %v3315 = vld [vmem:[#allocation3 + $0x558] sm:$0xff]
  %v3316 = vld [vmem:[#allocation3 + $0x560] sm:$0xff]
  %v3317 = vld [vmem:[#allocation3 + $0x568] sm:$0xff]
  %v3318 = vld [vmem:[#allocation3 + $0x570] sm:$0xff]
  %v3319 = vld [vmem:[#allocation3 + $0x578] sm:$0xff]
  %v3320 = vld [vmem:[#allocation3 + $0x580] sm:$0xff]
  %v3321 = vld [vmem:[#allocation3 + $0x588] sm:$0xff]
  %v3322 = vld [vmem:[#allocation3 + $0x590] sm:$0xff]
  %v3323 = vld [vmem:[#allocation3 + $0x598] sm:$0xff]
  %v3324 = vld [vmem:[#allocation3 + $0x5a0] sm:$0xff]
  %v3325 = vld [vmem:[#allocation3 + $0x5a8] sm:$0xff]
  %v3326 = vld [vmem:[#allocation3 + $0x5b0] sm:$0xff]
  %v3327 = vld [vmem:[#allocation3 + $0x5b8] sm:$0xff]
  %v3328 = vld [vmem:[#allocation3 + $0x5c0] sm:$0xff]
  %v3329 = vld [vmem:[#allocation3 + $0x5c8] sm:$0xff]
  %v3330 = vld [vmem:[#allocation3 + $0x5d0] sm:$0xff]
  %v3331 = vld [vmem:[#allocation3 + $0x5d8] sm:$0xff]
  %v3332 = vld [vmem:[#allocation3 + $0x5e0] sm:$0xff]
  %v3333 = vld [vmem:[#allocation3 + $0x5e8] sm:$0xff]
  %v3334 = vld [vmem:[#allocation3 + $0x5f0] sm:$0xff]
  %v3335 = vld [vmem:[#allocation3 + $0x5f8] sm:$0xff]
  %v3336 = vld [vmem:[#allocation3 + $0x600] sm:$0xff]
  %v3337 = vld [vmem:[#allocation3 + $0x608] sm:$0xff]
  %v3338 = vld [vmem:[#allocation3 + $0x610] sm:$0xff]
  %v3339 = vld [vmem:[#allocation3 + $0x618] sm:$0xff]
  %v3340 = vld [vmem:[#allocation3 + $0x620] sm:$0xff]
  %v3341 = vld [vmem:[#allocation3 + $0x628] sm:$0xff]
  %v3342 = vld [vmem:[#allocation3 + $0x630] sm:$0xff]
  %v3343 = vld [vmem:[#allocation3 + $0x638] sm:$0xff]
  %v3344 = vld [vmem:[#allocation3 + $0x640] sm:$0xff]
  %v3345 = vld [vmem:[#allocation3 + $0x648] sm:$0xff]
  %v3346 = vld [vmem:[#allocation3 + $0x650] sm:$0xff]
  %v3347 = vld [vmem:[#allocation3 + $0x658] sm:$0xff]
  %v3348 = vld [vmem:[#allocation3 + $0x660] sm:$0xff]
  %v3349 = vld [vmem:[#allocation3 + $0x668] sm:$0xff]
  %v3350 = vld [vmem:[#allocation3 + $0x670] sm:$0xff]
  %v3351 = vld [vmem:[#allocation3 + $0x678] sm:$0xff]
  %v3352 = vld [vmem:[#allocation3 + $0x680] sm:$0xff]
  %v3353 = vld [vmem:[#allocation3 + $0x688] sm:$0xff]
  %v3354 = vld [vmem:[#allocation3 + $0x690] sm:$0xff]
  %v3355 = vld [vmem:[#allocation3 + $0x698] sm:$0xff]
  %v3356 = vld [vmem:[#allocation3 + $0x6a0] sm:$0xff]
  %v3357 = vld [vmem:[#allocation3 + $0x6a8] sm:$0xff]
  %v3358 = vld [vmem:[#allocation3 + $0x6b0] sm:$0xff]
  %v3359 = vld [vmem:[#allocation3 + $0x6b8] sm:$0xff]
  %v3360 = vld [vmem:[#allocation3 + $0x6c0] sm:$0xff]
  %v3361 = vld [vmem:[#allocation3 + $0x6c8] sm:$0xff]
  %v3362 = vld [vmem:[#allocation3 + $0x6d0] sm:$0xff]
  %v3363 = vld [vmem:[#allocation3 + $0x6d8] sm:$0xff]
  %v3364 = vld [vmem:[#allocation3 + $0x6e0] sm:$0xff]
  %v3365 = vld [vmem:[#allocation3 + $0x6e8] sm:$0xff]
  %v3366 = vld [vmem:[#allocation3 + $0x6f0] sm:$0xff]
  %v3367 = vld [vmem:[#allocation3 + $0x6f8] sm:$0xff]
  %v3368 = vld [vmem:[#allocation3 + $0x700] sm:$0xff]
  %v3369 = vld [vmem:[#allocation3 + $0x708] sm:$0xff]
  %v3370 = vld [vmem:[#allocation3 + $0x710] sm:$0xff]
  %v3371 = vld [vmem:[#allocation3 + $0x718] sm:$0xff]
  %v3372 = vld [vmem:[#allocation3 + $0x720] sm:$0xff]
  %v3373 = vld [vmem:[#allocation3 + $0x728] sm:$0xff]
  %v3374 = vld [vmem:[#allocation3 + $0x730] sm:$0xff]
  %v3375 = vld [vmem:[#allocation3 + $0x738] sm:$0xff]
  %v3376 = vld [vmem:[#allocation3 + $0x740] sm:$0xff]
  %v3377 = vld [vmem:[#allocation3 + $0x748] sm:$0xff]
  %v3378 = vld [vmem:[#allocation3 + $0x750] sm:$0xff]
  %v3379 = vld [vmem:[#allocation3 + $0x758] sm:$0xff]
  %v3380 = vld [vmem:[#allocation3 + $0x760] sm:$0xff]
  %v3381 = vld [vmem:[#allocation3 + $0x768] sm:$0xff]
  %v3382 = vld [vmem:[#allocation3 + $0x770] sm:$0xff]
  %v3383 = vld [vmem:[#allocation3 + $0x778] sm:$0xff]
  %v3384 = vld [vmem:[#allocation3 + $0x780] sm:$0xff]
  %v3385 = vld [vmem:[#allocation3 + $0x788] sm:$0xff]
  %v3386 = vld [vmem:[#allocation3 + $0x790] sm:$0xff]
  %v3387 = vld [vmem:[#allocation3 + $0x798] sm:$0xff]
  %v3388 = vld [vmem:[#allocation3 + $0x7a0] sm:$0xff]
  %v3389 = vld [vmem:[#allocation3 + $0x7a8] sm:$0xff]
  %v3390 = vld [vmem:[#allocation3 + $0x7b0] sm:$0xff]
  %v3391 = vld [vmem:[#allocation3 + $0x7b8] sm:$0xff]
  %v3392 = vld [vmem:[#allocation3 + $0x7c0] sm:$0xff]
  %v3393 = vld [vmem:[#allocation3 + $0x7c8] sm:$0xff]
  %v3394 = vld [vmem:[#allocation3 + $0x7d0] sm:$0xff]
  %v3395 = vld [vmem:[#allocation3 + $0x7d8] sm:$0xff]
  %v3396 = vld [vmem:[#allocation3 + $0x7e0] sm:$0xff]
  %v3397 = vld [vmem:[#allocation3 + $0x7e8] sm:$0xff]
  %v3398 = vld [vmem:[#allocation3 + $0x7f0] sm:$0xff]
  %v3399 = vld [vmem:[#allocation3 + $0x7f8] sm:$0xff]
  %v3400 = vld [vmem:[#allocation3 + $0x800] sm:$0xff]
  %v3401 = vld [vmem:[#allocation3 + $0x808] sm:$0xff]
  %v3402 = vld [vmem:[#allocation3 + $0x810] sm:$0xff]
  %v3403 = vld [vmem:[#allocation3 + $0x818] sm:$0xff]
  %v3404 = vld [vmem:[#allocation3 + $0x820] sm:$0xff]
  %v3405 = vld [vmem:[#allocation3 + $0x828] sm:$0xff]
  %v3406 = vld [vmem:[#allocation3 + $0x830] sm:$0xff]
  %v3407 = vld [vmem:[#allocation3 + $0x838] sm:$0xff]
  %v3408 = vld [vmem:[#allocation3 + $0x840] sm:$0xff]
  %v3409 = vld [vmem:[#allocation3 + $0x848] sm:$0xff]
  %v3410 = vld [vmem:[#allocation3 + $0x850] sm:$0xff]
  %v3411 = vld [vmem:[#allocation3 + $0x858] sm:$0xff]
  %v3412 = vld [vmem:[#allocation3 + $0x860] sm:$0xff]
  %v3413 = vld [vmem:[#allocation3 + $0x868] sm:$0xff]
  %v3414 = vld [vmem:[#allocation3 + $0x870] sm:$0xff]
  %v3415 = vld [vmem:[#allocation3 + $0x878] sm:$0xff]
  %v3416 = vld [vmem:[#allocation3 + $0x880] sm:$0xff]
  %v3417 = vld [vmem:[#allocation3 + $0x888] sm:$0xff]
  %v3418 = vld [vmem:[#allocation3 + $0x890] sm:$0xff]
  %v3419 = vld [vmem:[#allocation3 + $0x898] sm:$0xff]
  %v3420 = vld [vmem:[%s5] ss:$4 sm:$0xf]
  %v3422 = vperm.slane %v3420, 0
  %v3423 = vperm.slane %v3420, 1
  %v3424 = vperm.slane %v3420, 2
  %v3425 = vperm.slane %v3420, 3
  %v3431 = vsel %vm648, %v3139, 0
  %3433 = vmatpush.msra.mxu0 0.0
  %3434 = vmatpush.msra.mxu0 0.0
  %3435 = vmatpush.msra.mxu0 0.0
  %3436 = vmatpush.msra.mxu0 0.0
  %3437 = vmatpush.msra.mxu0 0.0
  %3438 = vmatpush.msra.mxu0 0.0
  %3439 = vmatpush.msra.mxu0 0.0
  %3440 = vmatpush.msra.mxu0 0.0
  %3441 = vmatpush.msra.mxu0 0.0
  %3442 = vmatpush.msra.mxu0 0.0
  %3443 = vmatpush.msra.mxu0 0.0
  %3444 = vmatpush.msra.mxu0 %v3160
  %3445 = vmatpush.msra.mxu0 %v3156
  %3446 = vmatpush.msra.mxu0 %v3152
  %3447 = vmatpush.msra.mxu0 %v3148
  %3448 = vmatpush.msra.mxu0 %v3144
  %3449 = vmatmul.f32.gmra.mxu0 %v3431
  %v3450 = vpop.f32.mrf.mxu0
  %v3451 = vadd.f32 %v3422, %v3450
  %3452 = vdwg.mxu0
  %3453 = vmatpush.msra.mxu0 0.0
  %3454 = vmatpush.msra.mxu0 0.0
  %3455 = vmatpush.msra.mxu0 0.0
  %3456 = vmatpush.msra.mxu0 0.0
  %3457 = vmatpush.msra.mxu0 0.0
  %3458 = vmatpush.msra.mxu0 0.0
  %3459 = vmatpush.msra.mxu0 0.0
  %3460 = vmatpush.msra.mxu0 0.0
  %3461 = vmatpush.msra.mxu0 0.0
  %3462 = vmatpush.msra.mxu0 0.0
  %3463 = vmatpush.msra.mxu0 0.0
  %3464 = vmatpush.msra.mxu0 %v3161
  %3465 = vmatpush.msra.mxu0 %v3157
  %3466 = vmatpush.msra.mxu0 %v3153
  %3467 = vmatpush.msra.mxu0 %v3149
  %3468 = vmatpush.msra.mxu0 %v3145
  %3469 = vmatmul.f32.gmra.mxu0 %v3431
  %v3470 = vpop.f32.mrf.mxu0
  %v3471 = vadd.f32 %v3423, %v3470
  %3472 = vdwg.mxu0
  %3473 = vmatpush.msra.mxu0 0.0
  %3474 = vmatpush.msra.mxu0 0.0
  %3475 = vmatpush.msra.mxu0 0.0
  %3476 = vmatpush.msra.mxu0 0.0
  %3477 = vmatpush.msra.mxu0 0.0
  %3478 = vmatpush.msra.mxu0 0.0
  %3479 = vmatpush.msra.mxu0 0.0
  %3480 = vmatpush.msra.mxu0 0.0
  %3481 = vmatpush.msra.mxu0 0.0
  %3482 = vmatpush.msra.mxu0 0.0
  %3483 = vmatpush.msra.mxu0 0.0
  %3484 = vmatpush.msra.mxu0 %v3162
  %3485 = vmatpush.msra.mxu0 %v3158
  %3486 = vmatpush.msra.mxu0 %v3154
  %3487 = vmatpush.msra.mxu0 %v3150
  %3488 = vmatpush.msra.mxu0 %v3146
  %3489 = vmatmul.f32.gmra.mxu0 %v3431
  %v3490 = vpop.f32.mrf.mxu0
  %v3491 = vadd.f32 %v3424, %v3490
  %3492 = vdwg.mxu0
  %3493 = vmatpush.msra.mxu0 0.0
  %3494 = vmatpush.msra.mxu0 0.0
  %3495 = vmatpush.msra.mxu0 0.0
  %3496 = vmatpush.msra.mxu0 0.0
  %3497 = vmatpush.msra.mxu0 0.0
  %3498 = vmatpush.msra.mxu0 0.0
  %3499 = vmatpush.msra.mxu0 0.0
  %3500 = vmatpush.msra.mxu0 0.0
  %3501 = vmatpush.msra.mxu0 0.0
  %3502 = vmatpush.msra.mxu0 0.0
  %3503 = vmatpush.msra.mxu0 0.0
  %3504 = vmatpush.msra.mxu0 %v3163
  %3505 = vmatpush.msra.mxu0 %v3159
  %3506 = vmatpush.msra.mxu0 %v3155
  %3507 = vmatpush.msra.mxu0 %v3151
  %3508 = vmatpush.msra.mxu0 %v3147
  %3509 = vmatmul.f32.gmra.mxu0 %v3431
  %v3510 = vpop.f32.mrf.mxu0
  %v3511 = vadd.f32 %v3425, %v3510
  %3512 = vdwg.mxu0
  %v3513 = vmax.f32 %v3451, 0.0
  %v3514 = vmax.f32 %v3471, 0.0
  %v3515 = vmax.f32 %v3491, 0.0
  %v3516 = vmax.f32 %v3511, 0.0
  %s3517 = scalar_lea.vmem %s5, 1
  %v3518 = vld [vmem:[%s3517] ss:$4 sm:$0xf]
  %v3520 = vperm.slane %v3518, 0
  %v3521 = vperm.slane %v3518, 1
  %v3522 = vperm.slane %v3518, 2
  %v3523 = vperm.slane %v3518, 3
  %3528 = vmatpush.msra.mxu0 %v3224
  %3529 = vmatpush.msra.mxu0 %v3220
  %3530 = vmatpush.msra.mxu0 %v3216
  %3531 = vmatpush.msra.mxu0 %v3212
  %3532 = vmatpush.msra.mxu0 %v3208
  %3533 = vmatpush.msra.mxu0 %v3204
  %3534 = vmatpush.msra.mxu0 %v3200
  %3535 = vmatpush.msra.mxu0 %v3196
  %3536 = vmatpush.msra.mxu0 %v3192
  %3537 = vmatpush.msra.mxu0 %v3188
  %3538 = vmatpush.msra.mxu0 %v3184
  %3539 = vmatpush.msra.mxu0 %v3180
  %3540 = vmatpush.msra.mxu0 %v3176
  %3541 = vmatpush.msra.mxu0 %v3172
  %3542 = vmatpush.msra.mxu0 %v3168
  %3543 = vmatpush.msra.mxu0 %v3164
  %3544 = vmatmul.f32.gmra.mxu0 %v3513
  %v3545 = vpop.f32.mrf.mxu0
  %v3546 = vadd.f32 %v3520, %v3545
  %3547 = vdwg.mxu0
  %3548 = vmatpush.msra.mxu0 %v3288
  %3549 = vmatpush.msra.mxu0 %v3284
  %3550 = vmatpush.msra.mxu0 %v3280
  %3551 = vmatpush.msra.mxu0 %v3276
  %3552 = vmatpush.msra.mxu0 %v3272
  %3553 = vmatpush.msra.mxu0 %v3268
  %3554 = vmatpush.msra.mxu0 %v3264
  %3555 = vmatpush.msra.mxu0 %v3260
  %3556 = vmatpush.msra.mxu0 %v3256
  %3557 = vmatpush.msra.mxu0 %v3252
  %3558 = vmatpush.msra.mxu0 %v3248
  %3559 = vmatpush.msra.mxu0 %v3244
  %3560 = vmatpush.msra.mxu0 %v3240
  %3561 = vmatpush.msra.mxu0 %v3236
  %3562 = vmatpush.msra.mxu0 %v3232
  %3563 = vmatpush.msra.mxu0 %v3228
  %3564 = vmatmul.f32.gmra.mxu0 %v3514
  %v3565 = vpop.f32.mrf.mxu0
  %v3566 = vadd.f32 %v3546, %v3565
  %3567 = vdwg.mxu0
  %3568 = vmatpush.msra.mxu0 %v3352
  %3569 = vmatpush.msra.mxu0 %v3348
  %3570 = vmatpush.msra.mxu0 %v3344
  %3571 = vmatpush.msra.mxu0 %v3340
  %3572 = vmatpush.msra.mxu0 %v3336
  %3573 = vmatpush.msra.mxu0 %v3332
  %3574 = vmatpush.msra.mxu0 %v3328
  %3575 = vmatpush.msra.mxu0 %v3324
  %3576 = vmatpush.msra.mxu0 %v3320
  %3577 = vmatpush.msra.mxu0 %v3316
  %3578 = vmatpush.msra.mxu0 %v3312
  %3579 = vmatpush.msra.mxu0 %v3308
  %3580 = vmatpush.msra.mxu0 %v3304
  %3581 = vmatpush.msra.mxu0 %v3300
  %3582 = vmatpush.msra.mxu0 %v3296
  %3583 = vmatpush.msra.mxu0 %v3292
  %3584 = vmatmul.f32.gmra.mxu0 %v3515
  %v3585 = vpop.f32.mrf.mxu0
  %v3586 = vadd.f32 %v3566, %v3585
  %3587 = vdwg.mxu0
  %3588 = vmatpush.msra.mxu0 %v3416
  %3589 = vmatpush.msra.mxu0 %v3412
  %3590 = vmatpush.msra.mxu0 %v3408
  %3591 = vmatpush.msra.mxu0 %v3404
  %3592 = vmatpush.msra.mxu0 %v3400
  %3593 = vmatpush.msra.mxu0 %v3396
  %3594 = vmatpush.msra.mxu0 %v3392
  %3595 = vmatpush.msra.mxu0 %v3388
  %3596 = vmatpush.msra.mxu0 %v3384
  %3597 = vmatpush.msra.mxu0 %v3380
  %3598 = vmatpush.msra.mxu0 %v3376
  %3599 = vmatpush.msra.mxu0 %v3372
  %3600 = vmatpush.msra.mxu0 %v3368
  %3601 = vmatpush.msra.mxu0 %v3364
  %3602 = vmatpush.msra.mxu0 %v3360
  %3603 = vmatpush.msra.mxu0 %v3356
  %3604 = vmatmul.f32.gmra.mxu0 %v3516
  %v3605 = vpop.f32.mrf.mxu0
  %v3606 = vadd.f32 %v3586, %v3605
  %3607 = vdwg.mxu0
  %3608 = vmatpush.msra.mxu0 %v3225
  %3609 = vmatpush.msra.mxu0 %v3221
  %3610 = vmatpush.msra.mxu0 %v3217
  %3611 = vmatpush.msra.mxu0 %v3213
  %3612 = vmatpush.msra.mxu0 %v3209
  %3613 = vmatpush.msra.mxu0 %v3205
  %3614 = vmatpush.msra.mxu0 %v3201
  %3615 = vmatpush.msra.mxu0 %v3197
  %3616 = vmatpush.msra.mxu0 %v3193
  %3617 = vmatpush.msra.mxu0 %v3189
  %3618 = vmatpush.msra.mxu0 %v3185
  %3619 = vmatpush.msra.mxu0 %v3181
  %3620 = vmatpush.msra.mxu0 %v3177
  %3621 = vmatpush.msra.mxu0 %v3173
  %3622 = vmatpush.msra.mxu0 %v3169
  %3623 = vmatpush.msra.mxu0 %v3165
  %3624 = vmatmul.f32.gmra.mxu0 %v3513
  %v3625 = vpop.f32.mrf.mxu0
  %v3626 = vadd.f32 %v3521, %v3625
  %3627 = vdwg.mxu0
  %3628 = vmatpush.msra.mxu0 %v3289
  %3629 = vmatpush.msra.mxu0 %v3285
  %3630 = vmatpush.msra.mxu0 %v3281
  %3631 = vmatpush.msra.mxu0 %v3277
  %3632 = vmatpush.msra.mxu0 %v3273
  %3633 = vmatpush.msra.mxu0 %v3269
  %3634 = vmatpush.msra.mxu0 %v3265
  %3635 = vmatpush.msra.mxu0 %v3261
  %3636 = vmatpush.msra.mxu0 %v3257
  %3637 = vmatpush.msra.mxu0 %v3253
  %3638 = vmatpush.msra.mxu0 %v3249
  %3639 = vmatpush.msra.mxu0 %v3245
  %3640 = vmatpush.msra.mxu0 %v3241
  %3641 = vmatpush.msra.mxu0 %v3237
  %3642 = vmatpush.msra.mxu0 %v3233
  %3643 = vmatpush.msra.mxu0 %v3229
  %3644 = vmatmul.f32.gmra.mxu0 %v3514
  %v3645 = vpop.f32.mrf.mxu0
  %v3646 = vadd.f32 %v3626, %v3645
  %3647 = vdwg.mxu0
  %3648 = vmatpush.msra.mxu0 %v3353
  %3649 = vmatpush.msra.mxu0 %v3349
  %3650 = vmatpush.msra.mxu0 %v3345
  %3651 = vmatpush.msra.mxu0 %v3341
  %3652 = vmatpush.msra.mxu0 %v3337
  %3653 = vmatpush.msra.mxu0 %v3333
  %3654 = vmatpush.msra.mxu0 %v3329
  %3655 = vmatpush.msra.mxu0 %v3325
  %3656 = vmatpush.msra.mxu0 %v3321
  %3657 = vmatpush.msra.mxu0 %v3317
  %3658 = vmatpush.msra.mxu0 %v3313
  %3659 = vmatpush.msra.mxu0 %v3309
  %3660 = vmatpush.msra.mxu0 %v3305
  %3661 = vmatpush.msra.mxu0 %v3301
  %3662 = vmatpush.msra.mxu0 %v3297
  %3663 = vmatpush.msra.mxu0 %v3293
  %3664 = vmatmul.f32.gmra.mxu0 %v3515
  %v3665 = vpop.f32.mrf.mxu0
  %v3666 = vadd.f32 %v3646, %v3665
  %3667 = vdwg.mxu0
  %3668 = vmatpush.msra.mxu0 %v3417
  %3669 = vmatpush.msra.mxu0 %v3413
  %3670 = vmatpush.msra.mxu0 %v3409
  %3671 = vmatpush.msra.mxu0 %v3405
  %3672 = vmatpush.msra.mxu0 %v3401
  %3673 = vmatpush.msra.mxu0 %v3397
  %3674 = vmatpush.msra.mxu0 %v3393
  %3675 = vmatpush.msra.mxu0 %v3389
  %3676 = vmatpush.msra.mxu0 %v3385
  %3677 = vmatpush.msra.mxu0 %v3381
  %3678 = vmatpush.msra.mxu0 %v3377
  %3679 = vmatpush.msra.mxu0 %v3373
  %3680 = vmatpush.msra.mxu0 %v3369
  %3681 = vmatpush.msra.mxu0 %v3365
  %3682 = vmatpush.msra.mxu0 %v3361
  %3683 = vmatpush.msra.mxu0 %v3357
  %3684 = vmatmul.f32.gmra.mxu0 %v3516
  %v3685 = vpop.f32.mrf.mxu0
  %v3686 = vadd.f32 %v3666, %v3685
  %3687 = vdwg.mxu0
  %3688 = vmatpush.msra.mxu0 %v3226
  %3689 = vmatpush.msra.mxu0 %v3222
  %3690 = vmatpush.msra.mxu0 %v3218
  %3691 = vmatpush.msra.mxu0 %v3214
  %3692 = vmatpush.msra.mxu0 %v3210
  %3693 = vmatpush.msra.mxu0 %v3206
  %3694 = vmatpush.msra.mxu0 %v3202
  %3695 = vmatpush.msra.mxu0 %v3198
  %3696 = vmatpush.msra.mxu0 %v3194
  %3697 = vmatpush.msra.mxu0 %v3190
  %3698 = vmatpush.msra.mxu0 %v3186
  %3699 = vmatpush.msra.mxu0 %v3182
  %3700 = vmatpush.msra.mxu0 %v3178
  %3701 = vmatpush.msra.mxu0 %v3174
  %3702 = vmatpush.msra.mxu0 %v3170
  %3703 = vmatpush.msra.mxu0 %v3166
  %3704 = vmatmul.f32.gmra.mxu0 %v3513
  %v3705 = vpop.f32.mrf.mxu0
  %v3706 = vadd.f32 %v3522, %v3705
  %3707 = vdwg.mxu0
  %3708 = vmatpush.msra.mxu0 %v3290
  %3709 = vmatpush.msra.mxu0 %v3286
  %3710 = vmatpush.msra.mxu0 %v3282
  %3711 = vmatpush.msra.mxu0 %v3278
  %3712 = vmatpush.msra.mxu0 %v3274
  %3713 = vmatpush.msra.mxu0 %v3270
  %3714 = vmatpush.msra.mxu0 %v3266
  %3715 = vmatpush.msra.mxu0 %v3262
  %3716 = vmatpush.msra.mxu0 %v3258
  %3717 = vmatpush.msra.mxu0 %v3254
  %3718 = vmatpush.msra.mxu0 %v3250
  %3719 = vmatpush.msra.mxu0 %v3246
  %3720 = vmatpush.msra.mxu0 %v3242
  %3721 = vmatpush.msra.mxu0 %v3238
  %3722 = vmatpush.msra.mxu0 %v3234
  %3723 = vmatpush.msra.mxu0 %v3230
  %3724 = vmatmul.f32.gmra.mxu0 %v3514
  %v3725 = vpop.f32.mrf.mxu0
  %v3726 = vadd.f32 %v3706, %v3725
  %3727 = vdwg.mxu0
  %3728 = vmatpush.msra.mxu0 %v3354
  %3729 = vmatpush.msra.mxu0 %v3350
  %3730 = vmatpush.msra.mxu0 %v3346
  %3731 = vmatpush.msra.mxu0 %v3342
  %3732 = vmatpush.msra.mxu0 %v3338
  %3733 = vmatpush.msra.mxu0 %v3334
  %3734 = vmatpush.msra.mxu0 %v3330
  %3735 = vmatpush.msra.mxu0 %v3326
  %3736 = vmatpush.msra.mxu0 %v3322
  %3737 = vmatpush.msra.mxu0 %v3318
  %3738 = vmatpush.msra.mxu0 %v3314
  %3739 = vmatpush.msra.mxu0 %v3310
  %3740 = vmatpush.msra.mxu0 %v3306
  %3741 = vmatpush.msra.mxu0 %v3302
  %3742 = vmatpush.msra.mxu0 %v3298
  %3743 = vmatpush.msra.mxu0 %v3294
  %3744 = vmatmul.f32.gmra.mxu0 %v3515
  %v3745 = vpop.f32.mrf.mxu0
  %v3746 = vadd.f32 %v3726, %v3745
  %3747 = vdwg.mxu0
  %3748 = vmatpush.msra.mxu0 %v3418
  %3749 = vmatpush.msra.mxu0 %v3414
  %3750 = vmatpush.msra.mxu0 %v3410
  %3751 = vmatpush.msra.mxu0 %v3406
  %3752 = vmatpush.msra.mxu0 %v3402
  %3753 = vmatpush.msra.mxu0 %v3398
  %3754 = vmatpush.msra.mxu0 %v3394
  %3755 = vmatpush.msra.mxu0 %v3390
  %3756 = vmatpush.msra.mxu0 %v3386
  %3757 = vmatpush.msra.mxu0 %v3382
  %3758 = vmatpush.msra.mxu0 %v3378
  %3759 = vmatpush.msra.mxu0 %v3374
  %3760 = vmatpush.msra.mxu0 %v3370
  %3761 = vmatpush.msra.mxu0 %v3366
  %3762 = vmatpush.msra.mxu0 %v3362
  %3763 = vmatpush.msra.mxu0 %v3358
  %3764 = vmatmul.f32.gmra.mxu0 %v3516
  %v3765 = vpop.f32.mrf.mxu0
  %v3766 = vadd.f32 %v3746, %v3765
  %3767 = vdwg.mxu0
  %3768 = vmatpush.msra.mxu0 %v3227
  %3769 = vmatpush.msra.mxu0 %v3223
  %3770 = vmatpush.msra.mxu0 %v3219
  %3771 = vmatpush.msra.mxu0 %v3215
  %3772 = vmatpush.msra.mxu0 %v3211
  %3773 = vmatpush.msra.mxu0 %v3207
  %3774 = vmatpush.msra.mxu0 %v3203
  %3775 = vmatpush.msra.mxu0 %v3199
  %3776 = vmatpush.msra.mxu0 %v3195
  %3777 = vmatpush.msra.mxu0 %v3191
  %3778 = vmatpush.msra.mxu0 %v3187
  %3779 = vmatpush.msra.mxu0 %v3183
  %3780 = vmatpush.msra.mxu0 %v3179
  %3781 = vmatpush.msra.mxu0 %v3175
  %3782 = vmatpush.msra.mxu0 %v3171
  %3783 = vmatpush.msra.mxu0 %v3167
  %3784 = vmatmul.f32.gmra.mxu0 %v3513
  %v3785 = vpop.f32.mrf.mxu0
  %v3786 = vadd.f32 %v3523, %v3785
  %3787 = vdwg.mxu0
  %3788 = vmatpush.msra.mxu0 %v3291
  %3789 = vmatpush.msra.mxu0 %v3287
  %3790 = vmatpush.msra.mxu0 %v3283
  %3791 = vmatpush.msra.mxu0 %v3279
  %3792 = vmatpush.msra.mxu0 %v3275
  %3793 = vmatpush.msra.mxu0 %v3271
  %3794 = vmatpush.msra.mxu0 %v3267
  %3795 = vmatpush.msra.mxu0 %v3263
  %3796 = vmatpush.msra.mxu0 %v3259
  %3797 = vmatpush.msra.mxu0 %v3255
  %3798 = vmatpush.msra.mxu0 %v3251
  %3799 = vmatpush.msra.mxu0 %v3247
  %3800 = vmatpush.msra.mxu0 %v3243
  %3801 = vmatpush.msra.mxu0 %v3239
  %3802 = vmatpush.msra.mxu0 %v3235
  %3803 = vmatpush.msra.mxu0 %v3231
  %3804 = vmatmul.f32.gmra.mxu0 %v3514
  %v3805 = vpop.f32.mrf.mxu0
  %v3806 = vadd.f32 %v3786, %v3805
  %3807 = vdwg.mxu0
  %3808 = vmatpush.msra.mxu0 %v3355
  %3809 = vmatpush.msra.mxu0 %v3351
  %3810 = vmatpush.msra.mxu0 %v3347
  %3811 = vmatpush.msra.mxu0 %v3343
  %3812 = vmatpush.msra.mxu0 %v3339
  %3813 = vmatpush.msra.mxu0 %v3335
  %3814 = vmatpush.msra.mxu0 %v3331
  %3815 = vmatpush.msra.mxu0 %v3327
  %3816 = vmatpush.msra.mxu0 %v3323
  %3817 = vmatpush.msra.mxu0 %v3319
  %3818 = vmatpush.msra.mxu0 %v3315
  %3819 = vmatpush.msra.mxu0 %v3311
  %3820 = vmatpush.msra.mxu0 %v3307
  %3821 = vmatpush.msra.mxu0 %v3303
  %3822 = vmatpush.msra.mxu0 %v3299
  %3823 = vmatpush.msra.mxu0 %v3295
  %3824 = vmatmul.f32.gmra.mxu0 %v3515
  %v3825 = vpop.f32.mrf.mxu0
  %v3826 = vadd.f32 %v3806, %v3825
  %3827 = vdwg.mxu0
  %3828 = vmatpush.msra.mxu0 %v3419
  %3829 = vmatpush.msra.mxu0 %v3415
  %3830 = vmatpush.msra.mxu0 %v3411
  %3831 = vmatpush.msra.mxu0 %v3407
  %3832 = vmatpush.msra.mxu0 %v3403
  %3833 = vmatpush.msra.mxu0 %v3399
  %3834 = vmatpush.msra.mxu0 %v3395
  %3835 = vmatpush.msra.mxu0 %v3391
  %3836 = vmatpush.msra.mxu0 %v3387
  %3837 = vmatpush.msra.mxu0 %v3383
  %3838 = vmatpush.msra.mxu0 %v3379
  %3839 = vmatpush.msra.mxu0 %v3375
  %3840 = vmatpush.msra.mxu0 %v3371
  %3841 = vmatpush.msra.mxu0 %v3367
  %3842 = vmatpush.msra.mxu0 %v3363
  %3843 = vmatpush.msra.mxu0 %v3359
  %3844 = vmatmul.f32.gmra.mxu0 %v3516
  %v3845 = vpop.f32.mrf.mxu0
  %v3846 = vadd.f32 %v3826, %v3845
  %3847 = vdwg.mxu0
  %s3848 = scalar_lea.vmem %s5, 2
  %v3849 = vld [vmem:[%s3848] ss:$4 sm:$0xf]
  %v3851 = vperm.slane %v3849, 0
  %v3852 = vperm.slane %v3849, 1
  %v3853 = vperm.slane %v3849, 2
  %v3854 = vperm.slane %v3849, 3
  %v3859 = vmul.f32 %v3606, %v3851
  %v3860 = vmul.f32 %v3686, %v3852
  %v3861 = vmul.f32 %v3766, %v3853
  %v3862 = vmul.f32 %v3846, %v3854
  %v3863 = vadd.f32 %v3859, %v3860
  %v3864 = vadd.f32 %v3863, %v3861
  %v3865 = vadd.f32 %v3864, %v3862
  %3866 = vadd.xlane.f32.xlu0 %v3865
  %v3867 = vpop.xlane.xlu0 %3866
  %v3868 = vld [vmem:[%s5 + $0x3] sm:$0x1]
  %v3869 = vperm.slane %v3868, 0
  %v3870 = vadd.f32 %v3867, %v3869
  %v3871 = vxor.u32 %v3870, 2147483648
  %v3872 = vmul.f32 %v3871, 1.442695
  %v3873 = vpow.pop %v3872
  %v3874 = vadd.f32 %v3873, 1.0
  %v3875 = vrcp.pop %v3874
  %v3876 = vmul.f32 %v3874, %v3875
  %v3877 = vsub.f32 1.0, %v3876
  %v3878 = vmul.f32 %v3875, %v3877
  %v3879 = vadd.f32 %v3875, %v3878
  %vm3880 = vweird.f32 %v3874
  %vm3881 = vweird.f32 %v3875
  %vm3882 = vmor %vm3880, %vm3881
  %v3883 = vsel %vm3882, %v3875, %v3879
  %v3884 = vand.u32 2147483647, %v3874
  %vm3885 = vcmp.eq.f32.partialorder %v3884, 8.507059e+37
  %v3886 = vand.u32 %v3874, 2147483648
  %v3887 = vor.u32 1.1754944e-38, %v3886
  %v3888 = vsel %vm3885, %v3887, %v3883
  %v3889 = vmul.f32 1.0, %v3888
  %vm3890 = vcmask 7168
  %3891 = vst.msk [vmem:[%s6] sm:$0xff] %vm3890, %v3889
  // Predicated region
  $region41: #{dti_forward.1} parent=0 // pred_check
    _
  $region42: #{dti_forward.1} parent=0 // pred_check_branch
    %3893 = sbr.rel (0) target = $region44
  $region43: #{dti_forward.1} parent=0 // pred_region
    _
  $region44: #{dti_forward.1} parent=0 // pred_fallthru
    _
  // Predicated region
  $region45: #{dti_forward.1} parent=0 // pred_check
    _
  $region46: #{dti_forward.1} parent=0 // pred_check_branch
    %3895 = sbr.rel (0) target = $region48
  $region47: #{dti_forward.1} parent=0 // pred_region
    _
  $region48: #{dti_forward.1} parent=0 // pred_fallthru
    _
  %3896 = vsyncmov [#allocation4]
  %s3897 = vpop.sfrf %3896
  %p3898 = scmp.eq.s32.totalorder %s3897, 0
  %p3899 = pneg %p3898
  %3901 = shalt.err (%p3899)

</llo_original>
